<compile_context>
chip_gen: v6e
topology: v6e:2x2x1
jax: 0.10.0
libtpu: 0.0.40
codegen_flags: <defaults>
</compile_context>

<pallas_src>
import numpy as np
import jax
import jax.numpy as jnp
from jax.experimental import pallas as pl
from jax.experimental.pallas import tpu as pltpu

# ----------------------------- configuration --------------------------------
B = 2
NUM_HEADS = 8                     # 2 + 3 + 3 head splits
CH = 4                            # channels per head
C = NUM_HEADS * CH                # 32 total channels
H = W = 8
N = H * W                         # 64 tokens
WINDOWS = ((3, 2), (5, 3), (7, 3))    # (window size, head split) as in {3:2, 5:3, 7:3}
MAX_K = 7
PAD = MAX_K // 2
KTAPS = MAX_K * MAX_K             # 49 unified stencil taps


# ----------------------------- Pallas kernel --------------------------------
def _crpe_kernel(q_ref, v_ref, s_ref, w_ref, b_ref, o_ref):
    """Fused ConvRelPosEnc for one batch element.

    q_ref, v_ref, o_ref : (N, C)       token-major, channel = head*CH + ch
    s_ref               : (KTAPS*N, N) 0/1 shift-with-zero-pad matrices (stacked taps)
    w_ref               : (KTAPS*N, C) per-tap/per-channel depthwise weights (row-replicated)
    b_ref               : (1, C)       depthwise conv bias
    """
    q = q_ref[...]                                        # (N, C)
    v = v_ref[...]                                        # (N, C)

    # All 49 shifted copies of v in one MXU matmul, then per-channel tap weights.
    wv = jnp.dot(s_ref[...], v,
                 preferred_element_type=jnp.float32) * w_ref[...]   # (KTAPS*N, C)

    # Reduce over the 49 taps with lane-aligned static slices (pure VPU adds).
    conv = b_ref[...] + wv[0:N, :]
    for k in range(1, KTAPS):
        conv = conv + wv[k * N:(k + 1) * N, :]            # (N, C)

    o_ref[...] = q * conv                                 # EV_hat = q * conv(v)


# ----------------------------- pallas_call wrapper ---------------------------
def conv_rel_pos_enc_pallas(q, v, kp):
    """q, v: (B, NUM_HEADS, N, CH) -> output (B, N, NUM_HEADS*CH)."""
    # head-major channel layout, matching 'B h (H W) Ch -> B (h Ch) H W'
    q2 = q.transpose(0, 2, 1, 3).reshape(B, N, C)
    v2 = v.transpose(0, 2, 1, 3).reshape(B, N, C)
    return pl.pallas_call(
        _crpe_kernel,
        out_shape=jax.ShapeDtypeStruct((B, N, C), jnp.float32),
        grid=(B,),
        in_specs=[
            pl.BlockSpec((None, N, C), lambda b: (b, 0, 0)),
            pl.BlockSpec((None, N, C), lambda b: (b, 0, 0)),
            pl.BlockSpec((KTAPS * N, N), lambda b: (0, 0)),
            pl.BlockSpec((KTAPS * N, C), lambda b: (0, 0)),
            pl.BlockSpec((1, C), lambda b: (0, 0)),
        ],
        out_specs=pl.BlockSpec((None, N, C), lambda b: (b, 0, 0)),
        compiler_params=pltpu.CompilerParams(dimension_semantics=("parallel",)),
    )(q2, v2, kp['S'], kp['Wrep'], kp['bias'])


# ----------------------------- parameter setup -------------------------------
def init_conv_params(key):
    """Per-group depthwise Conv2d weights/biases (PyTorch-like uniform init)."""
    params = []
    ks = jax.random.split(key, 2 * len(WINDOWS))
    for i, (k, hs) in enumerate(WINDOWS):
        cg = hs * CH
        bound = 1.0 / np.sqrt(k * k)                     # in_ch/groups == 1
        wgt = jax.random.uniform(ks[2 * i], (cg, 1, k, k), jnp.float32, -bound, bound)
        bias = jax.random.uniform(ks[2 * i + 1], (cg,), jnp.float32, -bound, bound)
        params.append((k, wgt, bias))
    return params


def build_kernel_params(conv_params):
    """Precompute the unified 49-tap stencil (shift matrices + per-channel weights)."""
    taps = [(dh, dw) for dh in range(-PAD, PAD + 1) for dw in range(-PAD, PAD + 1)]

    # S[t*N + n_out, n_in] = 1 if input token n_in is the (dh,dw)-shifted
    # neighbour of output token n_out (zero padding -> row stays all zero).
    S = np.zeros((KTAPS * N, N), np.float32)
    for t, (dh, dw) in enumerate(taps):
        for oh in range(H):
            for ow in range(W):
                ih, iw = oh + dh, ow + dw
                if 0 <= ih < H and 0 <= iw < W:
                    S[t * N + oh * W + ow, ih * W + iw] = 1.0

    # Per-tap / per-channel weights (zero outside each group's own window),
    # replicated across the N rows of each tap block so the kernel multiply
    # stays a plain 2-D elementwise op.
    Wtap = np.zeros((KTAPS, C), np.float32)
    bias = np.zeros((1, C), np.float32)
    c_off = 0
    for (k, wgt, b) in conv_params:
        wgt = np.asarray(wgt)
        b = np.asarray(b)
        cg = wgt.shape[0]
        pad = k // 2
        for t, (dh, dw) in enumerate(taps):
            if abs(dh) <= pad and abs(dw) <= pad:
                Wtap[t, c_off:c_off + cg] = wgt[:, 0, dh + pad, dw + pad]
        bias[0, c_off:c_off + cg] = b
        c_off += cg
    Wrep = np.repeat(Wtap, N, axis=0)                    # (KTAPS*N, C)

    return {'S': jnp.asarray(S), 'Wrep': jnp.asarray(Wrep), 'bias': jnp.asarray(bias)}


# ----------------------------- pure-JAX reference ----------------------------
def conv_rel_pos_enc_reference(q, v, conv_params):
    hp = jax.lax.Precision.HIGHEST
    # 'B h (H W) Ch -> B (h Ch) H W'
    v_img = v.transpose(0, 1, 3, 2).reshape(B, C, H, W)
    pieces, c_off = [], 0
    for (k, wgt, b) in conv_params:
        cg = wgt.shape[0]
        xg = v_img[:, c_off:c_off + cg]
        yg = jax.lax.conv_general_dilated(
            xg, wgt, window_strides=(1, 1),
            padding=[(k // 2, k // 2), (k // 2, k // 2)],
            feature_group_count=cg,
            dimension_numbers=('NCHW', 'OIHW', 'NCHW'),
            precision=hp) + b.reshape(1, cg, 1, 1)
        pieces.append(yg)
        c_off += cg
    conv_v_img = jnp.concatenate(pieces, axis=1)                       # (B, C, H, W)
    # 'B (h Ch) H W -> B h (H W) Ch'
    conv_v = conv_v_img.reshape(B, NUM_HEADS, CH, N).transpose(0, 1, 3, 2)
    ev = q * conv_v                                                    # (B, h, N, Ch)
    return ev.transpose(0, 2, 1, 3).reshape(B, N, C)                   # transpose(1,2).flatten(2)


# ----------------------------- main ------------------------------------------
if __name__ == "__main__":
    key = jax.random.PRNGKey(0)
    kq, kv, kp_key = jax.random.split(key, 3)
    q = jax.random.normal(kq, (B, NUM_HEADS, N, CH), jnp.float32)
    v = jax.random.normal(kv, (B, NUM_HEADS, N, CH), jnp.float32)

    conv_params = init_conv_params(kp_key)
    kparams = build_kernel_params(conv_params)

    out = jax.block_until_ready(conv_rel_pos_enc_pallas(q, v, kparams))
    ref = jax.block_until_ready(conv_rel_pos_enc_reference(q, v, conv_params))

    np.testing.assert_allclose(np.asarray(out), np.asarray(ref), rtol=1e-3, atol=1e-3)
    print("KERNEL_OK")
</pallas_src>

<mosaic_0001>
module attributes {stable_mosaic.version = 11 : i64} {
  func.func @_crpe_kernel(%arg0: i32, %arg1: memref<1x64x32xf32, #tpu.memory_space<vmem>>, %arg2: memref<1x64x32xf32, #tpu.memory_space<vmem>>, %arg3: memref<3136x64xf32, #tpu.memory_space<vmem>>, %arg4: memref<3136x32xf32, #tpu.memory_space<vmem>>, %arg5: memref<1x32xf32, #tpu.memory_space<vmem>>, %arg6: memref<1x64x32xf32, #tpu.memory_space<vmem>>) attributes {dimension_semantics = [#tpu.dimension_semantics<parallel>], iteration_bounds = array<i64: 2>, scalar_prefetch = 0 : i64, scratch_operands = 0 : i64, tpu.core_type = #tpu.core_type<tc>, window_params = [{transform_indices = @transform_0, window_bounds = array<i64: 1, 64, 32>}, {transform_indices = @transform_1, window_bounds = array<i64: 1, 64, 32>}, {pipeline_mode = #tpu.pipeline_mode<synchronous>, transform_indices = @transform_2, window_bounds = array<i64: 3136, 64>}, {pipeline_mode = #tpu.pipeline_mode<synchronous>, transform_indices = @transform_3, window_bounds = array<i64: 3136, 32>}, {pipeline_mode = #tpu.pipeline_mode<synchronous>, transform_indices = @transform_4, window_bounds = array<i64: 1, 32>}, {transform_indices = @transform_5, window_bounds = array<i64: 1, 64, 32>}]} {
    %c0 = arith.constant 0 : index
    %c0_0 = arith.constant 0 : index
    %c0_1 = arith.constant 0 : index
    %0 = vector.load %arg1[%c0, %c0_0, %c0_1] : memref<1x64x32xf32, #tpu.memory_space<vmem>>, vector<1x64x32xf32>
    %1 = vector.shape_cast %0 : vector<1x64x32xf32> to vector<64x32xf32>
    %c0_2 = arith.constant 0 : index
    %c0_3 = arith.constant 0 : index
    %c0_4 = arith.constant 0 : index
    %2 = vector.load %arg2[%c0_2, %c0_3, %c0_4] : memref<1x64x32xf32, #tpu.memory_space<vmem>>, vector<1x64x32xf32>
    %3 = vector.shape_cast %2 : vector<1x64x32xf32> to vector<64x32xf32>
    %c0_5 = arith.constant 0 : index
    %c0_6 = arith.constant 0 : index
    %4 = vector.load %arg3[%c0_5, %c0_6] : memref<3136x64xf32, #tpu.memory_space<vmem>>, vector<3136x64xf32>
    %cst = arith.constant dense<0.000000e+00> : vector<3136x32xf32>
    %5 = tpu.matmul %4, %3, %cst {dimension_numbers = #tpu.dot_dimension_numbers<[1], [0], [0], [1], [0, 0, 1, 1], [], []>} : vector<3136x64xf32>, vector<64x32xf32>, vector<3136x32xf32> -> vector<3136x32xf32>
    %c0_7 = arith.constant 0 : index
    %c0_8 = arith.constant 0 : index
    %6 = vector.load %arg4[%c0_7, %c0_8] : memref<3136x32xf32, #tpu.memory_space<vmem>>, vector<3136x32xf32>
    %7 = arith.mulf %5, %6 : vector<3136x32xf32>
    %c0_9 = arith.constant 0 : index
    %c0_10 = arith.constant 0 : index
    %8 = vector.load %arg5[%c0_9, %c0_10] : memref<1x32xf32, #tpu.memory_space<vmem>>, vector<1x32xf32>
    %9 = vector.extract_strided_slice %7 {offsets = [0, 0], sizes = [64, 32], strides = [1, 1]} : vector<3136x32xf32> to vector<64x32xf32>
    %10 = vector.broadcast %8 : vector<1x32xf32> to vector<64x32xf32>
    %11 = arith.addf %10, %9 : vector<64x32xf32>
    %12 = vector.extract_strided_slice %7 {offsets = [64, 0], sizes = [64, 32], strides = [1, 1]} : vector<3136x32xf32> to vector<64x32xf32>
    %13 = arith.addf %11, %12 : vector<64x32xf32>
    %14 = vector.extract_strided_slice %7 {offsets = [128, 0], sizes = [64, 32], strides = [1, 1]} : vector<3136x32xf32> to vector<64x32xf32>
    %15 = arith.addf %13, %14 : vector<64x32xf32>
    %16 = vector.extract_strided_slice %7 {offsets = [192, 0], sizes = [64, 32], strides = [1, 1]} : vector<3136x32xf32> to vector<64x32xf32>
    %17 = arith.addf %15, %16 : vector<64x32xf32>
    %18 = vector.extract_strided_slice %7 {offsets = [256, 0], sizes = [64, 32], strides = [1, 1]} : vector<3136x32xf32> to vector<64x32xf32>
    %19 = arith.addf %17, %18 : vector<64x32xf32>
    %20 = vector.extract_strided_slice %7 {offsets = [320, 0], sizes = [64, 32], strides = [1, 1]} : vector<3136x32xf32> to vector<64x32xf32>
    %21 = arith.addf %19, %20 : vector<64x32xf32>
    %22 = vector.extract_strided_slice %7 {offsets = [384, 0], sizes = [64, 32], strides = [1, 1]} : vector<3136x32xf32> to vector<64x32xf32>
    %23 = arith.addf %21, %22 : vector<64x32xf32>
    %24 = vector.extract_strided_slice %7 {offsets = [448, 0], sizes = [64, 32], strides = [1, 1]} : vector<3136x32xf32> to vector<64x32xf32>
    %25 = arith.addf %23, %24 : vector<64x32xf32>
    %26 = vector.extract_strided_slice %7 {offsets = [512, 0], sizes = [64, 32], strides = [1, 1]} : vector<3136x32xf32> to vector<64x32xf32>
    %27 = arith.addf %25, %26 : vector<64x32xf32>
    %28 = vector.extract_strided_slice %7 {offsets = [576, 0], sizes = [64, 32], strides = [1, 1]} : vector<3136x32xf32> to vector<64x32xf32>
    %29 = arith.addf %27, %28 : vector<64x32xf32>
    %30 = vector.extract_strided_slice %7 {offsets = [640, 0], sizes = [64, 32], strides = [1, 1]} : vector<3136x32xf32> to vector<64x32xf32>
    %31 = arith.addf %29, %30 : vector<64x32xf32>
    %32 = vector.extract_strided_slice %7 {offsets = [704, 0], sizes = [64, 32], strides = [1, 1]} : vector<3136x32xf32> to vector<64x32xf32>
    %33 = arith.addf %31, %32 : vector<64x32xf32>
    %34 = vector.extract_strided_slice %7 {offsets = [768, 0], sizes = [64, 32], strides = [1, 1]} : vector<3136x32xf32> to vector<64x32xf32>
    %35 = arith.addf %33, %34 : vector<64x32xf32>
    %36 = vector.extract_strided_slice %7 {offsets = [832, 0], sizes = [64, 32], strides = [1, 1]} : vector<3136x32xf32> to vector<64x32xf32>
    %37 = arith.addf %35, %36 : vector<64x32xf32>
    %38 = vector.extract_strided_slice %7 {offsets = [896, 0], sizes = [64, 32], strides = [1, 1]} : vector<3136x32xf32> to vector<64x32xf32>
    %39 = arith.addf %37, %38 : vector<64x32xf32>
    %40 = vector.extract_strided_slice %7 {offsets = [960, 0], sizes = [64, 32], strides = [1, 1]} : vector<3136x32xf32> to vector<64x32xf32>
    %41 = arith.addf %39, %40 : vector<64x32xf32>
    %42 = vector.extract_strided_slice %7 {offsets = [1024, 0], sizes = [64, 32], strides = [1, 1]} : vector<3136x32xf32> to vector<64x32xf32>
    %43 = arith.addf %41, %42 : vector<64x32xf32>
    %44 = vector.extract_strided_slice %7 {offsets = [1088, 0], sizes = [64, 32], strides = [1, 1]} : vector<3136x32xf32> to vector<64x32xf32>
    %45 = arith.addf %43, %44 : vector<64x32xf32>
    %46 = vector.extract_strided_slice %7 {offsets = [1152, 0], sizes = [64, 32], strides = [1, 1]} : vector<3136x32xf32> to vector<64x32xf32>
    %47 = arith.addf %45, %46 : vector<64x32xf32>
    %48 = vector.extract_strided_slice %7 {offsets = [1216, 0], sizes = [64, 32], strides = [1, 1]} : vector<3136x32xf32> to vector<64x32xf32>
    %49 = arith.addf %47, %48 : vector<64x32xf32>
    %50 = vector.extract_strided_slice %7 {offsets = [1280, 0], sizes = [64, 32], strides = [1, 1]} : vector<3136x32xf32> to vector<64x32xf32>
    %51 = arith.addf %49, %50 : vector<64x32xf32>
    %52 = vector.extract_strided_slice %7 {offsets = [1344, 0], sizes = [64, 32], strides = [1, 1]} : vector<3136x32xf32> to vector<64x32xf32>
    %53 = arith.addf %51, %52 : vector<64x32xf32>
    %54 = vector.extract_strided_slice %7 {offsets = [1408, 0], sizes = [64, 32], strides = [1, 1]} : vector<3136x32xf32> to vector<64x32xf32>
    %55 = arith.addf %53, %54 : vector<64x32xf32>
    %56 = vector.extract_strided_slice %7 {offsets = [1472, 0], sizes = [64, 32], strides = [1, 1]} : vector<3136x32xf32> to vector<64x32xf32>
    %57 = arith.addf %55, %56 : vector<64x32xf32>
    %58 = vector.extract_strided_slice %7 {offsets = [1536, 0], sizes = [64, 32], strides = [1, 1]} : vector<3136x32xf32> to vector<64x32xf32>
    %59 = arith.addf %57, %58 : vector<64x32xf32>
    %60 = vector.extract_strided_slice %7 {offsets = [1600, 0], sizes = [64, 32], strides = [1, 1]} : vector<3136x32xf32> to vector<64x32xf32>
    %61 = arith.addf %59, %60 : vector<64x32xf32>
    %62 = vector.extract_strided_slice %7 {offsets = [1664, 0], sizes = [64, 32], strides = [1, 1]} : vector<3136x32xf32> to vector<64x32xf32>
    %63 = arith.addf %61, %62 : vector<64x32xf32>
    %64 = vector.extract_strided_slice %7 {offsets = [1728, 0], sizes = [64, 32], strides = [1, 1]} : vector<3136x32xf32> to vector<64x32xf32>
    %65 = arith.addf %63, %64 : vector<64x32xf32>
    %66 = vector.extract_strided_slice %7 {offsets = [1792, 0], sizes = [64, 32], strides = [1, 1]} : vector<3136x32xf32> to vector<64x32xf32>
    %67 = arith.addf %65, %66 : vector<64x32xf32>
    %68 = vector.extract_strided_slice %7 {offsets = [1856, 0], sizes = [64, 32], strides = [1, 1]} : vector<3136x32xf32> to vector<64x32xf32>
    %69 = arith.addf %67, %68 : vector<64x32xf32>
    %70 = vector.extract_strided_slice %7 {offsets = [1920, 0], sizes = [64, 32], strides = [1, 1]} : vector<3136x32xf32> to vector<64x32xf32>
    %71 = arith.addf %69, %70 : vector<64x32xf32>
    %72 = vector.extract_strided_slice %7 {offsets = [1984, 0], sizes = [64, 32], strides = [1, 1]} : vector<3136x32xf32> to vector<64x32xf32>
    %73 = arith.addf %71, %72 : vector<64x32xf32>
    %74 = vector.extract_strided_slice %7 {offsets = [2048, 0], sizes = [64, 32], strides = [1, 1]} : vector<3136x32xf32> to vector<64x32xf32>
    %75 = arith.addf %73, %74 : vector<64x32xf32>
    %76 = vector.extract_strided_slice %7 {offsets = [2112, 0], sizes = [64, 32], strides = [1, 1]} : vector<3136x32xf32> to vector<64x32xf32>
    %77 = arith.addf %75, %76 : vector<64x32xf32>
    %78 = vector.extract_strided_slice %7 {offsets = [2176, 0], sizes = [64, 32], strides = [1, 1]} : vector<3136x32xf32> to vector<64x32xf32>
    %79 = arith.addf %77, %78 : vector<64x32xf32>
    %80 = vector.extract_strided_slice %7 {offsets = [2240, 0], sizes = [64, 32], strides = [1, 1]} : vector<3136x32xf32> to vector<64x32xf32>
    %81 = arith.addf %79, %80 : vector<64x32xf32>
    %82 = vector.extract_strided_slice %7 {offsets = [2304, 0], sizes = [64, 32], strides = [1, 1]} : vector<3136x32xf32> to vector<64x32xf32>
    %83 = arith.addf %81, %82 : vector<64x32xf32>
    %84 = vector.extract_strided_slice %7 {offsets = [2368, 0], sizes = [64, 32], strides = [1, 1]} : vector<3136x32xf32> to vector<64x32xf32>
    %85 = arith.addf %83, %84 : vector<64x32xf32>
    %86 = vector.extract_strided_slice %7 {offsets = [2432, 0], sizes = [64, 32], strides = [1, 1]} : vector<3136x32xf32> to vector<64x32xf32>
    %87 = arith.addf %85, %86 : vector<64x32xf32>
    %88 = vector.extract_strided_slice %7 {offsets = [2496, 0], sizes = [64, 32], strides = [1, 1]} : vector<3136x32xf32> to vector<64x32xf32>
    %89 = arith.addf %87, %88 : vector<64x32xf32>
    %90 = vector.extract_strided_slice %7 {offsets = [2560, 0], sizes = [64, 32], strides = [1, 1]} : vector<3136x32xf32> to vector<64x32xf32>
    %91 = arith.addf %89, %90 : vector<64x32xf32>
    %92 = vector.extract_strided_slice %7 {offsets = [2624, 0], sizes = [64, 32], strides = [1, 1]} : vector<3136x32xf32> to vector<64x32xf32>
    %93 = arith.addf %91, %92 : vector<64x32xf32>
    %94 = vector.extract_strided_slice %7 {offsets = [2688, 0], sizes = [64, 32], strides = [1, 1]} : vector<3136x32xf32> to vector<64x32xf32>
    %95 = arith.addf %93, %94 : vector<64x32xf32>
    %96 = vector.extract_strided_slice %7 {offsets = [2752, 0], sizes = [64, 32], strides = [1, 1]} : vector<3136x32xf32> to vector<64x32xf32>
    %97 = arith.addf %95, %96 : vector<64x32xf32>
    %98 = vector.extract_strided_slice %7 {offsets = [2816, 0], sizes = [64, 32], strides = [1, 1]} : vector<3136x32xf32> to vector<64x32xf32>
    %99 = arith.addf %97, %98 : vector<64x32xf32>
    %100 = vector.extract_strided_slice %7 {offsets = [2880, 0], sizes = [64, 32], strides = [1, 1]} : vector<3136x32xf32> to vector<64x32xf32>
    %101 = arith.addf %99, %100 : vector<64x32xf32>
    %102 = vector.extract_strided_slice %7 {offsets = [2944, 0], sizes = [64, 32], strides = [1, 1]} : vector<3136x32xf32> to vector<64x32xf32>
    %103 = arith.addf %101, %102 : vector<64x32xf32>
    %104 = vector.extract_strided_slice %7 {offsets = [3008, 0], sizes = [64, 32], strides = [1, 1]} : vector<3136x32xf32> to vector<64x32xf32>
    %105 = arith.addf %103, %104 : vector<64x32xf32>
    %106 = vector.extract_strided_slice %7 {offsets = [3072, 0], sizes = [64, 32], strides = [1, 1]} : vector<3136x32xf32> to vector<64x32xf32>
    %107 = arith.addf %105, %106 : vector<64x32xf32>
    %108 = arith.mulf %1, %107 : vector<64x32xf32>
    %c0_11 = arith.constant 0 : index
    %c0_12 = arith.constant 0 : index
    %c0_13 = arith.constant 0 : index
    %109 = vector.load %arg6[%c0_11, %c0_12, %c0_13] : memref<1x64x32xf32, #tpu.memory_space<vmem>>, vector<1x64x32xf32>
    %110 = vector.shape_cast %109 : vector<1x64x32xf32> to vector<64x32xf32>
    %111 = vector.shape_cast %108 : vector<64x32xf32> to vector<1x64x32xf32>
    tpu.vector_store %arg6[%c0_11, %c0_12, %c0_13], %111 {strides = array<i32>} : memref<1x64x32xf32, #tpu.memory_space<vmem>>, vector<1x64x32xf32>,
    return
  }
  func.func @transform_0(%arg0: i32) -> (i32, i32, i32) {
    %c0_i32 = arith.constant 0 : i32
    %c0_i32_0 = arith.constant 0 : i32
    %c0_i32_1 = arith.constant 0 : i32
    return %arg0, %c0_i32, %c0_i32_0 : i32, i32, i32
  }
  func.func @transform_1(%arg0: i32) -> (i32, i32, i32) {
    %c0_i32 = arith.constant 0 : i32
    %c0_i32_0 = arith.constant 0 : i32
    %c0_i32_1 = arith.constant 0 : i32
    return %arg0, %c0_i32, %c0_i32_0 : i32, i32, i32
  }
  func.func @transform_2(%arg0: i32) -> (i32, i32) {
    %c0_i32 = arith.constant 0 : i32
    %c0_i32_0 = arith.constant 0 : i32
    %c0_i32_1 = arith.constant 0 : i32
    return %c0_i32, %c0_i32_0 : i32, i32
  }
  func.func @transform_3(%arg0: i32) -> (i32, i32) {
    %c0_i32 = arith.constant 0 : i32
    %c0_i32_0 = arith.constant 0 : i32
    %c0_i32_1 = arith.constant 0 : i32
    return %c0_i32, %c0_i32_0 : i32, i32
  }
  func.func @transform_4(%arg0: i32) -> (i32, i32) {
    %c0_i32 = arith.constant 0 : i32
    %c0_i32_0 = arith.constant 0 : i32
    %c0_i32_1 = arith.constant 0 : i32
    return %c0_i32, %c0_i32_0 : i32, i32
  }
  func.func @transform_5(%arg0: i32) -> (i32, i32, i32) {
    %c0_i32 = arith.constant 0 : i32
    %c0_i32_0 = arith.constant 0 : i32
    %c0_i32_1 = arith.constant 0 : i32
    return %arg0, %c0_i32, %c0_i32_0 : i32, i32, i32
  }
}

</mosaic_0001>

<llo_original>
// kernel: tpu_custom_call.1
$region0: #{tpu_custom_call.1}
  #allocation0 [shape = 'u32[]', space=smem, size = 0x4, offset = 0x4, fixed_abs, tag = 'smem constant byte address 0x4 - core index']
  #allocation1 [shape = 'u32[144,128]{1,0:T(1,128)}', space=vmem, size = 0x12000, scoped, tag = 'internal scratch']
  %s0 = inlined_call_operand.vmem [shape: f32[2,64,32], index: 0, kind: input, shape index: {}]
  %s1 = inlined_call_operand.vmem [shape: f32[2,64,32], index: 1, kind: input, shape index: {}]
  %s2 = inlined_call_operand.vmem [shape: f32[3136,64], index: 2, kind: input, shape index: {}]
  %s3 = inlined_call_operand.vmem [shape: f32[3136,32], index: 3, kind: input, shape index: {}]
  %s4 = inlined_call_operand.vmem [shape: f32[1,32], index: 4, kind: input, shape index: {}]
  %s5 = inlined_call_operand.vmem [shape: f32[2,64,32], index: 5, kind: output, shape index: {}]
  %s6 = sld [smem:[#allocation0]]
  $region53: #{tpu_custom_call.1} parent=0
    _
  %s8 = ssub.s32 1, %s6
  %s9 = scalar_select 0, %s8, %s6
  loop: start=0, step=1, limit=4
  $region2: #{tpu_custom_call.1} parent=0 // loop_pre_header
    _
  $region3: #{tpu_custom_call.1} parent=0 // loop_header
    %s11 = sphi 0, %s15
    %p12 = scmp.ge.s32.totalorder %s11, 4
    %s21 = sphi 0, %s23
    %s24 = sphi 0, %s21
    %s25 = sphi 0, %s24
    %s41 = sphi 0, %s25
    %s47 = sphi 0, %s49
    %s50 = sphi 0, %s47
    %s51 = sphi 0, %s50
    %s67 = sphi 0, %s51
    %s71 = sphi 0, %s71
    %s73 = sphi 0, %s71
    %s74 = sphi 0, %s73
    %s88 = sphi 0, %s74
    %s92 = sphi 0, %s92
    %s94 = sphi 0, %s92
    %s95 = sphi 0, %s94
    %s109 = sphi 0, %s95
    %s113 = sphi 0, %s113
    %s115 = sphi 0, %s113
    %s116 = sphi 0, %s115
    %s130 = sphi 0, %s116
    %s136 = sphi 0, %s138
    %s139 = sphi 0, %s136
    %s140 = sphi 0, %s139
    %s156 = sphi 0, %s140
  $region4: #{tpu_custom_call.1} parent=0 // loop_header_branch
    %14 = sbr.rel (%p12) target = $region8
  $region5: #{tpu_custom_call.1} parent=0 // loop_body
    %s16 = ssub.s32 %s11, 1
    %s17 = ssub.s32 %s11, 2
    %s18 = sadd.s32 %s11, 1
    %s19 = ssub.s32 %s11, %s18
    %p20 = scmp.eq.s32.totalorder %s19, 0
    %s22 = sadd.s32 %s21, 1
    %s23 = scalar_select %p20, %s21, %s22
    %p26 = pneg %p20
    %p27 = scmp.eq.s32.totalorder %s11, 1
    %p28 = por %p26, %p27
    %p29 = scmp.ne.s32.totalorder %s21, %s24
    %p30 = scmp.eq.s32.totalorder %s11, 0
    %p31 = por %p29, %p30
    %p32 = scmp.ne.s32.totalorder %s21, %s24
    %p33 = scmp.eq.s32.totalorder %s16, 1
    %p34 = por %p32, %p33
    %p35 = scmp.ne.s32.totalorder %s24, %s25
    %p36 = scmp.eq.s32.totalorder %s16, 0
    %p37 = por %p35, %p36
    %p38 = scmp.ne.s32.totalorder %s24, %s25
    %p39 = scmp.eq.s32.totalorder %s17, 1
    %p40 = por %p38, %p39
    %p42 = scmp.ne.s32.totalorder %s25, %s41
    %p43 = scmp.eq.s32.totalorder %s17, 0
    %p44 = por %p42, %p43
    %s45 = ssub.s32 %s11, %s18
    %p46 = scmp.eq.s32.totalorder %s45, 0
    %s48 = sadd.s32 %s47, 1
    %s49 = scalar_select %p46, %s47, %s48
    %p52 = pneg %p46
    %p53 = scmp.eq.s32.totalorder %s11, 1
    %p54 = por %p52, %p53
    %p55 = scmp.ne.s32.totalorder %s47, %s50
    %p56 = scmp.eq.s32.totalorder %s11, 0
    %p57 = por %p55, %p56
    %p58 = scmp.ne.s32.totalorder %s47, %s50
    %p59 = scmp.eq.s32.totalorder %s16, 1
    %p60 = por %p58, %p59
    %p61 = scmp.ne.s32.totalorder %s50, %s51
    %p62 = scmp.eq.s32.totalorder %s16, 0
    %p63 = por %p61, %p62
    %p64 = scmp.ne.s32.totalorder %s50, %s51
    %p65 = scmp.eq.s32.totalorder %s17, 1
    %p66 = por %p64, %p65
    %p68 = scmp.ne.s32.totalorder %s51, %s67
    %p69 = scmp.eq.s32.totalorder %s17, 0
    %p70 = por %p68, %p69
    %s72 = sadd.s32 %s71, 1
    %p75 = scmp.eq.s32.totalorder %s11, 1
    %p76 = scmp.ne.s32.totalorder %s71, %s73
    %p77 = scmp.eq.s32.totalorder %s11, 0
    %p78 = por %p76, %p77
    %p79 = scmp.ne.s32.totalorder %s71, %s73
    %p80 = scmp.eq.s32.totalorder %s16, 1
    %p81 = por %p79, %p80
    %p82 = scmp.ne.s32.totalorder %s73, %s74
    %p83 = scmp.eq.s32.totalorder %s16, 0
    %p84 = por %p82, %p83
    %p85 = scmp.ne.s32.totalorder %s73, %s74
    %p86 = scmp.eq.s32.totalorder %s17, 1
    %p87 = por %p85, %p86
    %p89 = scmp.ne.s32.totalorder %s74, %s88
    %p90 = scmp.eq.s32.totalorder %s17, 0
    %p91 = por %p89, %p90
    %s93 = sadd.s32 %s92, 1
    %p96 = scmp.eq.s32.totalorder %s11, 1
    %p97 = scmp.ne.s32.totalorder %s92, %s94
    %p98 = scmp.eq.s32.totalorder %s11, 0
    %p99 = por %p97, %p98
    %p100 = scmp.ne.s32.totalorder %s92, %s94
    %p101 = scmp.eq.s32.totalorder %s16, 1
    %p102 = por %p100, %p101
    %p103 = scmp.ne.s32.totalorder %s94, %s95
    %p104 = scmp.eq.s32.totalorder %s16, 0
    %p105 = por %p103, %p104
    %p106 = scmp.ne.s32.totalorder %s94, %s95
    %p107 = scmp.eq.s32.totalorder %s17, 1
    %p108 = por %p106, %p107
    %p110 = scmp.ne.s32.totalorder %s95, %s109
    %p111 = scmp.eq.s32.totalorder %s17, 0
    %p112 = por %p110, %p111
    %s114 = sadd.s32 %s113, 1
    %p117 = scmp.eq.s32.totalorder %s11, 1
    %p118 = scmp.ne.s32.totalorder %s113, %s115
    %p119 = scmp.eq.s32.totalorder %s11, 0
    %p120 = por %p118, %p119
    %p121 = scmp.ne.s32.totalorder %s113, %s115
    %p122 = scmp.eq.s32.totalorder %s16, 1
    %p123 = por %p121, %p122
    %p124 = scmp.ne.s32.totalorder %s115, %s116
    %p125 = scmp.eq.s32.totalorder %s16, 0
    %p126 = por %p124, %p125
    %p127 = scmp.ne.s32.totalorder %s115, %s116
    %p128 = scmp.eq.s32.totalorder %s17, 1
    %p129 = por %p127, %p128
    %p131 = scmp.ne.s32.totalorder %s116, %s130
    %p132 = scmp.eq.s32.totalorder %s17, 0
    %p133 = por %p131, %p132
    %s134 = ssub.s32 %s11, %s18
    %p135 = scmp.eq.s32.totalorder %s134, 0
    %s137 = sadd.s32 %s136, 1
    %s138 = scalar_select %p135, %s136, %s137
    %p141 = pneg %p135
    %p142 = scmp.eq.s32.totalorder %s11, 1
    %p143 = por %p141, %p142
    %p144 = scmp.ne.s32.totalorder %s136, %s139
    %p145 = scmp.eq.s32.totalorder %s11, 0
    %p146 = por %p144, %p145
    %p147 = scmp.ne.s32.totalorder %s136, %s139
    %p148 = scmp.eq.s32.totalorder %s16, 1
    %p149 = por %p147, %p148
    %p150 = scmp.ne.s32.totalorder %s139, %s140
    %p151 = scmp.eq.s32.totalorder %s16, 0
    %p152 = por %p150, %p151
    %p153 = scmp.ne.s32.totalorder %s139, %s140
    %p154 = scmp.eq.s32.totalorder %s17, 1
    %p155 = por %p153, %p154
    %p157 = scmp.ne.s32.totalorder %s140, %s156
    %p158 = scmp.eq.s32.totalorder %s17, 0
    %p159 = por %p157, %p158
    %p160 = scmp.le.s32.totalorder 1, %s11
    %p161 = scmp.lt.s32.totalorder %s11, 3
    %p162 = pnand %p160, %p161
    %p163 = pneg %p162
    // Predicated region
    $region9: #{tpu_custom_call.1} parent=5 // pred_check
      _
    $region10: #{tpu_custom_call.1} parent=5 // pred_check_branch
      %165 = sbr.rel (%p162) target = $region12
    $region11: #{tpu_custom_call.1} parent=5 // pred_region
      %s166 = ssub.s32 %s11, 1
      // Predicated region
      $region13: #{tpu_custom_call.1} parent=11 // pred_check
        %p167 = pneg %p84
      $region14: #{tpu_custom_call.1} parent=11 // pred_check_branch
        %169 = sbr.rel (%p167) target = $region16
      $region15: #{tpu_custom_call.1} parent=11 // pred_region
        _
      $region16: #{tpu_custom_call.1} parent=11 // pred_fallthru
        _
      // Predicated region
      $region17: #{tpu_custom_call.1} parent=11 // pred_check
        %p170 = pneg %p105
      $region18: #{tpu_custom_call.1} parent=11 // pred_check_branch
        %172 = sbr.rel (%p170) target = $region20
      $region19: #{tpu_custom_call.1} parent=11 // pred_region
        _
      $region20: #{tpu_custom_call.1} parent=11 // pred_fallthru
        _
      // Predicated region
      $region21: #{tpu_custom_call.1} parent=11 // pred_check
        %p173 = pneg %p126
      $region22: #{tpu_custom_call.1} parent=11 // pred_check_branch
        %175 = sbr.rel (%p173) target = $region24
      $region23: #{tpu_custom_call.1} parent=11 // pred_region
        _
      $region24: #{tpu_custom_call.1} parent=11 // pred_fallthru
        _
    $region12: #{tpu_custom_call.1} parent=5 // pred_fallthru
      _
    %p176 = scmp.lt.s32.totalorder %s11, 2
    // Predicated region
    $region25: #{tpu_custom_call.1} parent=5 // pred_check
      %p177 = pneg %p176
    $region26: #{tpu_custom_call.1} parent=5 // pred_check_branch
      %179 = sbr.rel (%p177) target = $region28
    $region27: #{tpu_custom_call.1} parent=5 // pred_region
      // Predicated region
      $region29: #{tpu_custom_call.1} parent=27 // pred_check
        %p180 = pneg %p31
      $region30: #{tpu_custom_call.1} parent=27 // pred_check_branch
        %182 = sbr.rel (%p180) target = $region32
      $region31: #{tpu_custom_call.1} parent=27 // pred_region
        %p183 = scmp.lt.s32.totalorder %s11, 1
        %s184 = scalar_select %p183, %s11, 1
        %s185 = smul.addr %s184, 8
        %s186 = smul.addr %s185, 8
        %s187 = scalar_lea.vmem %s0, %s186
      $region32: #{tpu_custom_call.1} parent=27 // pred_fallthru
        _
      // Predicated region
      $region33: #{tpu_custom_call.1} parent=27 // pred_check
        %p188 = pneg %p57
      $region34: #{tpu_custom_call.1} parent=27 // pred_check_branch
        %190 = sbr.rel (%p188) target = $region36
      $region35: #{tpu_custom_call.1} parent=27 // pred_region
        %p191 = scmp.lt.s32.totalorder %s11, 1
        %s192 = scalar_select %p191, %s11, 1
        %s193 = smul.addr %s192, 8
        %s194 = smul.addr %s193, 8
        %s195 = scalar_lea.vmem %s1, %s194
      $region36: #{tpu_custom_call.1} parent=27 // pred_fallthru
        _
    $region28: #{tpu_custom_call.1} parent=5 // pred_fallthru
      _
    %p196 = scmp.le.s32.totalorder 1, %s11
    %p197 = scmp.lt.s32.totalorder %s11, 3
    %p198 = pnand %p196, %p197
    %p199 = pneg %p198
    // Predicated region
    $region37: #{tpu_custom_call.1} parent=5 // pred_check
      _
    $region38: #{tpu_custom_call.1} parent=5 // pred_check_branch
      %201 = sbr.rel (%p198) target = $region40
    $region39: #{tpu_custom_call.1} parent=5 // pred_region
      %s202 = ssub.s32 %s11, 1
      %p203 = scmp.lt.s32.totalorder %s16, 1
      %s204 = scalar_select %p203, %s16, 1
      %s205 = smul.addr %s204, 8
      %s206 = smul.addr %s205, 8
      %s207 = scalar_lea.vmem %s0, %s206
      %p208 = pneg %p37
      %p209 = pneg %p34
      %p210 = scmp.lt.s32.totalorder %s16, 1
      %s211 = scalar_select %p210, %s16, 1
      %s212 = smul.addr %s211, 8
      %s213 = smul.addr %s212, 8
      %s214 = scalar_lea.vmem %s1, %s213
      %p215 = pneg %p63
      %p216 = pneg %p60
      %p217 = pneg %p84
      %p218 = pneg %p81
      %p219 = pneg %p105
      %p220 = pneg %p102
      %p221 = pneg %p126
      %p222 = pneg %p123
      %p223 = pneg %p152
      %p224 = pneg %p149
      %p225 = scmp.lt.s32.totalorder %s16, 1
      %s226 = scalar_select %p225, %s16, 1
      %s227 = smul.addr %s226, 8
      %s228 = smul.addr %s227, 8
      %s229 = scalar_lea.vmem %s5, %s228
      %p230 = scmp.lt.s32.totalorder %s16, 1
      %s231 = scalar_select %p230, %s16, 1
      %s232 = smul.addr %s231, 8
      %s233 = smul.addr %s232, 8
      %s234 = scalar_lea.vmem %s0, %s233
      %p235 = scmp.lt.s32.totalorder %s16, 1
      %s236 = scalar_select %p235, %s16, 1
      %s237 = smul.addr %s236, 8
      %s238 = smul.addr %s237, 8
      %s239 = scalar_lea.vmem %s1, %s238
      %p240 = scmp.lt.s32.totalorder %s16, 1
      %s241 = scalar_select %p240, %s16, 1
      %s242 = smul.addr %s241, 8
      %s243 = smul.addr %s242, 8
      %s244 = scalar_lea.vmem %s5, %s243
      %v245 = vld [vmem:[%s234] sm:$0xff]
      %v246 = vld [vmem:[%s234 + $0x8] sm:$0xff]
      %v247 = vld [vmem:[%s234 + $0x10] sm:$0xff]
      %v248 = vld [vmem:[%s234 + $0x18] sm:$0xff]
      %v249 = vld [vmem:[%s234 + $0x20] sm:$0xff]
      %v250 = vld [vmem:[%s234 + $0x28] sm:$0xff]
      %v251 = vld [vmem:[%s234 + $0x30] sm:$0xff]
      %v252 = vld [vmem:[%s234 + $0x38] sm:$0xff]
      %v253 = vld [vmem:[%s239] sm:$0xff]
      %v254 = vld [vmem:[%s239 + $0x8] sm:$0xff]
      %v255 = vld [vmem:[%s239 + $0x10] sm:$0xff]
      %v256 = vld [vmem:[%s239 + $0x18] sm:$0xff]
      %v257 = vld [vmem:[%s239 + $0x20] sm:$0xff]
      %v258 = vld [vmem:[%s239 + $0x28] sm:$0xff]
      %v259 = vld [vmem:[%s239 + $0x30] sm:$0xff]
      %v260 = vld [vmem:[%s239 + $0x38] sm:$0xff]
      %v261 = vld [vmem:[%s2] sm:$0xff]
      %v262 = vld [vmem:[%s2 + $0x8] sm:$0xff]
      %v263 = vld [vmem:[%s2 + $0x10] sm:$0xff]
      %v264 = vld [vmem:[%s2 + $0x18] sm:$0xff]
      %v265 = vld [vmem:[%s2 + $0x20] sm:$0xff]
      %v266 = vld [vmem:[%s2 + $0x28] sm:$0xff]
      %v267 = vld [vmem:[%s2 + $0x30] sm:$0xff]
      %v268 = vld [vmem:[%s2 + $0x38] sm:$0xff]
      %v269 = vld [vmem:[%s2 + $0x40] sm:$0xff]
      %v270 = vld [vmem:[%s2 + $0x48] sm:$0xff]
      %v271 = vld [vmem:[%s2 + $0x50] sm:$0xff]
      %v272 = vld [vmem:[%s2 + $0x58] sm:$0xff]
      %v273 = vld [vmem:[%s2 + $0x60] sm:$0xff]
      %v274 = vld [vmem:[%s2 + $0x68] sm:$0xff]
      %v275 = vld [vmem:[%s2 + $0x70] sm:$0xff]
      %v276 = vld [vmem:[%s2 + $0x78] sm:$0xff]
      %v277 = vld [vmem:[%s2 + $0x80] sm:$0xff]
      %v278 = vld [vmem:[%s2 + $0x88] sm:$0xff]
      %v279 = vld [vmem:[%s2 + $0x90] sm:$0xff]
      %v280 = vld [vmem:[%s2 + $0x98] sm:$0xff]
      %v281 = vld [vmem:[%s2 + $0xa0] sm:$0xff]
      %v282 = vld [vmem:[%s2 + $0xa8] sm:$0xff]
      %v283 = vld [vmem:[%s2 + $0xb0] sm:$0xff]
      %v284 = vld [vmem:[%s2 + $0xb8] sm:$0xff]
      %v285 = vld [vmem:[%s2 + $0xc0] sm:$0xff]
      %v286 = vld [vmem:[%s2 + $0xc8] sm:$0xff]
      %v287 = vld [vmem:[%s2 + $0xd0] sm:$0xff]
      %v288 = vld [vmem:[%s2 + $0xd8] sm:$0xff]
      %v289 = vld [vmem:[%s2 + $0xe0] sm:$0xff]
      %v290 = vld [vmem:[%s2 + $0xe8] sm:$0xff]
      %v291 = vld [vmem:[%s2 + $0xf0] sm:$0xff]
      %v292 = vld [vmem:[%s2 + $0xf8] sm:$0xff]
      %v293 = vld [vmem:[%s2 + $0x100] sm:$0xff]
      %v294 = vld [vmem:[%s2 + $0x108] sm:$0xff]
      %v295 = vld [vmem:[%s2 + $0x110] sm:$0xff]
      %v296 = vld [vmem:[%s2 + $0x118] sm:$0xff]
      %v297 = vld [vmem:[%s2 + $0x120] sm:$0xff]
      %v298 = vld [vmem:[%s2 + $0x128] sm:$0xff]
      %v299 = vld [vmem:[%s2 + $0x130] sm:$0xff]
      %v300 = vld [vmem:[%s2 + $0x138] sm:$0xff]
      %v301 = vld [vmem:[%s2 + $0x140] sm:$0xff]
      %v302 = vld [vmem:[%s2 + $0x148] sm:$0xff]
      %v303 = vld [vmem:[%s2 + $0x150] sm:$0xff]
      %v304 = vld [vmem:[%s2 + $0x158] sm:$0xff]
      %v305 = vld [vmem:[%s2 + $0x160] sm:$0xff]
      %v306 = vld [vmem:[%s2 + $0x168] sm:$0xff]
      %v307 = vld [vmem:[%s2 + $0x170] sm:$0xff]
      %v308 = vld [vmem:[%s2 + $0x178] sm:$0xff]
      %v309 = vld [vmem:[%s2 + $0x180] sm:$0xff]
      %v310 = vld [vmem:[%s2 + $0x188] sm:$0xff]
      %v311 = vld [vmem:[%s2 + $0x190] sm:$0xff]
      %v312 = vld [vmem:[%s2 + $0x198] sm:$0xff]
      %v313 = vld [vmem:[%s2 + $0x1a0] sm:$0xff]
      %v314 = vld [vmem:[%s2 + $0x1a8] sm:$0xff]
      %v315 = vld [vmem:[%s2 + $0x1b0] sm:$0xff]
      %v316 = vld [vmem:[%s2 + $0x1b8] sm:$0xff]
      %v317 = vld [vmem:[%s2 + $0x1c0] sm:$0xff]
      %v318 = vld [vmem:[%s2 + $0x1c8] sm:$0xff]
      %v319 = vld [vmem:[%s2 + $0x1d0] sm:$0xff]
      %v320 = vld [vmem:[%s2 + $0x1d8] sm:$0xff]
      %v321 = vld [vmem:[%s2 + $0x1e0] sm:$0xff]
      %v322 = vld [vmem:[%s2 + $0x1e8] sm:$0xff]
      %v323 = vld [vmem:[%s2 + $0x1f0] sm:$0xff]
      %v324 = vld [vmem:[%s2 + $0x1f8] sm:$0xff]
      %v325 = vld [vmem:[%s2 + $0x200] sm:$0xff]
      %v326 = vld [vmem:[%s2 + $0x208] sm:$0xff]
      %v327 = vld [vmem:[%s2 + $0x210] sm:$0xff]
      %v328 = vld [vmem:[%s2 + $0x218] sm:$0xff]
      %v329 = vld [vmem:[%s2 + $0x220] sm:$0xff]
      %v330 = vld [vmem:[%s2 + $0x228] sm:$0xff]
      %v331 = vld [vmem:[%s2 + $0x230] sm:$0xff]
      %v332 = vld [vmem:[%s2 + $0x238] sm:$0xff]
      %v333 = vld [vmem:[%s2 + $0x240] sm:$0xff]
      %v334 = vld [vmem:[%s2 + $0x248] sm:$0xff]
      %v335 = vld [vmem:[%s2 + $0x250] sm:$0xff]
      %v336 = vld [vmem:[%s2 + $0x258] sm:$0xff]
      %v337 = vld [vmem:[%s2 + $0x260] sm:$0xff]
      %v338 = vld [vmem:[%s2 + $0x268] sm:$0xff]
      %v339 = vld [vmem:[%s2 + $0x270] sm:$0xff]
      %v340 = vld [vmem:[%s2 + $0x278] sm:$0xff]
      %v341 = vld [vmem:[%s2 + $0x280] sm:$0xff]
      %v342 = vld [vmem:[%s2 + $0x288] sm:$0xff]
      %v343 = vld [vmem:[%s2 + $0x290] sm:$0xff]
      %v344 = vld [vmem:[%s2 + $0x298] sm:$0xff]
      %v345 = vld [vmem:[%s2 + $0x2a0] sm:$0xff]
      %v346 = vld [vmem:[%s2 + $0x2a8] sm:$0xff]
      %v347 = vld [vmem:[%s2 + $0x2b0] sm:$0xff]
      %v348 = vld [vmem:[%s2 + $0x2b8] sm:$0xff]
      %v349 = vld [vmem:[%s2 + $0x2c0] sm:$0xff]
      %v350 = vld [vmem:[%s2 + $0x2c8] sm:$0xff]
      %v351 = vld [vmem:[%s2 + $0x2d0] sm:$0xff]
      %v352 = vld [vmem:[%s2 + $0x2d8] sm:$0xff]
      %v353 = vld [vmem:[%s2 + $0x2e0] sm:$0xff]
      %v354 = vld [vmem:[%s2 + $0x2e8] sm:$0xff]
      %v355 = vld [vmem:[%s2 + $0x2f0] sm:$0xff]
      %v356 = vld [vmem:[%s2 + $0x2f8] sm:$0xff]
      %v357 = vld [vmem:[%s2 + $0x300] sm:$0xff]
      %v358 = vld [vmem:[%s2 + $0x308] sm:$0xff]
      %v359 = vld [vmem:[%s2 + $0x310] sm:$0xff]
      %v360 = vld [vmem:[%s2 + $0x318] sm:$0xff]
      %v361 = vld [vmem:[%s2 + $0x320] sm:$0xff]
      %v362 = vld [vmem:[%s2 + $0x328] sm:$0xff]
      %v363 = vld [vmem:[%s2 + $0x330] sm:$0xff]
      %v364 = vld [vmem:[%s2 + $0x338] sm:$0xff]
      %v365 = vld [vmem:[%s2 + $0x340] sm:$0xff]
      %v366 = vld [vmem:[%s2 + $0x348] sm:$0xff]
      %v367 = vld [vmem:[%s2 + $0x350] sm:$0xff]
      %v368 = vld [vmem:[%s2 + $0x358] sm:$0xff]
      %v369 = vld [vmem:[%s2 + $0x360] sm:$0xff]
      %v370 = vld [vmem:[%s2 + $0x368] sm:$0xff]
      %v371 = vld [vmem:[%s2 + $0x370] sm:$0xff]
      %v372 = vld [vmem:[%s2 + $0x378] sm:$0xff]
      %v373 = vld [vmem:[%s2 + $0x380] sm:$0xff]
      %v374 = vld [vmem:[%s2 + $0x388] sm:$0xff]
      %v375 = vld [vmem:[%s2 + $0x390] sm:$0xff]
      %v376 = vld [vmem:[%s2 + $0x398] sm:$0xff]
      %v377 = vld [vmem:[%s2 + $0x3a0] sm:$0xff]
      %v378 = vld [vmem:[%s2 + $0x3a8] sm:$0xff]
      %v379 = vld [vmem:[%s2 + $0x3b0] sm:$0xff]
      %v380 = vld [vmem:[%s2 + $0x3b8] sm:$0xff]
      %v381 = vld [vmem:[%s2 + $0x3c0] sm:$0xff]
      %v382 = vld [vmem:[%s2 + $0x3c8] sm:$0xff]
      %v383 = vld [vmem:[%s2 + $0x3d0] sm:$0xff]
      %v384 = vld [vmem:[%s2 + $0x3d8] sm:$0xff]
      %v385 = vld [vmem:[%s2 + $0x3e0] sm:$0xff]
      %v386 = vld [vmem:[%s2 + $0x3e8] sm:$0xff]
      %v387 = vld [vmem:[%s2 + $0x3f0] sm:$0xff]
      %v388 = vld [vmem:[%s2 + $0x3f8] sm:$0xff]
      %v389 = vld [vmem:[%s2 + $0x400] sm:$0xff]
      %v390 = vld [vmem:[%s2 + $0x408] sm:$0xff]
      %v391 = vld [vmem:[%s2 + $0x410] sm:$0xff]
      %v392 = vld [vmem:[%s2 + $0x418] sm:$0xff]
      %v393 = vld [vmem:[%s2 + $0x420] sm:$0xff]
      %v394 = vld [vmem:[%s2 + $0x428] sm:$0xff]
      %v395 = vld [vmem:[%s2 + $0x430] sm:$0xff]
      %v396 = vld [vmem:[%s2 + $0x438] sm:$0xff]
      %v397 = vld [vmem:[%s2 + $0x440] sm:$0xff]
      %v398 = vld [vmem:[%s2 + $0x448] sm:$0xff]
      %v399 = vld [vmem:[%s2 + $0x450] sm:$0xff]
      %v400 = vld [vmem:[%s2 + $0x458] sm:$0xff]
      %v401 = vld [vmem:[%s2 + $0x460] sm:$0xff]
      %v402 = vld [vmem:[%s2 + $0x468] sm:$0xff]
      %v403 = vld [vmem:[%s2 + $0x470] sm:$0xff]
      %v404 = vld [vmem:[%s2 + $0x478] sm:$0xff]
      %v405 = vld [vmem:[%s2 + $0x480] sm:$0xff]
      %v406 = vld [vmem:[%s2 + $0x488] sm:$0xff]
      %v407 = vld [vmem:[%s2 + $0x490] sm:$0xff]
      %v408 = vld [vmem:[%s2 + $0x498] sm:$0xff]
      %v409 = vld [vmem:[%s2 + $0x4a0] sm:$0xff]
      %v410 = vld [vmem:[%s2 + $0x4a8] sm:$0xff]
      %v411 = vld [vmem:[%s2 + $0x4b0] sm:$0xff]
      %v412 = vld [vmem:[%s2 + $0x4b8] sm:$0xff]
      %v413 = vld [vmem:[%s2 + $0x4c0] sm:$0xff]
      %v414 = vld [vmem:[%s2 + $0x4c8] sm:$0xff]
      %v415 = vld [vmem:[%s2 + $0x4d0] sm:$0xff]
      %v416 = vld [vmem:[%s2 + $0x4d8] sm:$0xff]
      %v417 = vld [vmem:[%s2 + $0x4e0] sm:$0xff]
      %v418 = vld [vmem:[%s2 + $0x4e8] sm:$0xff]
      %v419 = vld [vmem:[%s2 + $0x4f0] sm:$0xff]
      %v420 = vld [vmem:[%s2 + $0x4f8] sm:$0xff]
      %v421 = vld [vmem:[%s2 + $0x500] sm:$0xff]
      %v422 = vld [vmem:[%s2 + $0x508] sm:$0xff]
      %v423 = vld [vmem:[%s2 + $0x510] sm:$0xff]
      %v424 = vld [vmem:[%s2 + $0x518] sm:$0xff]
      %v425 = vld [vmem:[%s2 + $0x520] sm:$0xff]
      %v426 = vld [vmem:[%s2 + $0x528] sm:$0xff]
      %v427 = vld [vmem:[%s2 + $0x530] sm:$0xff]
      %v428 = vld [vmem:[%s2 + $0x538] sm:$0xff]
      %v429 = vld [vmem:[%s2 + $0x540] sm:$0xff]
      %v430 = vld [vmem:[%s2 + $0x548] sm:$0xff]
      %v431 = vld [vmem:[%s2 + $0x550] sm:$0xff]
      %v432 = vld [vmem:[%s2 + $0x558] sm:$0xff]
      %v433 = vld [vmem:[%s2 + $0x560] sm:$0xff]
      %v434 = vld [vmem:[%s2 + $0x568] sm:$0xff]
      %v435 = vld [vmem:[%s2 + $0x570] sm:$0xff]
      %v436 = vld [vmem:[%s2 + $0x578] sm:$0xff]
      %v437 = vld [vmem:[%s2 + $0x580] sm:$0xff]
      %v438 = vld [vmem:[%s2 + $0x588] sm:$0xff]
      %v439 = vld [vmem:[%s2 + $0x590] sm:$0xff]
      %v440 = vld [vmem:[%s2 + $0x598] sm:$0xff]
      %v441 = vld [vmem:[%s2 + $0x5a0] sm:$0xff]
      %v442 = vld [vmem:[%s2 + $0x5a8] sm:$0xff]
      %v443 = vld [vmem:[%s2 + $0x5b0] sm:$0xff]
      %v444 = vld [vmem:[%s2 + $0x5b8] sm:$0xff]
      %v445 = vld [vmem:[%s2 + $0x5c0] sm:$0xff]
      %v446 = vld [vmem:[%s2 + $0x5c8] sm:$0xff]
      %v447 = vld [vmem:[%s2 + $0x5d0] sm:$0xff]
      %v448 = vld [vmem:[%s2 + $0x5d8] sm:$0xff]
      %v449 = vld [vmem:[%s2 + $0x5e0] sm:$0xff]
      %v450 = vld [vmem:[%s2 + $0x5e8] sm:$0xff]
      %v451 = vld [vmem:[%s2 + $0x5f0] sm:$0xff]
      %v452 = vld [vmem:[%s2 + $0x5f8] sm:$0xff]
      %v453 = vld [vmem:[%s2 + $0x600] sm:$0xff]
      %v454 = vld [vmem:[%s2 + $0x608] sm:$0xff]
      %v455 = vld [vmem:[%s2 + $0x610] sm:$0xff]
      %v456 = vld [vmem:[%s2 + $0x618] sm:$0xff]
      %v457 = vld [vmem:[%s2 + $0x620] sm:$0xff]
      %v458 = vld [vmem:[%s2 + $0x628] sm:$0xff]
      %v459 = vld [vmem:[%s2 + $0x630] sm:$0xff]
      %v460 = vld [vmem:[%s2 + $0x638] sm:$0xff]
      %v461 = vld [vmem:[%s2 + $0x640] sm:$0xff]
      %v462 = vld [vmem:[%s2 + $0x648] sm:$0xff]
      %v463 = vld [vmem:[%s2 + $0x650] sm:$0xff]
      %v464 = vld [vmem:[%s2 + $0x658] sm:$0xff]
      %v465 = vld [vmem:[%s2 + $0x660] sm:$0xff]
      %v466 = vld [vmem:[%s2 + $0x668] sm:$0xff]
      %v467 = vld [vmem:[%s2 + $0x670] sm:$0xff]
      %v468 = vld [vmem:[%s2 + $0x678] sm:$0xff]
      %v469 = vld [vmem:[%s2 + $0x680] sm:$0xff]
      %v470 = vld [vmem:[%s2 + $0x688] sm:$0xff]
      %v471 = vld [vmem:[%s2 + $0x690] sm:$0xff]
      %v472 = vld [vmem:[%s2 + $0x698] sm:$0xff]
      %v473 = vld [vmem:[%s2 + $0x6a0] sm:$0xff]
      %v474 = vld [vmem:[%s2 + $0x6a8] sm:$0xff]
      %v475 = vld [vmem:[%s2 + $0x6b0] sm:$0xff]
      %v476 = vld [vmem:[%s2 + $0x6b8] sm:$0xff]
      %v477 = vld [vmem:[%s2 + $0x6c0] sm:$0xff]
      %v478 = vld [vmem:[%s2 + $0x6c8] sm:$0xff]
      %v479 = vld [vmem:[%s2 + $0x6d0] sm:$0xff]
      %v480 = vld [vmem:[%s2 + $0x6d8] sm:$0xff]
      %v481 = vld [vmem:[%s2 + $0x6e0] sm:$0xff]
      %v482 = vld [vmem:[%s2 + $0x6e8] sm:$0xff]
      %v483 = vld [vmem:[%s2 + $0x6f0] sm:$0xff]
      %v484 = vld [vmem:[%s2 + $0x6f8] sm:$0xff]
      %v485 = vld [vmem:[%s2 + $0x700] sm:$0xff]
      %v486 = vld [vmem:[%s2 + $0x708] sm:$0xff]
      %v487 = vld [vmem:[%s2 + $0x710] sm:$0xff]
      %v488 = vld [vmem:[%s2 + $0x718] sm:$0xff]
      %v489 = vld [vmem:[%s2 + $0x720] sm:$0xff]
      %v490 = vld [vmem:[%s2 + $0x728] sm:$0xff]
      %v491 = vld [vmem:[%s2 + $0x730] sm:$0xff]
      %v492 = vld [vmem:[%s2 + $0x738] sm:$0xff]
      %v493 = vld [vmem:[%s2 + $0x740] sm:$0xff]
      %v494 = vld [vmem:[%s2 + $0x748] sm:$0xff]
      %v495 = vld [vmem:[%s2 + $0x750] sm:$0xff]
      %v496 = vld [vmem:[%s2 + $0x758] sm:$0xff]
      %v497 = vld [vmem:[%s2 + $0x760] sm:$0xff]
      %v498 = vld [vmem:[%s2 + $0x768] sm:$0xff]
      %v499 = vld [vmem:[%s2 + $0x770] sm:$0xff]
      %v500 = vld [vmem:[%s2 + $0x778] sm:$0xff]
      %v501 = vld [vmem:[%s2 + $0x780] sm:$0xff]
      %v502 = vld [vmem:[%s2 + $0x788] sm:$0xff]
      %v503 = vld [vmem:[%s2 + $0x790] sm:$0xff]
      %v504 = vld [vmem:[%s2 + $0x798] sm:$0xff]
      %v505 = vld [vmem:[%s2 + $0x7a0] sm:$0xff]
      %v506 = vld [vmem:[%s2 + $0x7a8] sm:$0xff]
      %v507 = vld [vmem:[%s2 + $0x7b0] sm:$0xff]
      %v508 = vld [vmem:[%s2 + $0x7b8] sm:$0xff]
      %v509 = vld [vmem:[%s2 + $0x7c0] sm:$0xff]
      %v510 = vld [vmem:[%s2 + $0x7c8] sm:$0xff]
      %v511 = vld [vmem:[%s2 + $0x7d0] sm:$0xff]
      %v512 = vld [vmem:[%s2 + $0x7d8] sm:$0xff]
      %v513 = vld [vmem:[%s2 + $0x7e0] sm:$0xff]
      %v514 = vld [vmem:[%s2 + $0x7e8] sm:$0xff]
      %v515 = vld [vmem:[%s2 + $0x7f0] sm:$0xff]
      %v516 = vld [vmem:[%s2 + $0x7f8] sm:$0xff]
      %v517 = vld [vmem:[%s2 + $0x800] sm:$0xff]
      %v518 = vld [vmem:[%s2 + $0x808] sm:$0xff]
      %v519 = vld [vmem:[%s2 + $0x810] sm:$0xff]
      %v520 = vld [vmem:[%s2 + $0x818] sm:$0xff]
      %v521 = vld [vmem:[%s2 + $0x820] sm:$0xff]
      %v522 = vld [vmem:[%s2 + $0x828] sm:$0xff]
      %v523 = vld [vmem:[%s2 + $0x830] sm:$0xff]
      %v524 = vld [vmem:[%s2 + $0x838] sm:$0xff]
      %v525 = vld [vmem:[%s2 + $0x840] sm:$0xff]
      %v526 = vld [vmem:[%s2 + $0x848] sm:$0xff]
      %v527 = vld [vmem:[%s2 + $0x850] sm:$0xff]
      %v528 = vld [vmem:[%s2 + $0x858] sm:$0xff]
      %v529 = vld [vmem:[%s2 + $0x860] sm:$0xff]
      %v530 = vld [vmem:[%s2 + $0x868] sm:$0xff]
      %v531 = vld [vmem:[%s2 + $0x870] sm:$0xff]
      %v532 = vld [vmem:[%s2 + $0x878] sm:$0xff]
      %v533 = vld [vmem:[%s2 + $0x880] sm:$0xff]
      %v534 = vld [vmem:[%s2 + $0x888] sm:$0xff]
      %v535 = vld [vmem:[%s2 + $0x890] sm:$0xff]
      %v536 = vld [vmem:[%s2 + $0x898] sm:$0xff]
      %v537 = vld [vmem:[%s2 + $0x8a0] sm:$0xff]
      %v538 = vld [vmem:[%s2 + $0x8a8] sm:$0xff]
      %v539 = vld [vmem:[%s2 + $0x8b0] sm:$0xff]
      %v540 = vld [vmem:[%s2 + $0x8b8] sm:$0xff]
      %v541 = vld [vmem:[%s2 + $0x8c0] sm:$0xff]
      %v542 = vld [vmem:[%s2 + $0x8c8] sm:$0xff]
      %v543 = vld [vmem:[%s2 + $0x8d0] sm:$0xff]
      %v544 = vld [vmem:[%s2 + $0x8d8] sm:$0xff]
      %v545 = vld [vmem:[%s2 + $0x8e0] sm:$0xff]
      %v546 = vld [vmem:[%s2 + $0x8e8] sm:$0xff]
      %v547 = vld [vmem:[%s2 + $0x8f0] sm:$0xff]
      %v548 = vld [vmem:[%s2 + $0x8f8] sm:$0xff]
      %v549 = vld [vmem:[%s2 + $0x900] sm:$0xff]
      %v550 = vld [vmem:[%s2 + $0x908] sm:$0xff]
      %v551 = vld [vmem:[%s2 + $0x910] sm:$0xff]
      %v552 = vld [vmem:[%s2 + $0x918] sm:$0xff]
      %v553 = vld [vmem:[%s2 + $0x920] sm:$0xff]
      %v554 = vld [vmem:[%s2 + $0x928] sm:$0xff]
      %v555 = vld [vmem:[%s2 + $0x930] sm:$0xff]
      %v556 = vld [vmem:[%s2 + $0x938] sm:$0xff]
      %v557 = vld [vmem:[%s2 + $0x940] sm:$0xff]
      %v558 = vld [vmem:[%s2 + $0x948] sm:$0xff]
      %v559 = vld [vmem:[%s2 + $0x950] sm:$0xff]
      %v560 = vld [vmem:[%s2 + $0x958] sm:$0xff]
      %v561 = vld [vmem:[%s2 + $0x960] sm:$0xff]
      %v562 = vld [vmem:[%s2 + $0x968] sm:$0xff]
      %v563 = vld [vmem:[%s2 + $0x970] sm:$0xff]
      %v564 = vld [vmem:[%s2 + $0x978] sm:$0xff]
      %v565 = vld [vmem:[%s2 + $0x980] sm:$0xff]
      %v566 = vld [vmem:[%s2 + $0x988] sm:$0xff]
      %v567 = vld [vmem:[%s2 + $0x990] sm:$0xff]
      %v568 = vld [vmem:[%s2 + $0x998] sm:$0xff]
      %v569 = vld [vmem:[%s2 + $0x9a0] sm:$0xff]
      %v570 = vld [vmem:[%s2 + $0x9a8] sm:$0xff]
      %v571 = vld [vmem:[%s2 + $0x9b0] sm:$0xff]
      %v572 = vld [vmem:[%s2 + $0x9b8] sm:$0xff]
      %v573 = vld [vmem:[%s2 + $0x9c0] sm:$0xff]
      %v574 = vld [vmem:[%s2 + $0x9c8] sm:$0xff]
      %v575 = vld [vmem:[%s2 + $0x9d0] sm:$0xff]
      %v576 = vld [vmem:[%s2 + $0x9d8] sm:$0xff]
      %v577 = vld [vmem:[%s2 + $0x9e0] sm:$0xff]
      %v578 = vld [vmem:[%s2 + $0x9e8] sm:$0xff]
      %v579 = vld [vmem:[%s2 + $0x9f0] sm:$0xff]
      %v580 = vld [vmem:[%s2 + $0x9f8] sm:$0xff]
      %v581 = vld [vmem:[%s2 + $0xa00] sm:$0xff]
      %v582 = vld [vmem:[%s2 + $0xa08] sm:$0xff]
      %v583 = vld [vmem:[%s2 + $0xa10] sm:$0xff]
      %v584 = vld [vmem:[%s2 + $0xa18] sm:$0xff]
      %v585 = vld [vmem:[%s2 + $0xa20] sm:$0xff]
      %v586 = vld [vmem:[%s2 + $0xa28] sm:$0xff]
      %v587 = vld [vmem:[%s2 + $0xa30] sm:$0xff]
      %v588 = vld [vmem:[%s2 + $0xa38] sm:$0xff]
      %v589 = vld [vmem:[%s2 + $0xa40] sm:$0xff]
      %v590 = vld [vmem:[%s2 + $0xa48] sm:$0xff]
      %v591 = vld [vmem:[%s2 + $0xa50] sm:$0xff]
      %v592 = vld [vmem:[%s2 + $0xa58] sm:$0xff]
      %v593 = vld [vmem:[%s2 + $0xa60] sm:$0xff]
      %v594 = vld [vmem:[%s2 + $0xa68] sm:$0xff]
      %v595 = vld [vmem:[%s2 + $0xa70] sm:$0xff]
      %v596 = vld [vmem:[%s2 + $0xa78] sm:$0xff]
      %v597 = vld [vmem:[%s2 + $0xa80] sm:$0xff]
      %v598 = vld [vmem:[%s2 + $0xa88] sm:$0xff]
      %v599 = vld [vmem:[%s2 + $0xa90] sm:$0xff]
      %v600 = vld [vmem:[%s2 + $0xa98] sm:$0xff]
      %v601 = vld [vmem:[%s2 + $0xaa0] sm:$0xff]
      %v602 = vld [vmem:[%s2 + $0xaa8] sm:$0xff]
      %v603 = vld [vmem:[%s2 + $0xab0] sm:$0xff]
      %v604 = vld [vmem:[%s2 + $0xab8] sm:$0xff]
      %v605 = vld [vmem:[%s2 + $0xac0] sm:$0xff]
      %v606 = vld [vmem:[%s2 + $0xac8] sm:$0xff]
      %v607 = vld [vmem:[%s2 + $0xad0] sm:$0xff]
      %v608 = vld [vmem:[%s2 + $0xad8] sm:$0xff]
      %v609 = vld [vmem:[%s2 + $0xae0] sm:$0xff]
      %v610 = vld [vmem:[%s2 + $0xae8] sm:$0xff]
      %v611 = vld [vmem:[%s2 + $0xaf0] sm:$0xff]
      %v612 = vld [vmem:[%s2 + $0xaf8] sm:$0xff]
      %v613 = vld [vmem:[%s2 + $0xb00] sm:$0xff]
      %v614 = vld [vmem:[%s2 + $0xb08] sm:$0xff]
      %v615 = vld [vmem:[%s2 + $0xb10] sm:$0xff]
      %v616 = vld [vmem:[%s2 + $0xb18] sm:$0xff]
      %v617 = vld [vmem:[%s2 + $0xb20] sm:$0xff]
      %v618 = vld [vmem:[%s2 + $0xb28] sm:$0xff]
      %v619 = vld [vmem:[%s2 + $0xb30] sm:$0xff]
      %v620 = vld [vmem:[%s2 + $0xb38] sm:$0xff]
      %v621 = vld [vmem:[%s2 + $0xb40] sm:$0xff]
      %v622 = vld [vmem:[%s2 + $0xb48] sm:$0xff]
      %v623 = vld [vmem:[%s2 + $0xb50] sm:$0xff]
      %v624 = vld [vmem:[%s2 + $0xb58] sm:$0xff]
      %v625 = vld [vmem:[%s2 + $0xb60] sm:$0xff]
      %v626 = vld [vmem:[%s2 + $0xb68] sm:$0xff]
      %v627 = vld [vmem:[%s2 + $0xb70] sm:$0xff]
      %v628 = vld [vmem:[%s2 + $0xb78] sm:$0xff]
      %v629 = vld [vmem:[%s2 + $0xb80] sm:$0xff]
      %v630 = vld [vmem:[%s2 + $0xb88] sm:$0xff]
      %v631 = vld [vmem:[%s2 + $0xb90] sm:$0xff]
      %v632 = vld [vmem:[%s2 + $0xb98] sm:$0xff]
      %v633 = vld [vmem:[%s2 + $0xba0] sm:$0xff]
      %v634 = vld [vmem:[%s2 + $0xba8] sm:$0xff]
      %v635 = vld [vmem:[%s2 + $0xbb0] sm:$0xff]
      %v636 = vld [vmem:[%s2 + $0xbb8] sm:$0xff]
      %v637 = vld [vmem:[%s2 + $0xbc0] sm:$0xff]
      %v638 = vld [vmem:[%s2 + $0xbc8] sm:$0xff]
      %v639 = vld [vmem:[%s2 + $0xbd0] sm:$0xff]
      %v640 = vld [vmem:[%s2 + $0xbd8] sm:$0xff]
      %v641 = vld [vmem:[%s2 + $0xbe0] sm:$0xff]
      %v642 = vld [vmem:[%s2 + $0xbe8] sm:$0xff]
      %v643 = vld [vmem:[%s2 + $0xbf0] sm:$0xff]
      %v644 = vld [vmem:[%s2 + $0xbf8] sm:$0xff]
      %v645 = vld [vmem:[%s2 + $0xc00] sm:$0xff]
      %v646 = vld [vmem:[%s2 + $0xc08] sm:$0xff]
      %v647 = vld [vmem:[%s2 + $0xc10] sm:$0xff]
      %v648 = vld [vmem:[%s2 + $0xc18] sm:$0xff]
      %v649 = vld [vmem:[%s2 + $0xc20] sm:$0xff]
      %v650 = vld [vmem:[%s2 + $0xc28] sm:$0xff]
      %v651 = vld [vmem:[%s2 + $0xc30] sm:$0xff]
      %v652 = vld [vmem:[%s2 + $0xc38] sm:$0xff]
      %vm653 = vcmask 523264
      %v655 = vsel %vm653, %v261, 0
      %v658 = vsel %vm653, %v262, 0
      %v661 = vsel %vm653, %v263, 0
      %v664 = vsel %vm653, %v264, 0
      %v667 = vsel %vm653, %v265, 0
      %v670 = vsel %vm653, %v266, 0
      %v673 = vsel %vm653, %v267, 0
      %v676 = vsel %vm653, %v268, 0
      %v679 = vsel %vm653, %v269, 0
      %v682 = vsel %vm653, %v270, 0
      %v685 = vsel %vm653, %v271, 0
      %v688 = vsel %vm653, %v272, 0
      %v691 = vsel %vm653, %v273, 0
      %v694 = vsel %vm653, %v274, 0
      %v697 = vsel %vm653, %v275, 0
      %v700 = vsel %vm653, %v276, 0
      %v703 = vsel %vm653, %v277, 0
      %v706 = vsel %vm653, %v278, 0
      %v709 = vsel %vm653, %v279, 0
      %v712 = vsel %vm653, %v280, 0
      %v715 = vsel %vm653, %v281, 0
      %v718 = vsel %vm653, %v282, 0
      %v721 = vsel %vm653, %v283, 0
      %v724 = vsel %vm653, %v284, 0
      %v727 = vsel %vm653, %v285, 0
      %v730 = vsel %vm653, %v286, 0
      %v733 = vsel %vm653, %v287, 0
      %v736 = vsel %vm653, %v288, 0
      %v739 = vsel %vm653, %v289, 0
      %v742 = vsel %vm653, %v290, 0
      %v745 = vsel %vm653, %v291, 0
      %v748 = vsel %vm653, %v292, 0
      %v751 = vsel %vm653, %v293, 0
      %v754 = vsel %vm653, %v294, 0
      %v757 = vsel %vm653, %v295, 0
      %v760 = vsel %vm653, %v296, 0
      %v763 = vsel %vm653, %v297, 0
      %v766 = vsel %vm653, %v298, 0
      %v769 = vsel %vm653, %v299, 0
      %v772 = vsel %vm653, %v300, 0
      %v775 = vsel %vm653, %v301, 0
      %v778 = vsel %vm653, %v302, 0
      %v781 = vsel %vm653, %v303, 0
      %v784 = vsel %vm653, %v304, 0
      %v787 = vsel %vm653, %v305, 0
      %v790 = vsel %vm653, %v306, 0
      %v793 = vsel %vm653, %v307, 0
      %v796 = vsel %vm653, %v308, 0
      %v799 = vsel %vm653, %v309, 0
      %v802 = vsel %vm653, %v310, 0
      %v805 = vsel %vm653, %v311, 0
      %v808 = vsel %vm653, %v312, 0
      %v811 = vsel %vm653, %v313, 0
      %v814 = vsel %vm653, %v314, 0
      %v817 = vsel %vm653, %v315, 0
      %v820 = vsel %vm653, %v316, 0
      %v823 = vsel %vm653, %v317, 0
      %v826 = vsel %vm653, %v318, 0
      %v829 = vsel %vm653, %v319, 0
      %v832 = vsel %vm653, %v320, 0
      %v835 = vsel %vm653, %v321, 0
      %v838 = vsel %vm653, %v322, 0
      %v841 = vsel %vm653, %v323, 0
      %v844 = vsel %vm653, %v324, 0
      %v847 = vsel %vm653, %v325, 0
      %v850 = vsel %vm653, %v326, 0
      %v853 = vsel %vm653, %v327, 0
      %v856 = vsel %vm653, %v328, 0
      %v859 = vsel %vm653, %v329, 0
      %v862 = vsel %vm653, %v330, 0
      %v865 = vsel %vm653, %v331, 0
      %v868 = vsel %vm653, %v332, 0
      %v871 = vsel %vm653, %v333, 0
      %v874 = vsel %vm653, %v334, 0
      %v877 = vsel %vm653, %v335, 0
      %v880 = vsel %vm653, %v336, 0
      %v883 = vsel %vm653, %v337, 0
      %v886 = vsel %vm653, %v338, 0
      %v889 = vsel %vm653, %v339, 0
      %v892 = vsel %vm653, %v340, 0
      %v895 = vsel %vm653, %v341, 0
      %v898 = vsel %vm653, %v342, 0
      %v901 = vsel %vm653, %v343, 0
      %v904 = vsel %vm653, %v344, 0
      %v907 = vsel %vm653, %v345, 0
      %v910 = vsel %vm653, %v346, 0
      %v913 = vsel %vm653, %v347, 0
      %v916 = vsel %vm653, %v348, 0
      %v919 = vsel %vm653, %v349, 0
      %v922 = vsel %vm653, %v350, 0
      %v925 = vsel %vm653, %v351, 0
      %v928 = vsel %vm653, %v352, 0
      %v931 = vsel %vm653, %v353, 0
      %v934 = vsel %vm653, %v354, 0
      %v937 = vsel %vm653, %v355, 0
      %v940 = vsel %vm653, %v356, 0
      %v943 = vsel %vm653, %v357, 0
      %v946 = vsel %vm653, %v358, 0
      %v949 = vsel %vm653, %v359, 0
      %v952 = vsel %vm653, %v360, 0
      %v955 = vsel %vm653, %v361, 0
      %v958 = vsel %vm653, %v362, 0
      %v961 = vsel %vm653, %v363, 0
      %v964 = vsel %vm653, %v364, 0
      %v967 = vsel %vm653, %v365, 0
      %v970 = vsel %vm653, %v366, 0
      %v973 = vsel %vm653, %v367, 0
      %v976 = vsel %vm653, %v368, 0
      %v979 = vsel %vm653, %v369, 0
      %v982 = vsel %vm653, %v370, 0
      %v985 = vsel %vm653, %v371, 0
      %v988 = vsel %vm653, %v372, 0
      %v991 = vsel %vm653, %v373, 0
      %v994 = vsel %vm653, %v374, 0
      %v997 = vsel %vm653, %v375, 0
      %v1000 = vsel %vm653, %v376, 0
      %v1003 = vsel %vm653, %v377, 0
      %v1006 = vsel %vm653, %v378, 0
      %v1009 = vsel %vm653, %v379, 0
      %v1012 = vsel %vm653, %v380, 0
      %v1015 = vsel %vm653, %v381, 0
      %v1018 = vsel %vm653, %v382, 0
      %v1021 = vsel %vm653, %v383, 0
      %v1024 = vsel %vm653, %v384, 0
      %v1027 = vsel %vm653, %v385, 0
      %v1030 = vsel %vm653, %v386, 0
      %v1033 = vsel %vm653, %v387, 0
      %v1036 = vsel %vm653, %v388, 0
      %v1039 = vsel %vm653, %v389, 0
      %v1042 = vsel %vm653, %v390, 0
      %v1045 = vsel %vm653, %v391, 0
      %v1048 = vsel %vm653, %v392, 0
      %v1051 = vsel %vm653, %v393, 0
      %v1054 = vsel %vm653, %v394, 0
      %v1057 = vsel %vm653, %v395, 0
      %v1060 = vsel %vm653, %v396, 0
      %v1063 = vsel %vm653, %v397, 0
      %v1066 = vsel %vm653, %v398, 0
      %v1069 = vsel %vm653, %v399, 0
      %v1072 = vsel %vm653, %v400, 0
      %v1075 = vsel %vm653, %v401, 0
      %v1078 = vsel %vm653, %v402, 0
      %v1081 = vsel %vm653, %v403, 0
      %v1084 = vsel %vm653, %v404, 0
      %v1087 = vsel %vm653, %v405, 0
      %v1090 = vsel %vm653, %v406, 0
      %v1093 = vsel %vm653, %v407, 0
      %v1096 = vsel %vm653, %v408, 0
      %v1099 = vsel %vm653, %v409, 0
      %v1102 = vsel %vm653, %v410, 0
      %v1105 = vsel %vm653, %v411, 0
      %v1108 = vsel %vm653, %v412, 0
      %v1111 = vsel %vm653, %v413, 0
      %v1114 = vsel %vm653, %v414, 0
      %v1117 = vsel %vm653, %v415, 0
      %v1120 = vsel %vm653, %v416, 0
      %v1123 = vsel %vm653, %v417, 0
      %v1126 = vsel %vm653, %v418, 0
      %v1129 = vsel %vm653, %v419, 0
      %v1132 = vsel %vm653, %v420, 0
      %v1135 = vsel %vm653, %v421, 0
      %v1138 = vsel %vm653, %v422, 0
      %v1141 = vsel %vm653, %v423, 0
      %v1144 = vsel %vm653, %v424, 0
      %v1147 = vsel %vm653, %v425, 0
      %v1150 = vsel %vm653, %v426, 0
      %v1153 = vsel %vm653, %v427, 0
      %v1156 = vsel %vm653, %v428, 0
      %v1159 = vsel %vm653, %v429, 0
      %v1162 = vsel %vm653, %v430, 0
      %v1165 = vsel %vm653, %v431, 0
      %v1168 = vsel %vm653, %v432, 0
      %v1171 = vsel %vm653, %v433, 0
      %v1174 = vsel %vm653, %v434, 0
      %v1177 = vsel %vm653, %v435, 0
      %v1180 = vsel %vm653, %v436, 0
      %v1183 = vsel %vm653, %v437, 0
      %v1186 = vsel %vm653, %v438, 0
      %v1189 = vsel %vm653, %v439, 0
      %v1192 = vsel %vm653, %v440, 0
      %v1195 = vsel %vm653, %v441, 0
      %v1198 = vsel %vm653, %v442, 0
      %v1201 = vsel %vm653, %v443, 0
      %v1204 = vsel %vm653, %v444, 0
      %v1207 = vsel %vm653, %v445, 0
      %v1210 = vsel %vm653, %v446, 0
      %v1213 = vsel %vm653, %v447, 0
      %v1216 = vsel %vm653, %v448, 0
      %v1219 = vsel %vm653, %v449, 0
      %v1222 = vsel %vm653, %v450, 0
      %v1225 = vsel %vm653, %v451, 0
      %v1228 = vsel %vm653, %v452, 0
      %v1231 = vsel %vm653, %v453, 0
      %v1234 = vsel %vm653, %v454, 0
      %v1237 = vsel %vm653, %v455, 0
      %v1240 = vsel %vm653, %v456, 0
      %v1243 = vsel %vm653, %v457, 0
      %v1246 = vsel %vm653, %v458, 0
      %v1249 = vsel %vm653, %v459, 0
      %v1252 = vsel %vm653, %v460, 0
      %v1255 = vsel %vm653, %v461, 0
      %v1258 = vsel %vm653, %v462, 0
      %v1261 = vsel %vm653, %v463, 0
      %v1264 = vsel %vm653, %v464, 0
      %v1267 = vsel %vm653, %v465, 0
      %v1270 = vsel %vm653, %v466, 0
      %v1273 = vsel %vm653, %v467, 0
      %v1276 = vsel %vm653, %v468, 0
      %v1279 = vsel %vm653, %v469, 0
      %v1282 = vsel %vm653, %v470, 0
      %v1285 = vsel %vm653, %v471, 0
      %v1288 = vsel %vm653, %v472, 0
      %v1291 = vsel %vm653, %v473, 0
      %v1294 = vsel %vm653, %v474, 0
      %v1297 = vsel %vm653, %v475, 0
      %v1300 = vsel %vm653, %v476, 0
      %v1303 = vsel %vm653, %v477, 0
      %v1306 = vsel %vm653, %v478, 0
      %v1309 = vsel %vm653, %v479, 0
      %v1312 = vsel %vm653, %v480, 0
      %v1315 = vsel %vm653, %v481, 0
      %v1318 = vsel %vm653, %v482, 0
      %v1321 = vsel %vm653, %v483, 0
      %v1324 = vsel %vm653, %v484, 0
      %v1327 = vsel %vm653, %v485, 0
      %v1330 = vsel %vm653, %v486, 0
      %v1333 = vsel %vm653, %v487, 0
      %v1336 = vsel %vm653, %v488, 0
      %v1339 = vsel %vm653, %v489, 0
      %v1342 = vsel %vm653, %v490, 0
      %v1345 = vsel %vm653, %v491, 0
      %v1348 = vsel %vm653, %v492, 0
      %v1351 = vsel %vm653, %v493, 0
      %v1354 = vsel %vm653, %v494, 0
      %v1357 = vsel %vm653, %v495, 0
      %v1360 = vsel %vm653, %v496, 0
      %v1363 = vsel %vm653, %v497, 0
      %v1366 = vsel %vm653, %v498, 0
      %v1369 = vsel %vm653, %v499, 0
      %v1372 = vsel %vm653, %v500, 0
      %v1375 = vsel %vm653, %v501, 0
      %v1378 = vsel %vm653, %v502, 0
      %v1381 = vsel %vm653, %v503, 0
      %v1384 = vsel %vm653, %v504, 0
      %v1387 = vsel %vm653, %v505, 0
      %v1390 = vsel %vm653, %v506, 0
      %v1393 = vsel %vm653, %v507, 0
      %v1396 = vsel %vm653, %v508, 0
      %v1399 = vsel %vm653, %v509, 0
      %v1402 = vsel %vm653, %v510, 0
      %v1405 = vsel %vm653, %v511, 0
      %v1408 = vsel %vm653, %v512, 0
      %v1411 = vsel %vm653, %v513, 0
      %v1414 = vsel %vm653, %v514, 0
      %v1417 = vsel %vm653, %v515, 0
      %v1420 = vsel %vm653, %v516, 0
      %v1423 = vsel %vm653, %v517, 0
      %v1426 = vsel %vm653, %v518, 0
      %v1429 = vsel %vm653, %v519, 0
      %v1432 = vsel %vm653, %v520, 0
      %v1435 = vsel %vm653, %v521, 0
      %v1438 = vsel %vm653, %v522, 0
      %v1441 = vsel %vm653, %v523, 0
      %v1444 = vsel %vm653, %v524, 0
      %v1447 = vsel %vm653, %v525, 0
      %v1450 = vsel %vm653, %v526, 0
      %v1453 = vsel %vm653, %v527, 0
      %v1456 = vsel %vm653, %v528, 0
      %v1459 = vsel %vm653, %v529, 0
      %v1462 = vsel %vm653, %v530, 0
      %v1465 = vsel %vm653, %v531, 0
      %v1468 = vsel %vm653, %v532, 0
      %v1471 = vsel %vm653, %v533, 0
      %v1474 = vsel %vm653, %v534, 0
      %v1477 = vsel %vm653, %v535, 0
      %v1480 = vsel %vm653, %v536, 0
      %v1483 = vsel %vm653, %v537, 0
      %v1486 = vsel %vm653, %v538, 0
      %v1489 = vsel %vm653, %v539, 0
      %v1492 = vsel %vm653, %v540, 0
      %v1495 = vsel %vm653, %v541, 0
      %v1498 = vsel %vm653, %v542, 0
      %v1501 = vsel %vm653, %v543, 0
      %v1504 = vsel %vm653, %v544, 0
      %v1507 = vsel %vm653, %v545, 0
      %v1510 = vsel %vm653, %v546, 0
      %v1513 = vsel %vm653, %v547, 0
      %v1516 = vsel %vm653, %v548, 0
      %v1519 = vsel %vm653, %v549, 0
      %v1522 = vsel %vm653, %v550, 0
      %v1525 = vsel %vm653, %v551, 0
      %v1528 = vsel %vm653, %v552, 0
      %v1531 = vsel %vm653, %v553, 0
      %v1534 = vsel %vm653, %v554, 0
      %v1537 = vsel %vm653, %v555, 0
      %v1540 = vsel %vm653, %v556, 0
      %v1543 = vsel %vm653, %v557, 0
      %v1546 = vsel %vm653, %v558, 0
      %v1549 = vsel %vm653, %v559, 0
      %v1552 = vsel %vm653, %v560, 0
      %v1555 = vsel %vm653, %v561, 0
      %v1558 = vsel %vm653, %v562, 0
      %v1561 = vsel %vm653, %v563, 0
      %v1564 = vsel %vm653, %v564, 0
      %v1567 = vsel %vm653, %v565, 0
      %v1570 = vsel %vm653, %v566, 0
      %v1573 = vsel %vm653, %v567, 0
      %v1576 = vsel %vm653, %v568, 0
      %v1579 = vsel %vm653, %v569, 0
      %v1582 = vsel %vm653, %v570, 0
      %v1585 = vsel %vm653, %v571, 0
      %v1588 = vsel %vm653, %v572, 0
      %v1591 = vsel %vm653, %v573, 0
      %v1594 = vsel %vm653, %v574, 0
      %v1597 = vsel %vm653, %v575, 0
      %v1600 = vsel %vm653, %v576, 0
      %v1603 = vsel %vm653, %v577, 0
      %v1606 = vsel %vm653, %v578, 0
      %v1609 = vsel %vm653, %v579, 0
      %v1612 = vsel %vm653, %v580, 0
      %v1615 = vsel %vm653, %v581, 0
      %v1618 = vsel %vm653, %v582, 0
      %v1621 = vsel %vm653, %v583, 0
      %v1624 = vsel %vm653, %v584, 0
      %v1627 = vsel %vm653, %v585, 0
      %v1630 = vsel %vm653, %v586, 0
      %v1633 = vsel %vm653, %v587, 0
      %v1636 = vsel %vm653, %v588, 0
      %v1639 = vsel %vm653, %v589, 0
      %v1642 = vsel %vm653, %v590, 0
      %v1645 = vsel %vm653, %v591, 0
      %v1648 = vsel %vm653, %v592, 0
      %v1651 = vsel %vm653, %v593, 0
      %v1654 = vsel %vm653, %v594, 0
      %v1657 = vsel %vm653, %v595, 0
      %v1660 = vsel %vm653, %v596, 0
      %v1663 = vsel %vm653, %v597, 0
      %v1666 = vsel %vm653, %v598, 0
      %v1669 = vsel %vm653, %v599, 0
      %v1672 = vsel %vm653, %v600, 0
      %v1675 = vsel %vm653, %v601, 0
      %v1678 = vsel %vm653, %v602, 0
      %v1681 = vsel %vm653, %v603, 0
      %v1684 = vsel %vm653, %v604, 0
      %v1687 = vsel %vm653, %v605, 0
      %v1690 = vsel %vm653, %v606, 0
      %v1693 = vsel %vm653, %v607, 0
      %v1696 = vsel %vm653, %v608, 0
      %v1699 = vsel %vm653, %v609, 0
      %v1702 = vsel %vm653, %v610, 0
      %v1705 = vsel %vm653, %v611, 0
      %v1708 = vsel %vm653, %v612, 0
      %v1711 = vsel %vm653, %v613, 0
      %v1714 = vsel %vm653, %v614, 0
      %v1717 = vsel %vm653, %v615, 0
      %v1720 = vsel %vm653, %v616, 0
      %v1723 = vsel %vm653, %v617, 0
      %v1726 = vsel %vm653, %v618, 0
      %v1729 = vsel %vm653, %v619, 0
      %v1732 = vsel %vm653, %v620, 0
      %v1735 = vsel %vm653, %v621, 0
      %v1738 = vsel %vm653, %v622, 0
      %v1741 = vsel %vm653, %v623, 0
      %v1744 = vsel %vm653, %v624, 0
      %v1747 = vsel %vm653, %v625, 0
      %v1750 = vsel %vm653, %v626, 0
      %v1753 = vsel %vm653, %v627, 0
      %v1756 = vsel %vm653, %v628, 0
      %v1759 = vsel %vm653, %v629, 0
      %v1762 = vsel %vm653, %v630, 0
      %v1765 = vsel %vm653, %v631, 0
      %v1768 = vsel %vm653, %v632, 0
      %v1771 = vsel %vm653, %v633, 0
      %v1774 = vsel %vm653, %v634, 0
      %v1777 = vsel %vm653, %v635, 0
      %v1780 = vsel %vm653, %v636, 0
      %v1783 = vsel %vm653, %v637, 0
      %v1786 = vsel %vm653, %v638, 0
      %v1789 = vsel %vm653, %v639, 0
      %v1792 = vsel %vm653, %v640, 0
      %v1795 = vsel %vm653, %v641, 0
      %v1798 = vsel %vm653, %v642, 0
      %v1801 = vsel %vm653, %v643, 0
      %v1804 = vsel %vm653, %v644, 0
      %v1807 = vsel %vm653, %v645, 0
      %v1810 = vsel %vm653, %v646, 0
      %v1813 = vsel %vm653, %v647, 0
      %v1816 = vsel %vm653, %v648, 0
      %v1819 = vsel %vm653, %v649, 0
      %v1822 = vsel %vm653, %v650, 0
      %v1825 = vsel %vm653, %v651, 0
      %v1828 = vsel %vm653, %v652, 0
      %1830 = vmatprep.subr.mxu0 0.0
      %1831 = vmatpush1.msra.mxu0 0.0
      %1832 = vmatprep.subr.mxu0 0.0
      %1833 = vmatpush1.msra.mxu0 0.0
      %1834 = vmatprep.subr.mxu0 0.0
      %1835 = vmatpush1.msra.mxu0 0.0
      %1836 = vmatprep.subr.mxu0 0.0
      %1837 = vmatpush1.msra.mxu0 0.0
      %1838 = vmatprep.subr.mxu0 0.0
      %1839 = vmatpush1.msra.mxu0 0.0
      %1840 = vmatprep.subr.mxu0 0.0
      %1841 = vmatpush1.msra.mxu0 0.0
      %1842 = vmatprep.subr.mxu0 0.0
      %1843 = vmatpush1.msra.mxu0 0.0
      %1844 = vmatprep.subr.mxu0 0.0
      %1845 = vmatpush1.msra.mxu0 0.0
      %1846 = vmatprep.subr.mxu0 0.0
      %1847 = vmatpush1.msra.mxu0 %v260
      %1848 = vmatprep.subr.mxu0 0.0
      %1849 = vmatpush1.msra.mxu0 %v259
      %1850 = vmatprep.subr.mxu0 0.0
      %1851 = vmatpush1.msra.mxu0 %v258
      %1852 = vmatprep.subr.mxu0 0.0
      %1853 = vmatpush1.msra.mxu0 %v257
      %1854 = vmatprep.subr.mxu0 0.0
      %1855 = vmatpush1.msra.mxu0 %v256
      %1856 = vmatprep.subr.mxu0 0.0
      %1857 = vmatpush1.msra.mxu0 %v255
      %1858 = vmatprep.subr.mxu0 0.0
      %1859 = vmatpush1.msra.mxu0 %v254
      %1860 = vmatprep.subr.mxu0 0.0
      %1861 = vmatpush1.msra.mxu0 %v253
      %1862 = vmatprep.subr.mxu0 0.0
      %1863 = vmatpush2.msra.mxu0 0.0
      %1864 = vmatprep.subr.mxu0 0.0
      %1865 = vmatpush2.msra.mxu0 0.0
      %1866 = vmatprep.subr.mxu0 0.0
      %1867 = vmatpush2.msra.mxu0 0.0
      %1868 = vmatprep.subr.mxu0 0.0
      %1869 = vmatpush2.msra.mxu0 0.0
      %1870 = vmatprep.subr.mxu0 0.0
      %1871 = vmatpush2.msra.mxu0 0.0
      %1872 = vmatprep.subr.mxu0 0.0
      %1873 = vmatpush2.msra.mxu0 0.0
      %1874 = vmatprep.subr.mxu0 0.0
      %1875 = vmatpush2.msra.mxu0 0.0
      %1876 = vmatprep.subr.mxu0 0.0
      %1877 = vmatpush2.msra.mxu0 0.0
      %1878 = vmatprep.subr.mxu0 0.0
      %1879 = vmatpush2.msra.mxu0 0.0
      %1880 = vmatprep.subr.mxu0 0.0
      %1881 = vmatpush2.msra.mxu0 0.0
      %1882 = vmatprep.subr.mxu0 0.0
      %1883 = vmatpush2.msra.mxu0 0.0
      %1884 = vmatprep.subr.mxu0 0.0
      %1885 = vmatpush2.msra.mxu0 0.0
      %1886 = vmatprep.subr.mxu0 0.0
      %1887 = vmatpush2.msra.mxu0 0.0
      %1888 = vmatprep.subr.mxu0 0.0
      %1889 = vmatpush2.msra.mxu0 0.0
      %1890 = vmatprep.subr.mxu0 0.0
      %1891 = vmatpush2.msra.mxu0 0.0
      %1892 = vmatprep.subr.mxu0 0.0
      %1893 = vmatpush2.msra.mxu0 0.0
      %1894 = vmatprep.mubr.f32.mxu0 0.0
      %1895 = vmatmul.mubr.f32.gmra.mxu0 %v655
      %v1896 = vpop.f32.mrf.mxu0
      %v1897 = vadd.f32 0.0, %v1896
      %v1898 = vpop.f32.mrf.mxu0
      %1899 = vmatprep.mubr.f32.mxu0 0.0
      %1900 = vmatmul.mubr.f32.gmra.mxu0 %v658
      %v1901 = vpop.f32.mrf.mxu0
      %v1902 = vadd.f32 0.0, %v1901
      %v1903 = vpop.f32.mrf.mxu0
      %1904 = vmatprep.mubr.f32.mxu0 0.0
      %1905 = vmatmul.mubr.f32.gmra.mxu0 %v661
      %v1906 = vpop.f32.mrf.mxu0
      %v1907 = vadd.f32 0.0, %v1906
      %v1908 = vpop.f32.mrf.mxu0
      %1909 = vmatprep.mubr.f32.mxu0 0.0
      %1910 = vmatmul.mubr.f32.gmra.mxu0 %v664
      %v1911 = vpop.f32.mrf.mxu0
      %v1912 = vadd.f32 0.0, %v1911
      %v1913 = vpop.f32.mrf.mxu0
      %1914 = vmatprep.mubr.f32.mxu0 0.0
      %1915 = vmatmul.mubr.f32.gmra.mxu0 %v667
      %v1916 = vpop.f32.mrf.mxu0
      %v1917 = vadd.f32 0.0, %v1916
      %v1918 = vpop.f32.mrf.mxu0
      %1919 = vmatprep.mubr.f32.mxu0 0.0
      %1920 = vmatmul.mubr.f32.gmra.mxu0 %v670
      %v1921 = vpop.f32.mrf.mxu0
      %v1922 = vadd.f32 0.0, %v1921
      %v1923 = vpop.f32.mrf.mxu0
      %1924 = vmatprep.mubr.f32.mxu0 0.0
      %1925 = vmatmul.mubr.f32.gmra.mxu0 %v673
      %v1926 = vpop.f32.mrf.mxu0
      %v1927 = vadd.f32 0.0, %v1926
      %v1928 = vpop.f32.mrf.mxu0
      %1929 = vmatprep.mubr.f32.mxu0 0.0
      %1930 = vmatmul.mubr.f32.gmra.mxu0 %v676
      %v1931 = vpop.f32.mrf.mxu0
      %v1932 = vadd.f32 0.0, %v1931
      %v1933 = vpop.f32.mrf.mxu0
      %1934 = vmatprep.mubr.f32.mxu0 0.0
      %1935 = vmatmul.mubr.f32.gmra.mxu0 %v679
      %v1936 = vpop.f32.mrf.mxu0
      %v1937 = vadd.f32 0.0, %v1936
      %v1938 = vpop.f32.mrf.mxu0
      %1939 = vmatprep.mubr.f32.mxu0 0.0
      %1940 = vmatmul.mubr.f32.gmra.mxu0 %v682
      %v1941 = vpop.f32.mrf.mxu0
      %v1942 = vadd.f32 0.0, %v1941
      %v1943 = vpop.f32.mrf.mxu0
      %1944 = vmatprep.mubr.f32.mxu0 0.0
      %1945 = vmatmul.mubr.f32.gmra.mxu0 %v685
      %v1946 = vpop.f32.mrf.mxu0
      %v1947 = vadd.f32 0.0, %v1946
      %v1948 = vpop.f32.mrf.mxu0
      %1949 = vmatprep.mubr.f32.mxu0 0.0
      %1950 = vmatmul.mubr.f32.gmra.mxu0 %v688
      %v1951 = vpop.f32.mrf.mxu0
      %v1952 = vadd.f32 0.0, %v1951
      %v1953 = vpop.f32.mrf.mxu0
      %1954 = vmatprep.mubr.f32.mxu0 0.0
      %1955 = vmatmul.mubr.f32.gmra.mxu0 %v691
      %v1956 = vpop.f32.mrf.mxu0
      %v1957 = vadd.f32 0.0, %v1956
      %v1958 = vpop.f32.mrf.mxu0
      %1959 = vmatprep.mubr.f32.mxu0 0.0
      %1960 = vmatmul.mubr.f32.gmra.mxu0 %v694
      %v1961 = vpop.f32.mrf.mxu0
      %v1962 = vadd.f32 0.0, %v1961
      %v1963 = vpop.f32.mrf.mxu0
      %1964 = vmatprep.mubr.f32.mxu0 0.0
      %1965 = vmatmul.mubr.f32.gmra.mxu0 %v697
      %v1966 = vpop.f32.mrf.mxu0
      %v1967 = vadd.f32 0.0, %v1966
      %v1968 = vpop.f32.mrf.mxu0
      %1969 = vmatprep.mubr.f32.mxu0 0.0
      %1970 = vmatmul.mubr.f32.gmra.mxu0 %v700
      %v1971 = vpop.f32.mrf.mxu0
      %v1972 = vadd.f32 0.0, %v1971
      %v1973 = vpop.f32.mrf.mxu0
      %1974 = vmatprep.mubr.f32.mxu0 0.0
      %1975 = vmatmul.mubr.f32.gmra.mxu0 %v703
      %v1976 = vpop.f32.mrf.mxu0
      %v1977 = vadd.f32 0.0, %v1976
      %v1978 = vpop.f32.mrf.mxu0
      %1979 = vmatprep.mubr.f32.mxu0 0.0
      %1980 = vmatmul.mubr.f32.gmra.mxu0 %v706
      %v1981 = vpop.f32.mrf.mxu0
      %v1982 = vadd.f32 0.0, %v1981
      %v1983 = vpop.f32.mrf.mxu0
      %1984 = vmatprep.mubr.f32.mxu0 0.0
      %1985 = vmatmul.mubr.f32.gmra.mxu0 %v709
      %v1986 = vpop.f32.mrf.mxu0
      %v1987 = vadd.f32 0.0, %v1986
      %v1988 = vpop.f32.mrf.mxu0
      %1989 = vmatprep.mubr.f32.mxu0 0.0
      %1990 = vmatmul.mubr.f32.gmra.mxu0 %v712
      %v1991 = vpop.f32.mrf.mxu0
      %v1992 = vadd.f32 0.0, %v1991
      %v1993 = vpop.f32.mrf.mxu0
      %1994 = vmatprep.mubr.f32.mxu0 0.0
      %1995 = vmatmul.mubr.f32.gmra.mxu0 %v715
      %v1996 = vpop.f32.mrf.mxu0
      %v1997 = vadd.f32 0.0, %v1996
      %v1998 = vpop.f32.mrf.mxu0
      %1999 = vmatprep.mubr.f32.mxu0 0.0
      %2000 = vmatmul.mubr.f32.gmra.mxu0 %v718
      %v2001 = vpop.f32.mrf.mxu0
      %v2002 = vadd.f32 0.0, %v2001
      %v2003 = vpop.f32.mrf.mxu0
      %2004 = vmatprep.mubr.f32.mxu0 0.0
      %2005 = vmatmul.mubr.f32.gmra.mxu0 %v721
      %v2006 = vpop.f32.mrf.mxu0
      %v2007 = vadd.f32 0.0, %v2006
      %v2008 = vpop.f32.mrf.mxu0
      %2009 = vmatprep.mubr.f32.mxu0 0.0
      %2010 = vmatmul.mubr.f32.gmra.mxu0 %v724
      %v2011 = vpop.f32.mrf.mxu0
      %v2012 = vadd.f32 0.0, %v2011
      %v2013 = vpop.f32.mrf.mxu0
      %2014 = vmatprep.mubr.f32.mxu0 0.0
      %2015 = vmatmul.mubr.f32.gmra.mxu0 %v727
      %v2016 = vpop.f32.mrf.mxu0
      %v2017 = vadd.f32 0.0, %v2016
      %v2018 = vpop.f32.mrf.mxu0
      %2019 = vmatprep.mubr.f32.mxu0 0.0
      %2020 = vmatmul.mubr.f32.gmra.mxu0 %v730
      %v2021 = vpop.f32.mrf.mxu0
      %v2022 = vadd.f32 0.0, %v2021
      %v2023 = vpop.f32.mrf.mxu0
      %2024 = vmatprep.mubr.f32.mxu0 0.0
      %2025 = vmatmul.mubr.f32.gmra.mxu0 %v733
      %v2026 = vpop.f32.mrf.mxu0
      %v2027 = vadd.f32 0.0, %v2026
      %v2028 = vpop.f32.mrf.mxu0
      %2029 = vmatprep.mubr.f32.mxu0 0.0
      %2030 = vmatmul.mubr.f32.gmra.mxu0 %v736
      %v2031 = vpop.f32.mrf.mxu0
      %v2032 = vadd.f32 0.0, %v2031
      %v2033 = vpop.f32.mrf.mxu0
      %2034 = vmatprep.mubr.f32.mxu0 0.0
      %2035 = vmatmul.mubr.f32.gmra.mxu0 %v739
      %v2036 = vpop.f32.mrf.mxu0
      %v2037 = vadd.f32 0.0, %v2036
      %v2038 = vpop.f32.mrf.mxu0
      %2039 = vmatprep.mubr.f32.mxu0 0.0
      %2040 = vmatmul.mubr.f32.gmra.mxu0 %v742
      %v2041 = vpop.f32.mrf.mxu0
      %v2042 = vadd.f32 0.0, %v2041
      %v2043 = vpop.f32.mrf.mxu0
      %2044 = vmatprep.mubr.f32.mxu0 0.0
      %2045 = vmatmul.mubr.f32.gmra.mxu0 %v745
      %v2046 = vpop.f32.mrf.mxu0
      %v2047 = vadd.f32 0.0, %v2046
      %v2048 = vpop.f32.mrf.mxu0
      %2049 = vmatprep.mubr.f32.mxu0 0.0
      %2050 = vmatmul.mubr.f32.gmra.mxu0 %v748
      %v2051 = vpop.f32.mrf.mxu0
      %v2052 = vadd.f32 0.0, %v2051
      %v2053 = vpop.f32.mrf.mxu0
      %2054 = vmatprep.mubr.f32.mxu0 0.0
      %2055 = vmatmul.mubr.f32.gmra.mxu0 %v751
      %v2056 = vpop.f32.mrf.mxu0
      %v2057 = vadd.f32 0.0, %v2056
      %v2058 = vpop.f32.mrf.mxu0
      %2059 = vmatprep.mubr.f32.mxu0 0.0
      %2060 = vmatmul.mubr.f32.gmra.mxu0 %v754
      %v2061 = vpop.f32.mrf.mxu0
      %v2062 = vadd.f32 0.0, %v2061
      %v2063 = vpop.f32.mrf.mxu0
      %2064 = vmatprep.mubr.f32.mxu0 0.0
      %2065 = vmatmul.mubr.f32.gmra.mxu0 %v757
      %v2066 = vpop.f32.mrf.mxu0
      %v2067 = vadd.f32 0.0, %v2066
      %v2068 = vpop.f32.mrf.mxu0
      %2069 = vmatprep.mubr.f32.mxu0 0.0
      %2070 = vmatmul.mubr.f32.gmra.mxu0 %v760
      %v2071 = vpop.f32.mrf.mxu0
      %v2072 = vadd.f32 0.0, %v2071
      %v2073 = vpop.f32.mrf.mxu0
      %2074 = vmatprep.mubr.f32.mxu0 0.0
      %2075 = vmatmul.mubr.f32.gmra.mxu0 %v763
      %v2076 = vpop.f32.mrf.mxu0
      %v2077 = vadd.f32 0.0, %v2076
      %v2078 = vpop.f32.mrf.mxu0
      %2079 = vmatprep.mubr.f32.mxu0 0.0
      %2080 = vmatmul.mubr.f32.gmra.mxu0 %v766
      %v2081 = vpop.f32.mrf.mxu0
      %v2082 = vadd.f32 0.0, %v2081
      %v2083 = vpop.f32.mrf.mxu0
      %2084 = vmatprep.mubr.f32.mxu0 0.0
      %2085 = vmatmul.mubr.f32.gmra.mxu0 %v769
      %v2086 = vpop.f32.mrf.mxu0
      %v2087 = vadd.f32 0.0, %v2086
      %v2088 = vpop.f32.mrf.mxu0
      %2089 = vmatprep.mubr.f32.mxu0 0.0
      %2090 = vmatmul.mubr.f32.gmra.mxu0 %v772
      %v2091 = vpop.f32.mrf.mxu0
      %v2092 = vadd.f32 0.0, %v2091
      %v2093 = vpop.f32.mrf.mxu0
      %2094 = vmatprep.mubr.f32.mxu0 0.0
      %2095 = vmatmul.mubr.f32.gmra.mxu0 %v775
      %v2096 = vpop.f32.mrf.mxu0
      %v2097 = vadd.f32 0.0, %v2096
      %v2098 = vpop.f32.mrf.mxu0
      %2099 = vmatprep.mubr.f32.mxu0 0.0
      %2100 = vmatmul.mubr.f32.gmra.mxu0 %v778
      %v2101 = vpop.f32.mrf.mxu0
      %v2102 = vadd.f32 0.0, %v2101
      %v2103 = vpop.f32.mrf.mxu0
      %2104 = vmatprep.mubr.f32.mxu0 0.0
      %2105 = vmatmul.mubr.f32.gmra.mxu0 %v781
      %v2106 = vpop.f32.mrf.mxu0
      %v2107 = vadd.f32 0.0, %v2106
      %v2108 = vpop.f32.mrf.mxu0
      %2109 = vmatprep.mubr.f32.mxu0 0.0
      %2110 = vmatmul.mubr.f32.gmra.mxu0 %v784
      %v2111 = vpop.f32.mrf.mxu0
      %v2112 = vadd.f32 0.0, %v2111
      %v2113 = vpop.f32.mrf.mxu0
      %2114 = vmatprep.mubr.f32.mxu0 0.0
      %2115 = vmatmul.mubr.f32.gmra.mxu0 %v787
      %v2116 = vpop.f32.mrf.mxu0
      %v2117 = vadd.f32 0.0, %v2116
      %v2118 = vpop.f32.mrf.mxu0
      %2119 = vmatprep.mubr.f32.mxu0 0.0
      %2120 = vmatmul.mubr.f32.gmra.mxu0 %v790
      %v2121 = vpop.f32.mrf.mxu0
      %v2122 = vadd.f32 0.0, %v2121
      %v2123 = vpop.f32.mrf.mxu0
      %2124 = vmatprep.mubr.f32.mxu0 0.0
      %2125 = vmatmul.mubr.f32.gmra.mxu0 %v793
      %v2126 = vpop.f32.mrf.mxu0
      %v2127 = vadd.f32 0.0, %v2126
      %v2128 = vpop.f32.mrf.mxu0
      %2129 = vmatprep.mubr.f32.mxu0 0.0
      %2130 = vmatmul.mubr.f32.gmra.mxu0 %v796
      %v2131 = vpop.f32.mrf.mxu0
      %v2132 = vadd.f32 0.0, %v2131
      %v2133 = vpop.f32.mrf.mxu0
      %2134 = vmatprep.mubr.f32.mxu0 0.0
      %2135 = vmatmul.mubr.f32.gmra.mxu0 %v799
      %v2136 = vpop.f32.mrf.mxu0
      %v2137 = vadd.f32 0.0, %v2136
      %v2138 = vpop.f32.mrf.mxu0
      %2139 = vmatprep.mubr.f32.mxu0 0.0
      %2140 = vmatmul.mubr.f32.gmra.mxu0 %v802
      %v2141 = vpop.f32.mrf.mxu0
      %v2142 = vadd.f32 0.0, %v2141
      %v2143 = vpop.f32.mrf.mxu0
      %2144 = vmatprep.mubr.f32.mxu0 0.0
      %2145 = vmatmul.mubr.f32.gmra.mxu0 %v805
      %v2146 = vpop.f32.mrf.mxu0
      %v2147 = vadd.f32 0.0, %v2146
      %v2148 = vpop.f32.mrf.mxu0
      %2149 = vmatprep.mubr.f32.mxu0 0.0
      %2150 = vmatmul.mubr.f32.gmra.mxu0 %v808
      %v2151 = vpop.f32.mrf.mxu0
      %v2152 = vadd.f32 0.0, %v2151
      %v2153 = vpop.f32.mrf.mxu0
      %2154 = vmatprep.mubr.f32.mxu0 0.0
      %2155 = vmatmul.mubr.f32.gmra.mxu0 %v811
      %v2156 = vpop.f32.mrf.mxu0
      %v2157 = vadd.f32 0.0, %v2156
      %v2158 = vpop.f32.mrf.mxu0
      %2159 = vmatprep.mubr.f32.mxu0 0.0
      %2160 = vmatmul.mubr.f32.gmra.mxu0 %v814
      %v2161 = vpop.f32.mrf.mxu0
      %v2162 = vadd.f32 0.0, %v2161
      %v2163 = vpop.f32.mrf.mxu0
      %2164 = vmatprep.mubr.f32.mxu0 0.0
      %2165 = vmatmul.mubr.f32.gmra.mxu0 %v817
      %v2166 = vpop.f32.mrf.mxu0
      %v2167 = vadd.f32 0.0, %v2166
      %v2168 = vpop.f32.mrf.mxu0
      %2169 = vmatprep.mubr.f32.mxu0 0.0
      %2170 = vmatmul.mubr.f32.gmra.mxu0 %v820
      %v2171 = vpop.f32.mrf.mxu0
      %v2172 = vadd.f32 0.0, %v2171
      %v2173 = vpop.f32.mrf.mxu0
      %2174 = vmatprep.mubr.f32.mxu0 0.0
      %2175 = vmatmul.mubr.f32.gmra.mxu0 %v823
      %v2176 = vpop.f32.mrf.mxu0
      %v2177 = vadd.f32 0.0, %v2176
      %v2178 = vpop.f32.mrf.mxu0
      %2179 = vmatprep.mubr.f32.mxu0 0.0
      %2180 = vmatmul.mubr.f32.gmra.mxu0 %v826
      %v2181 = vpop.f32.mrf.mxu0
      %v2182 = vadd.f32 0.0, %v2181
      %v2183 = vpop.f32.mrf.mxu0
      %2184 = vmatprep.mubr.f32.mxu0 0.0
      %2185 = vmatmul.mubr.f32.gmra.mxu0 %v829
      %v2186 = vpop.f32.mrf.mxu0
      %v2187 = vadd.f32 0.0, %v2186
      %v2188 = vpop.f32.mrf.mxu0
      %2189 = vmatprep.mubr.f32.mxu0 0.0
      %2190 = vmatmul.mubr.f32.gmra.mxu0 %v832
      %v2191 = vpop.f32.mrf.mxu0
      %v2192 = vadd.f32 0.0, %v2191
      %v2193 = vpop.f32.mrf.mxu0
      %2194 = vmatprep.mubr.f32.mxu0 0.0
      %2195 = vmatmul.mubr.f32.gmra.mxu0 %v835
      %v2196 = vpop.f32.mrf.mxu0
      %v2197 = vadd.f32 0.0, %v2196
      %v2198 = vpop.f32.mrf.mxu0
      %2199 = vmatprep.mubr.f32.mxu0 0.0
      %2200 = vmatmul.mubr.f32.gmra.mxu0 %v838
      %v2201 = vpop.f32.mrf.mxu0
      %v2202 = vadd.f32 0.0, %v2201
      %v2203 = vpop.f32.mrf.mxu0
      %2204 = vmatprep.mubr.f32.mxu0 0.0
      %2205 = vmatmul.mubr.f32.gmra.mxu0 %v841
      %v2206 = vpop.f32.mrf.mxu0
      %v2207 = vadd.f32 0.0, %v2206
      %v2208 = vpop.f32.mrf.mxu0
      %2209 = vmatprep.mubr.f32.mxu0 0.0
      %2210 = vmatmul.mubr.f32.gmra.mxu0 %v844
      %v2211 = vpop.f32.mrf.mxu0
      %v2212 = vadd.f32 0.0, %v2211
      %v2213 = vpop.f32.mrf.mxu0
      %2214 = vmatprep.mubr.f32.mxu0 0.0
      %2215 = vmatmul.mubr.f32.gmra.mxu0 %v847
      %v2216 = vpop.f32.mrf.mxu0
      %v2217 = vadd.f32 0.0, %v2216
      %v2218 = vpop.f32.mrf.mxu0
      %2219 = vmatprep.mubr.f32.mxu0 0.0
      %2220 = vmatmul.mubr.f32.gmra.mxu0 %v850
      %v2221 = vpop.f32.mrf.mxu0
      %v2222 = vadd.f32 0.0, %v2221
      %v2223 = vpop.f32.mrf.mxu0
      %2224 = vmatprep.mubr.f32.mxu0 0.0
      %2225 = vmatmul.mubr.f32.gmra.mxu0 %v853
      %v2226 = vpop.f32.mrf.mxu0
      %v2227 = vadd.f32 0.0, %v2226
      %v2228 = vpop.f32.mrf.mxu0
      %2229 = vmatprep.mubr.f32.mxu0 0.0
      %2230 = vmatmul.mubr.f32.gmra.mxu0 %v856
      %v2231 = vpop.f32.mrf.mxu0
      %v2232 = vadd.f32 0.0, %v2231
      %v2233 = vpop.f32.mrf.mxu0
      %2234 = vmatprep.mubr.f32.mxu0 0.0
      %2235 = vmatmul.mubr.f32.gmra.mxu0 %v859
      %v2236 = vpop.f32.mrf.mxu0
      %v2237 = vadd.f32 0.0, %v2236
      %v2238 = vpop.f32.mrf.mxu0
      %2239 = vmatprep.mubr.f32.mxu0 0.0
      %2240 = vmatmul.mubr.f32.gmra.mxu0 %v862
      %v2241 = vpop.f32.mrf.mxu0
      %v2242 = vadd.f32 0.0, %v2241
      %v2243 = vpop.f32.mrf.mxu0
      %2244 = vmatprep.mubr.f32.mxu0 0.0
      %2245 = vmatmul.mubr.f32.gmra.mxu0 %v865
      %v2246 = vpop.f32.mrf.mxu0
      %v2247 = vadd.f32 0.0, %v2246
      %v2248 = vpop.f32.mrf.mxu0
      %2249 = vmatprep.mubr.f32.mxu0 0.0
      %2250 = vmatmul.mubr.f32.gmra.mxu0 %v868
      %v2251 = vpop.f32.mrf.mxu0
      %v2252 = vadd.f32 0.0, %v2251
      %v2253 = vpop.f32.mrf.mxu0
      %2254 = vmatprep.mubr.f32.mxu0 0.0
      %2255 = vmatmul.mubr.f32.gmra.mxu0 %v871
      %v2256 = vpop.f32.mrf.mxu0
      %v2257 = vadd.f32 0.0, %v2256
      %v2258 = vpop.f32.mrf.mxu0
      %2259 = vmatprep.mubr.f32.mxu0 0.0
      %2260 = vmatmul.mubr.f32.gmra.mxu0 %v874
      %v2261 = vpop.f32.mrf.mxu0
      %v2262 = vadd.f32 0.0, %v2261
      %v2263 = vpop.f32.mrf.mxu0
      %2264 = vmatprep.mubr.f32.mxu0 0.0
      %2265 = vmatmul.mubr.f32.gmra.mxu0 %v877
      %v2266 = vpop.f32.mrf.mxu0
      %v2267 = vadd.f32 0.0, %v2266
      %v2268 = vpop.f32.mrf.mxu0
      %2269 = vmatprep.mubr.f32.mxu0 0.0
      %2270 = vmatmul.mubr.f32.gmra.mxu0 %v880
      %v2271 = vpop.f32.mrf.mxu0
      %v2272 = vadd.f32 0.0, %v2271
      %v2273 = vpop.f32.mrf.mxu0
      %2274 = vmatprep.mubr.f32.mxu0 0.0
      %2275 = vmatmul.mubr.f32.gmra.mxu0 %v883
      %v2276 = vpop.f32.mrf.mxu0
      %v2277 = vadd.f32 0.0, %v2276
      %v2278 = vpop.f32.mrf.mxu0
      %2279 = vmatprep.mubr.f32.mxu0 0.0
      %2280 = vmatmul.mubr.f32.gmra.mxu0 %v886
      %v2281 = vpop.f32.mrf.mxu0
      %v2282 = vadd.f32 0.0, %v2281
      %v2283 = vpop.f32.mrf.mxu0
      %2284 = vmatprep.mubr.f32.mxu0 0.0
      %2285 = vmatmul.mubr.f32.gmra.mxu0 %v889
      %v2286 = vpop.f32.mrf.mxu0
      %v2287 = vadd.f32 0.0, %v2286
      %v2288 = vpop.f32.mrf.mxu0
      %2289 = vmatprep.mubr.f32.mxu0 0.0
      %2290 = vmatmul.mubr.f32.gmra.mxu0 %v892
      %v2291 = vpop.f32.mrf.mxu0
      %v2292 = vadd.f32 0.0, %v2291
      %v2293 = vpop.f32.mrf.mxu0
      %2294 = vmatprep.mubr.f32.mxu0 0.0
      %2295 = vmatmul.mubr.f32.gmra.mxu0 %v895
      %v2296 = vpop.f32.mrf.mxu0
      %v2297 = vadd.f32 0.0, %v2296
      %v2298 = vpop.f32.mrf.mxu0
      %2299 = vmatprep.mubr.f32.mxu0 0.0
      %2300 = vmatmul.mubr.f32.gmra.mxu0 %v898
      %v2301 = vpop.f32.mrf.mxu0
      %v2302 = vadd.f32 0.0, %v2301
      %v2303 = vpop.f32.mrf.mxu0
      %2304 = vmatprep.mubr.f32.mxu0 0.0
      %2305 = vmatmul.mubr.f32.gmra.mxu0 %v901
      %v2306 = vpop.f32.mrf.mxu0
      %v2307 = vadd.f32 0.0, %v2306
      %v2308 = vpop.f32.mrf.mxu0
      %2309 = vmatprep.mubr.f32.mxu0 0.0
      %2310 = vmatmul.mubr.f32.gmra.mxu0 %v904
      %v2311 = vpop.f32.mrf.mxu0
      %v2312 = vadd.f32 0.0, %v2311
      %v2313 = vpop.f32.mrf.mxu0
      %2314 = vmatprep.mubr.f32.mxu0 0.0
      %2315 = vmatmul.mubr.f32.gmra.mxu0 %v907
      %v2316 = vpop.f32.mrf.mxu0
      %v2317 = vadd.f32 0.0, %v2316
      %v2318 = vpop.f32.mrf.mxu0
      %2319 = vmatprep.mubr.f32.mxu0 0.0
      %2320 = vmatmul.mubr.f32.gmra.mxu0 %v910
      %v2321 = vpop.f32.mrf.mxu0
      %v2322 = vadd.f32 0.0, %v2321
      %v2323 = vpop.f32.mrf.mxu0
      %2324 = vmatprep.mubr.f32.mxu0 0.0
      %2325 = vmatmul.mubr.f32.gmra.mxu0 %v913
      %v2326 = vpop.f32.mrf.mxu0
      %v2327 = vadd.f32 0.0, %v2326
      %v2328 = vpop.f32.mrf.mxu0
      %2329 = vmatprep.mubr.f32.mxu0 0.0
      %2330 = vmatmul.mubr.f32.gmra.mxu0 %v916
      %v2331 = vpop.f32.mrf.mxu0
      %v2332 = vadd.f32 0.0, %v2331
      %v2333 = vpop.f32.mrf.mxu0
      %2334 = vmatprep.mubr.f32.mxu0 0.0
      %2335 = vmatmul.mubr.f32.gmra.mxu0 %v919
      %v2336 = vpop.f32.mrf.mxu0
      %v2337 = vadd.f32 0.0, %v2336
      %v2338 = vpop.f32.mrf.mxu0
      %2339 = vmatprep.mubr.f32.mxu0 0.0
      %2340 = vmatmul.mubr.f32.gmra.mxu0 %v922
      %v2341 = vpop.f32.mrf.mxu0
      %v2342 = vadd.f32 0.0, %v2341
      %v2343 = vpop.f32.mrf.mxu0
      %2344 = vmatprep.mubr.f32.mxu0 0.0
      %2345 = vmatmul.mubr.f32.gmra.mxu0 %v925
      %v2346 = vpop.f32.mrf.mxu0
      %v2347 = vadd.f32 0.0, %v2346
      %v2348 = vpop.f32.mrf.mxu0
      %2349 = vmatprep.mubr.f32.mxu0 0.0
      %2350 = vmatmul.mubr.f32.gmra.mxu0 %v928
      %v2351 = vpop.f32.mrf.mxu0
      %v2352 = vadd.f32 0.0, %v2351
      %v2353 = vpop.f32.mrf.mxu0
      %2354 = vmatprep.mubr.f32.mxu0 0.0
      %2355 = vmatmul.mubr.f32.gmra.mxu0 %v931
      %v2356 = vpop.f32.mrf.mxu0
      %v2357 = vadd.f32 0.0, %v2356
      %v2358 = vpop.f32.mrf.mxu0
      %2359 = vmatprep.mubr.f32.mxu0 0.0
      %2360 = vmatmul.mubr.f32.gmra.mxu0 %v934
      %v2361 = vpop.f32.mrf.mxu0
      %v2362 = vadd.f32 0.0, %v2361
      %v2363 = vpop.f32.mrf.mxu0
      %2364 = vmatprep.mubr.f32.mxu0 0.0
      %2365 = vmatmul.mubr.f32.gmra.mxu0 %v937
      %v2366 = vpop.f32.mrf.mxu0
      %v2367 = vadd.f32 0.0, %v2366
      %v2368 = vpop.f32.mrf.mxu0
      %2369 = vmatprep.mubr.f32.mxu0 0.0
      %2370 = vmatmul.mubr.f32.gmra.mxu0 %v940
      %v2371 = vpop.f32.mrf.mxu0
      %v2372 = vadd.f32 0.0, %v2371
      %v2373 = vpop.f32.mrf.mxu0
      %2374 = vmatprep.mubr.f32.mxu0 0.0
      %2375 = vmatmul.mubr.f32.gmra.mxu0 %v943
      %v2376 = vpop.f32.mrf.mxu0
      %v2377 = vadd.f32 0.0, %v2376
      %v2378 = vpop.f32.mrf.mxu0
      %2379 = vmatprep.mubr.f32.mxu0 0.0
      %2380 = vmatmul.mubr.f32.gmra.mxu0 %v946
      %v2381 = vpop.f32.mrf.mxu0
      %v2382 = vadd.f32 0.0, %v2381
      %v2383 = vpop.f32.mrf.mxu0
      %2384 = vmatprep.mubr.f32.mxu0 0.0
      %2385 = vmatmul.mubr.f32.gmra.mxu0 %v949
      %v2386 = vpop.f32.mrf.mxu0
      %v2387 = vadd.f32 0.0, %v2386
      %v2388 = vpop.f32.mrf.mxu0
      %2389 = vmatprep.mubr.f32.mxu0 0.0
      %2390 = vmatmul.mubr.f32.gmra.mxu0 %v952
      %v2391 = vpop.f32.mrf.mxu0
      %v2392 = vadd.f32 0.0, %v2391
      %v2393 = vpop.f32.mrf.mxu0
      %2394 = vmatprep.mubr.f32.mxu0 0.0
      %2395 = vmatmul.mubr.f32.gmra.mxu0 %v955
      %v2396 = vpop.f32.mrf.mxu0
      %v2397 = vadd.f32 0.0, %v2396
      %v2398 = vpop.f32.mrf.mxu0
      %2399 = vmatprep.mubr.f32.mxu0 0.0
      %2400 = vmatmul.mubr.f32.gmra.mxu0 %v958
      %v2401 = vpop.f32.mrf.mxu0
      %v2402 = vadd.f32 0.0, %v2401
      %v2403 = vpop.f32.mrf.mxu0
      %2404 = vmatprep.mubr.f32.mxu0 0.0
      %2405 = vmatmul.mubr.f32.gmra.mxu0 %v961
      %v2406 = vpop.f32.mrf.mxu0
      %v2407 = vadd.f32 0.0, %v2406
      %v2408 = vpop.f32.mrf.mxu0
      %2409 = vmatprep.mubr.f32.mxu0 0.0
      %2410 = vmatmul.mubr.f32.gmra.mxu0 %v964
      %v2411 = vpop.f32.mrf.mxu0
      %v2412 = vadd.f32 0.0, %v2411
      %v2413 = vpop.f32.mrf.mxu0
      %2414 = vmatprep.mubr.f32.mxu0 0.0
      %2415 = vmatmul.mubr.f32.gmra.mxu0 %v967
      %v2416 = vpop.f32.mrf.mxu0
      %v2417 = vadd.f32 0.0, %v2416
      %v2418 = vpop.f32.mrf.mxu0
      %2419 = vmatprep.mubr.f32.mxu0 0.0
      %2420 = vmatmul.mubr.f32.gmra.mxu0 %v970
      %v2421 = vpop.f32.mrf.mxu0
      %v2422 = vadd.f32 0.0, %v2421
      %v2423 = vpop.f32.mrf.mxu0
      %2424 = vmatprep.mubr.f32.mxu0 0.0
      %2425 = vmatmul.mubr.f32.gmra.mxu0 %v973
      %v2426 = vpop.f32.mrf.mxu0
      %v2427 = vadd.f32 0.0, %v2426
      %v2428 = vpop.f32.mrf.mxu0
      %2429 = vmatprep.mubr.f32.mxu0 0.0
      %2430 = vmatmul.mubr.f32.gmra.mxu0 %v976
      %v2431 = vpop.f32.mrf.mxu0
      %v2432 = vadd.f32 0.0, %v2431
      %v2433 = vpop.f32.mrf.mxu0
      %2434 = vmatprep.mubr.f32.mxu0 0.0
      %2435 = vmatmul.mubr.f32.gmra.mxu0 %v979
      %v2436 = vpop.f32.mrf.mxu0
      %v2437 = vadd.f32 0.0, %v2436
      %v2438 = vpop.f32.mrf.mxu0
      %2439 = vmatprep.mubr.f32.mxu0 0.0
      %2440 = vmatmul.mubr.f32.gmra.mxu0 %v982
      %v2441 = vpop.f32.mrf.mxu0
      %v2442 = vadd.f32 0.0, %v2441
      %v2443 = vpop.f32.mrf.mxu0
      %2444 = vmatprep.mubr.f32.mxu0 0.0
      %2445 = vmatmul.mubr.f32.gmra.mxu0 %v985
      %v2446 = vpop.f32.mrf.mxu0
      %v2447 = vadd.f32 0.0, %v2446
      %v2448 = vpop.f32.mrf.mxu0
      %2449 = vmatprep.mubr.f32.mxu0 0.0
      %2450 = vmatmul.mubr.f32.gmra.mxu0 %v988
      %v2451 = vpop.f32.mrf.mxu0
      %v2452 = vadd.f32 0.0, %v2451
      %v2453 = vpop.f32.mrf.mxu0
      %2454 = vmatprep.mubr.f32.mxu0 0.0
      %2455 = vmatmul.mubr.f32.gmra.mxu0 %v991
      %v2456 = vpop.f32.mrf.mxu0
      %v2457 = vadd.f32 0.0, %v2456
      %v2458 = vpop.f32.mrf.mxu0
      %2459 = vmatprep.mubr.f32.mxu0 0.0
      %2460 = vmatmul.mubr.f32.gmra.mxu0 %v994
      %v2461 = vpop.f32.mrf.mxu0
      %v2462 = vadd.f32 0.0, %v2461
      %v2463 = vpop.f32.mrf.mxu0
      %2464 = vmatprep.mubr.f32.mxu0 0.0
      %2465 = vmatmul.mubr.f32.gmra.mxu0 %v997
      %v2466 = vpop.f32.mrf.mxu0
      %v2467 = vadd.f32 0.0, %v2466
      %v2468 = vpop.f32.mrf.mxu0
      %2469 = vmatprep.mubr.f32.mxu0 0.0
      %2470 = vmatmul.mubr.f32.gmra.mxu0 %v1000
      %v2471 = vpop.f32.mrf.mxu0
      %v2472 = vadd.f32 0.0, %v2471
      %v2473 = vpop.f32.mrf.mxu0
      %2474 = vmatprep.mubr.f32.mxu0 0.0
      %2475 = vmatmul.mubr.f32.gmra.mxu0 %v1003
      %v2476 = vpop.f32.mrf.mxu0
      %v2477 = vadd.f32 0.0, %v2476
      %v2478 = vpop.f32.mrf.mxu0
      %2479 = vmatprep.mubr.f32.mxu0 0.0
      %2480 = vmatmul.mubr.f32.gmra.mxu0 %v1006
      %v2481 = vpop.f32.mrf.mxu0
      %v2482 = vadd.f32 0.0, %v2481
      %v2483 = vpop.f32.mrf.mxu0
      %2484 = vmatprep.mubr.f32.mxu0 0.0
      %2485 = vmatmul.mubr.f32.gmra.mxu0 %v1009
      %v2486 = vpop.f32.mrf.mxu0
      %v2487 = vadd.f32 0.0, %v2486
      %v2488 = vpop.f32.mrf.mxu0
      %2489 = vmatprep.mubr.f32.mxu0 0.0
      %2490 = vmatmul.mubr.f32.gmra.mxu0 %v1012
      %v2491 = vpop.f32.mrf.mxu0
      %v2492 = vadd.f32 0.0, %v2491
      %v2493 = vpop.f32.mrf.mxu0
      %2494 = vmatprep.mubr.f32.mxu0 0.0
      %2495 = vmatmul.mubr.f32.gmra.mxu0 %v1015
      %v2496 = vpop.f32.mrf.mxu0
      %v2497 = vadd.f32 0.0, %v2496
      %v2498 = vpop.f32.mrf.mxu0
      %2499 = vmatprep.mubr.f32.mxu0 0.0
      %2500 = vmatmul.mubr.f32.gmra.mxu0 %v1018
      %v2501 = vpop.f32.mrf.mxu0
      %v2502 = vadd.f32 0.0, %v2501
      %v2503 = vpop.f32.mrf.mxu0
      %2504 = vmatprep.mubr.f32.mxu0 0.0
      %2505 = vmatmul.mubr.f32.gmra.mxu0 %v1021
      %v2506 = vpop.f32.mrf.mxu0
      %v2507 = vadd.f32 0.0, %v2506
      %v2508 = vpop.f32.mrf.mxu0
      %2509 = vmatprep.mubr.f32.mxu0 0.0
      %2510 = vmatmul.mubr.f32.gmra.mxu0 %v1024
      %v2511 = vpop.f32.mrf.mxu0
      %v2512 = vadd.f32 0.0, %v2511
      %v2513 = vpop.f32.mrf.mxu0
      %2514 = vmatprep.mubr.f32.mxu0 0.0
      %2515 = vmatmul.mubr.f32.gmra.mxu0 %v1027
      %v2516 = vpop.f32.mrf.mxu0
      %v2517 = vadd.f32 0.0, %v2516
      %v2518 = vpop.f32.mrf.mxu0
      %2519 = vmatprep.mubr.f32.mxu0 0.0
      %2520 = vmatmul.mubr.f32.gmra.mxu0 %v1030
      %v2521 = vpop.f32.mrf.mxu0
      %v2522 = vadd.f32 0.0, %v2521
      %v2523 = vpop.f32.mrf.mxu0
      %2524 = vmatprep.mubr.f32.mxu0 0.0
      %2525 = vmatmul.mubr.f32.gmra.mxu0 %v1033
      %v2526 = vpop.f32.mrf.mxu0
      %v2527 = vadd.f32 0.0, %v2526
      %v2528 = vpop.f32.mrf.mxu0
      %2529 = vmatprep.mubr.f32.mxu0 0.0
      %2530 = vmatmul.mubr.f32.gmra.mxu0 %v1036
      %v2531 = vpop.f32.mrf.mxu0
      %v2532 = vadd.f32 0.0, %v2531
      %v2533 = vpop.f32.mrf.mxu0
      %2534 = vmatprep.mubr.f32.mxu0 0.0
      %2535 = vmatmul.mubr.f32.gmra.mxu0 %v1039
      %v2536 = vpop.f32.mrf.mxu0
      %v2537 = vadd.f32 0.0, %v2536
      %v2538 = vpop.f32.mrf.mxu0
      %2539 = vmatprep.mubr.f32.mxu0 0.0
      %2540 = vmatmul.mubr.f32.gmra.mxu0 %v1042
      %v2541 = vpop.f32.mrf.mxu0
      %v2542 = vadd.f32 0.0, %v2541
      %v2543 = vpop.f32.mrf.mxu0
      %2544 = vmatprep.mubr.f32.mxu0 0.0
      %2545 = vmatmul.mubr.f32.gmra.mxu0 %v1045
      %v2546 = vpop.f32.mrf.mxu0
      %v2547 = vadd.f32 0.0, %v2546
      %v2548 = vpop.f32.mrf.mxu0
      %2549 = vmatprep.mubr.f32.mxu0 0.0
      %2550 = vmatmul.mubr.f32.gmra.mxu0 %v1048
      %v2551 = vpop.f32.mrf.mxu0
      %v2552 = vadd.f32 0.0, %v2551
      %v2553 = vpop.f32.mrf.mxu0
      %2554 = vmatprep.mubr.f32.mxu0 0.0
      %2555 = vmatmul.mubr.f32.gmra.mxu0 %v1051
      %v2556 = vpop.f32.mrf.mxu0
      %v2557 = vadd.f32 0.0, %v2556
      %v2558 = vpop.f32.mrf.mxu0
      %2559 = vmatprep.mubr.f32.mxu0 0.0
      %2560 = vmatmul.mubr.f32.gmra.mxu0 %v1054
      %v2561 = vpop.f32.mrf.mxu0
      %v2562 = vadd.f32 0.0, %v2561
      %v2563 = vpop.f32.mrf.mxu0
      %2564 = vmatprep.mubr.f32.mxu0 0.0
      %2565 = vmatmul.mubr.f32.gmra.mxu0 %v1057
      %v2566 = vpop.f32.mrf.mxu0
      %v2567 = vadd.f32 0.0, %v2566
      %v2568 = vpop.f32.mrf.mxu0
      %2569 = vmatprep.mubr.f32.mxu0 0.0
      %2570 = vmatmul.mubr.f32.gmra.mxu0 %v1060
      %v2571 = vpop.f32.mrf.mxu0
      %v2572 = vadd.f32 0.0, %v2571
      %v2573 = vpop.f32.mrf.mxu0
      %2574 = vmatprep.mubr.f32.mxu0 0.0
      %2575 = vmatmul.mubr.f32.gmra.mxu0 %v1063
      %v2576 = vpop.f32.mrf.mxu0
      %v2577 = vadd.f32 0.0, %v2576
      %v2578 = vpop.f32.mrf.mxu0
      %2579 = vmatprep.mubr.f32.mxu0 0.0
      %2580 = vmatmul.mubr.f32.gmra.mxu0 %v1066
      %v2581 = vpop.f32.mrf.mxu0
      %v2582 = vadd.f32 0.0, %v2581
      %v2583 = vpop.f32.mrf.mxu0
      %2584 = vmatprep.mubr.f32.mxu0 0.0
      %2585 = vmatmul.mubr.f32.gmra.mxu0 %v1069
      %v2586 = vpop.f32.mrf.mxu0
      %v2587 = vadd.f32 0.0, %v2586
      %v2588 = vpop.f32.mrf.mxu0
      %2589 = vmatprep.mubr.f32.mxu0 0.0
      %2590 = vmatmul.mubr.f32.gmra.mxu0 %v1072
      %v2591 = vpop.f32.mrf.mxu0
      %v2592 = vadd.f32 0.0, %v2591
      %v2593 = vpop.f32.mrf.mxu0
      %2594 = vmatprep.mubr.f32.mxu0 0.0
      %2595 = vmatmul.mubr.f32.gmra.mxu0 %v1075
      %v2596 = vpop.f32.mrf.mxu0
      %v2597 = vadd.f32 0.0, %v2596
      %v2598 = vpop.f32.mrf.mxu0
      %2599 = vmatprep.mubr.f32.mxu0 0.0
      %2600 = vmatmul.mubr.f32.gmra.mxu0 %v1078
      %v2601 = vpop.f32.mrf.mxu0
      %v2602 = vadd.f32 0.0, %v2601
      %v2603 = vpop.f32.mrf.mxu0
      %2604 = vmatprep.mubr.f32.mxu0 0.0
      %2605 = vmatmul.mubr.f32.gmra.mxu0 %v1081
      %v2606 = vpop.f32.mrf.mxu0
      %v2607 = vadd.f32 0.0, %v2606
      %v2608 = vpop.f32.mrf.mxu0
      %2609 = vmatprep.mubr.f32.mxu0 0.0
      %2610 = vmatmul.mubr.f32.gmra.mxu0 %v1084
      %v2611 = vpop.f32.mrf.mxu0
      %v2612 = vadd.f32 0.0, %v2611
      %v2613 = vpop.f32.mrf.mxu0
      %2614 = vmatprep.mubr.f32.mxu0 0.0
      %2615 = vmatmul.mubr.f32.gmra.mxu0 %v1087
      %v2616 = vpop.f32.mrf.mxu0
      %v2617 = vadd.f32 0.0, %v2616
      %v2618 = vpop.f32.mrf.mxu0
      %2619 = vmatprep.mubr.f32.mxu0 0.0
      %2620 = vmatmul.mubr.f32.gmra.mxu0 %v1090
      %v2621 = vpop.f32.mrf.mxu0
      %v2622 = vadd.f32 0.0, %v2621
      %v2623 = vpop.f32.mrf.mxu0
      %2624 = vmatprep.mubr.f32.mxu0 0.0
      %2625 = vmatmul.mubr.f32.gmra.mxu0 %v1093
      %v2626 = vpop.f32.mrf.mxu0
      %v2627 = vadd.f32 0.0, %v2626
      %v2628 = vpop.f32.mrf.mxu0
      %2629 = vmatprep.mubr.f32.mxu0 0.0
      %2630 = vmatmul.mubr.f32.gmra.mxu0 %v1096
      %v2631 = vpop.f32.mrf.mxu0
      %v2632 = vadd.f32 0.0, %v2631
      %v2633 = vpop.f32.mrf.mxu0
      %2634 = vmatprep.mubr.f32.mxu0 0.0
      %2635 = vmatmul.mubr.f32.gmra.mxu0 %v1099
      %v2636 = vpop.f32.mrf.mxu0
      %v2637 = vadd.f32 0.0, %v2636
      %v2638 = vpop.f32.mrf.mxu0
      %2639 = vmatprep.mubr.f32.mxu0 0.0
      %2640 = vmatmul.mubr.f32.gmra.mxu0 %v1102
      %v2641 = vpop.f32.mrf.mxu0
      %v2642 = vadd.f32 0.0, %v2641
      %v2643 = vpop.f32.mrf.mxu0
      %2644 = vmatprep.mubr.f32.mxu0 0.0
      %2645 = vmatmul.mubr.f32.gmra.mxu0 %v1105
      %v2646 = vpop.f32.mrf.mxu0
      %v2647 = vadd.f32 0.0, %v2646
      %v2648 = vpop.f32.mrf.mxu0
      %2649 = vmatprep.mubr.f32.mxu0 0.0
      %2650 = vmatmul.mubr.f32.gmra.mxu0 %v1108
      %v2651 = vpop.f32.mrf.mxu0
      %v2652 = vadd.f32 0.0, %v2651
      %v2653 = vpop.f32.mrf.mxu0
      %2654 = vmatprep.mubr.f32.mxu0 0.0
      %2655 = vmatmul.mubr.f32.gmra.mxu0 %v1111
      %v2656 = vpop.f32.mrf.mxu0
      %v2657 = vadd.f32 0.0, %v2656
      %v2658 = vpop.f32.mrf.mxu0
      %2659 = vmatprep.mubr.f32.mxu0 0.0
      %2660 = vmatmul.mubr.f32.gmra.mxu0 %v1114
      %v2661 = vpop.f32.mrf.mxu0
      %v2662 = vadd.f32 0.0, %v2661
      %v2663 = vpop.f32.mrf.mxu0
      %2664 = vmatprep.mubr.f32.mxu0 0.0
      %2665 = vmatmul.mubr.f32.gmra.mxu0 %v1117
      %v2666 = vpop.f32.mrf.mxu0
      %v2667 = vadd.f32 0.0, %v2666
      %v2668 = vpop.f32.mrf.mxu0
      %2669 = vmatprep.mubr.f32.mxu0 0.0
      %2670 = vmatmul.mubr.f32.gmra.mxu0 %v1120
      %v2671 = vpop.f32.mrf.mxu0
      %v2672 = vadd.f32 0.0, %v2671
      %v2673 = vpop.f32.mrf.mxu0
      %2674 = vmatprep.mubr.f32.mxu0 0.0
      %2675 = vmatmul.mubr.f32.gmra.mxu0 %v1123
      %v2676 = vpop.f32.mrf.mxu0
      %v2677 = vadd.f32 0.0, %v2676
      %v2678 = vpop.f32.mrf.mxu0
      %2679 = vmatprep.mubr.f32.mxu0 0.0
      %2680 = vmatmul.mubr.f32.gmra.mxu0 %v1126
      %v2681 = vpop.f32.mrf.mxu0
      %v2682 = vadd.f32 0.0, %v2681
      %v2683 = vpop.f32.mrf.mxu0
      %2684 = vmatprep.mubr.f32.mxu0 0.0
      %2685 = vmatmul.mubr.f32.gmra.mxu0 %v1129
      %v2686 = vpop.f32.mrf.mxu0
      %v2687 = vadd.f32 0.0, %v2686
      %v2688 = vpop.f32.mrf.mxu0
      %2689 = vmatprep.mubr.f32.mxu0 0.0
      %2690 = vmatmul.mubr.f32.gmra.mxu0 %v1132
      %v2691 = vpop.f32.mrf.mxu0
      %v2692 = vadd.f32 0.0, %v2691
      %v2693 = vpop.f32.mrf.mxu0
      %2694 = vmatprep.mubr.f32.mxu0 0.0
      %2695 = vmatmul.mubr.f32.gmra.mxu0 %v1135
      %v2696 = vpop.f32.mrf.mxu0
      %v2697 = vadd.f32 0.0, %v2696
      %v2698 = vpop.f32.mrf.mxu0
      %2699 = vmatprep.mubr.f32.mxu0 0.0
      %2700 = vmatmul.mubr.f32.gmra.mxu0 %v1138
      %v2701 = vpop.f32.mrf.mxu0
      %v2702 = vadd.f32 0.0, %v2701
      %v2703 = vpop.f32.mrf.mxu0
      %2704 = vmatprep.mubr.f32.mxu0 0.0
      %2705 = vmatmul.mubr.f32.gmra.mxu0 %v1141
      %v2706 = vpop.f32.mrf.mxu0
      %v2707 = vadd.f32 0.0, %v2706
      %v2708 = vpop.f32.mrf.mxu0
      %2709 = vmatprep.mubr.f32.mxu0 0.0
      %2710 = vmatmul.mubr.f32.gmra.mxu0 %v1144
      %v2711 = vpop.f32.mrf.mxu0
      %v2712 = vadd.f32 0.0, %v2711
      %v2713 = vpop.f32.mrf.mxu0
      %2714 = vmatprep.mubr.f32.mxu0 0.0
      %2715 = vmatmul.mubr.f32.gmra.mxu0 %v1147
      %v2716 = vpop.f32.mrf.mxu0
      %v2717 = vadd.f32 0.0, %v2716
      %v2718 = vpop.f32.mrf.mxu0
      %2719 = vmatprep.mubr.f32.mxu0 0.0
      %2720 = vmatmul.mubr.f32.gmra.mxu0 %v1150
      %v2721 = vpop.f32.mrf.mxu0
      %v2722 = vadd.f32 0.0, %v2721
      %v2723 = vpop.f32.mrf.mxu0
      %2724 = vmatprep.mubr.f32.mxu0 0.0
      %2725 = vmatmul.mubr.f32.gmra.mxu0 %v1153
      %v2726 = vpop.f32.mrf.mxu0
      %v2727 = vadd.f32 0.0, %v2726
      %v2728 = vpop.f32.mrf.mxu0
      %2729 = vmatprep.mubr.f32.mxu0 0.0
      %2730 = vmatmul.mubr.f32.gmra.mxu0 %v1156
      %v2731 = vpop.f32.mrf.mxu0
      %v2732 = vadd.f32 0.0, %v2731
      %v2733 = vpop.f32.mrf.mxu0
      %2734 = vmatprep.mubr.f32.mxu0 0.0
      %2735 = vmatmul.mubr.f32.gmra.mxu0 %v1159
      %v2736 = vpop.f32.mrf.mxu0
      %v2737 = vadd.f32 0.0, %v2736
      %v2738 = vpop.f32.mrf.mxu0
      %2739 = vmatprep.mubr.f32.mxu0 0.0
      %2740 = vmatmul.mubr.f32.gmra.mxu0 %v1162
      %v2741 = vpop.f32.mrf.mxu0
      %v2742 = vadd.f32 0.0, %v2741
      %v2743 = vpop.f32.mrf.mxu0
      %2744 = vmatprep.mubr.f32.mxu0 0.0
      %2745 = vmatmul.mubr.f32.gmra.mxu0 %v1165
      %v2746 = vpop.f32.mrf.mxu0
      %v2747 = vadd.f32 0.0, %v2746
      %v2748 = vpop.f32.mrf.mxu0
      %2749 = vmatprep.mubr.f32.mxu0 0.0
      %2750 = vmatmul.mubr.f32.gmra.mxu0 %v1168
      %v2751 = vpop.f32.mrf.mxu0
      %v2752 = vadd.f32 0.0, %v2751
      %v2753 = vpop.f32.mrf.mxu0
      %2754 = vmatprep.mubr.f32.mxu0 0.0
      %2755 = vmatmul.mubr.f32.gmra.mxu0 %v1171
      %v2756 = vpop.f32.mrf.mxu0
      %v2757 = vadd.f32 0.0, %v2756
      %v2758 = vpop.f32.mrf.mxu0
      %2759 = vmatprep.mubr.f32.mxu0 0.0
      %2760 = vmatmul.mubr.f32.gmra.mxu0 %v1174
      %v2761 = vpop.f32.mrf.mxu0
      %v2762 = vadd.f32 0.0, %v2761
      %v2763 = vpop.f32.mrf.mxu0
      %2764 = vmatprep.mubr.f32.mxu0 0.0
      %2765 = vmatmul.mubr.f32.gmra.mxu0 %v1177
      %v2766 = vpop.f32.mrf.mxu0
      %v2767 = vadd.f32 0.0, %v2766
      %v2768 = vpop.f32.mrf.mxu0
      %2769 = vmatprep.mubr.f32.mxu0 0.0
      %2770 = vmatmul.mubr.f32.gmra.mxu0 %v1180
      %v2771 = vpop.f32.mrf.mxu0
      %v2772 = vadd.f32 0.0, %v2771
      %v2773 = vpop.f32.mrf.mxu0
      %2774 = vmatprep.mubr.f32.mxu0 0.0
      %2775 = vmatmul.mubr.f32.gmra.mxu0 %v1183
      %v2776 = vpop.f32.mrf.mxu0
      %v2777 = vadd.f32 0.0, %v2776
      %v2778 = vpop.f32.mrf.mxu0
      %2779 = vmatprep.mubr.f32.mxu0 0.0
      %2780 = vmatmul.mubr.f32.gmra.mxu0 %v1186
      %v2781 = vpop.f32.mrf.mxu0
      %v2782 = vadd.f32 0.0, %v2781
      %v2783 = vpop.f32.mrf.mxu0
      %2784 = vmatprep.mubr.f32.mxu0 0.0
      %2785 = vmatmul.mubr.f32.gmra.mxu0 %v1189
      %v2786 = vpop.f32.mrf.mxu0
      %v2787 = vadd.f32 0.0, %v2786
      %v2788 = vpop.f32.mrf.mxu0
      %2789 = vmatprep.mubr.f32.mxu0 0.0
      %2790 = vmatmul.mubr.f32.gmra.mxu0 %v1192
      %v2791 = vpop.f32.mrf.mxu0
      %v2792 = vadd.f32 0.0, %v2791
      %v2793 = vpop.f32.mrf.mxu0
      %2794 = vmatprep.mubr.f32.mxu0 0.0
      %2795 = vmatmul.mubr.f32.gmra.mxu0 %v1195
      %v2796 = vpop.f32.mrf.mxu0
      %v2797 = vadd.f32 0.0, %v2796
      %v2798 = vpop.f32.mrf.mxu0
      %2799 = vmatprep.mubr.f32.mxu0 0.0
      %2800 = vmatmul.mubr.f32.gmra.mxu0 %v1198
      %v2801 = vpop.f32.mrf.mxu0
      %v2802 = vadd.f32 0.0, %v2801
      %v2803 = vpop.f32.mrf.mxu0
      %2804 = vmatprep.mubr.f32.mxu0 0.0
      %2805 = vmatmul.mubr.f32.gmra.mxu0 %v1201
      %v2806 = vpop.f32.mrf.mxu0
      %v2807 = vadd.f32 0.0, %v2806
      %v2808 = vpop.f32.mrf.mxu0
      %2809 = vmatprep.mubr.f32.mxu0 0.0
      %2810 = vmatmul.mubr.f32.gmra.mxu0 %v1204
      %v2811 = vpop.f32.mrf.mxu0
      %v2812 = vadd.f32 0.0, %v2811
      %v2813 = vpop.f32.mrf.mxu0
      %2814 = vmatprep.mubr.f32.mxu0 0.0
      %2815 = vmatmul.mubr.f32.gmra.mxu0 %v1207
      %v2816 = vpop.f32.mrf.mxu0
      %v2817 = vadd.f32 0.0, %v2816
      %v2818 = vpop.f32.mrf.mxu0
      %2819 = vmatprep.mubr.f32.mxu0 0.0
      %2820 = vmatmul.mubr.f32.gmra.mxu0 %v1210
      %v2821 = vpop.f32.mrf.mxu0
      %v2822 = vadd.f32 0.0, %v2821
      %v2823 = vpop.f32.mrf.mxu0
      %2824 = vmatprep.mubr.f32.mxu0 0.0
      %2825 = vmatmul.mubr.f32.gmra.mxu0 %v1213
      %v2826 = vpop.f32.mrf.mxu0
      %v2827 = vadd.f32 0.0, %v2826
      %v2828 = vpop.f32.mrf.mxu0
      %2829 = vmatprep.mubr.f32.mxu0 0.0
      %2830 = vmatmul.mubr.f32.gmra.mxu0 %v1216
      %v2831 = vpop.f32.mrf.mxu0
      %v2832 = vadd.f32 0.0, %v2831
      %v2833 = vpop.f32.mrf.mxu0
      %2834 = vmatprep.mubr.f32.mxu0 0.0
      %2835 = vmatmul.mubr.f32.gmra.mxu0 %v1219
      %v2836 = vpop.f32.mrf.mxu0
      %v2837 = vadd.f32 0.0, %v2836
      %v2838 = vpop.f32.mrf.mxu0
      %2839 = vmatprep.mubr.f32.mxu0 0.0
      %2840 = vmatmul.mubr.f32.gmra.mxu0 %v1222
      %v2841 = vpop.f32.mrf.mxu0
      %v2842 = vadd.f32 0.0, %v2841
      %v2843 = vpop.f32.mrf.mxu0
      %2844 = vmatprep.mubr.f32.mxu0 0.0
      %2845 = vmatmul.mubr.f32.gmra.mxu0 %v1225
      %v2846 = vpop.f32.mrf.mxu0
      %v2847 = vadd.f32 0.0, %v2846
      %v2848 = vpop.f32.mrf.mxu0
      %2849 = vmatprep.mubr.f32.mxu0 0.0
      %2850 = vmatmul.mubr.f32.gmra.mxu0 %v1228
      %v2851 = vpop.f32.mrf.mxu0
      %v2852 = vadd.f32 0.0, %v2851
      %v2853 = vpop.f32.mrf.mxu0
      %2854 = vmatprep.mubr.f32.mxu0 0.0
      %2855 = vmatmul.mubr.f32.gmra.mxu0 %v1231
      %v2856 = vpop.f32.mrf.mxu0
      %v2857 = vadd.f32 0.0, %v2856
      %v2858 = vpop.f32.mrf.mxu0
      %2859 = vmatprep.mubr.f32.mxu0 0.0
      %2860 = vmatmul.mubr.f32.gmra.mxu0 %v1234
      %v2861 = vpop.f32.mrf.mxu0
      %v2862 = vadd.f32 0.0, %v2861
      %v2863 = vpop.f32.mrf.mxu0
      %2864 = vmatprep.mubr.f32.mxu0 0.0
      %2865 = vmatmul.mubr.f32.gmra.mxu0 %v1237
      %v2866 = vpop.f32.mrf.mxu0
      %v2867 = vadd.f32 0.0, %v2866
      %v2868 = vpop.f32.mrf.mxu0
      %2869 = vmatprep.mubr.f32.mxu0 0.0
      %2870 = vmatmul.mubr.f32.gmra.mxu0 %v1240
      %v2871 = vpop.f32.mrf.mxu0
      %v2872 = vadd.f32 0.0, %v2871
      %v2873 = vpop.f32.mrf.mxu0
      %2874 = vmatprep.mubr.f32.mxu0 0.0
      %2875 = vmatmul.mubr.f32.gmra.mxu0 %v1243
      %v2876 = vpop.f32.mrf.mxu0
      %v2877 = vadd.f32 0.0, %v2876
      %v2878 = vpop.f32.mrf.mxu0
      %2879 = vmatprep.mubr.f32.mxu0 0.0
      %2880 = vmatmul.mubr.f32.gmra.mxu0 %v1246
      %v2881 = vpop.f32.mrf.mxu0
      %v2882 = vadd.f32 0.0, %v2881
      %v2883 = vpop.f32.mrf.mxu0
      %2884 = vmatprep.mubr.f32.mxu0 0.0
      %2885 = vmatmul.mubr.f32.gmra.mxu0 %v1249
      %v2886 = vpop.f32.mrf.mxu0
      %v2887 = vadd.f32 0.0, %v2886
      %v2888 = vpop.f32.mrf.mxu0
      %2889 = vmatprep.mubr.f32.mxu0 0.0
      %2890 = vmatmul.mubr.f32.gmra.mxu0 %v1252
      %v2891 = vpop.f32.mrf.mxu0
      %v2892 = vadd.f32 0.0, %v2891
      %v2893 = vpop.f32.mrf.mxu0
      %2894 = vmatprep.mubr.f32.mxu0 0.0
      %2895 = vmatmul.mubr.f32.gmra.mxu0 %v1255
      %v2896 = vpop.f32.mrf.mxu0
      %v2897 = vadd.f32 0.0, %v2896
      %v2898 = vpop.f32.mrf.mxu0
      %2899 = vmatprep.mubr.f32.mxu0 0.0
      %2900 = vmatmul.mubr.f32.gmra.mxu0 %v1258
      %v2901 = vpop.f32.mrf.mxu0
      %v2902 = vadd.f32 0.0, %v2901
      %v2903 = vpop.f32.mrf.mxu0
      %2904 = vmatprep.mubr.f32.mxu0 0.0
      %2905 = vmatmul.mubr.f32.gmra.mxu0 %v1261
      %v2906 = vpop.f32.mrf.mxu0
      %v2907 = vadd.f32 0.0, %v2906
      %v2908 = vpop.f32.mrf.mxu0
      %2909 = vmatprep.mubr.f32.mxu0 0.0
      %2910 = vmatmul.mubr.f32.gmra.mxu0 %v1264
      %v2911 = vpop.f32.mrf.mxu0
      %v2912 = vadd.f32 0.0, %v2911
      %v2913 = vpop.f32.mrf.mxu0
      %2914 = vmatprep.mubr.f32.mxu0 0.0
      %2915 = vmatmul.mubr.f32.gmra.mxu0 %v1267
      %v2916 = vpop.f32.mrf.mxu0
      %v2917 = vadd.f32 0.0, %v2916
      %v2918 = vpop.f32.mrf.mxu0
      %2919 = vmatprep.mubr.f32.mxu0 0.0
      %2920 = vmatmul.mubr.f32.gmra.mxu0 %v1270
      %v2921 = vpop.f32.mrf.mxu0
      %v2922 = vadd.f32 0.0, %v2921
      %v2923 = vpop.f32.mrf.mxu0
      %2924 = vmatprep.mubr.f32.mxu0 0.0
      %2925 = vmatmul.mubr.f32.gmra.mxu0 %v1273
      %v2926 = vpop.f32.mrf.mxu0
      %v2927 = vadd.f32 0.0, %v2926
      %v2928 = vpop.f32.mrf.mxu0
      %2929 = vmatprep.mubr.f32.mxu0 0.0
      %2930 = vmatmul.mubr.f32.gmra.mxu0 %v1276
      %v2931 = vpop.f32.mrf.mxu0
      %v2932 = vadd.f32 0.0, %v2931
      %v2933 = vpop.f32.mrf.mxu0
      %2934 = vmatprep.mubr.f32.mxu0 0.0
      %2935 = vmatmul.mubr.f32.gmra.mxu0 %v1279
      %v2936 = vpop.f32.mrf.mxu0
      %v2937 = vadd.f32 0.0, %v2936
      %v2938 = vpop.f32.mrf.mxu0
      %2939 = vmatprep.mubr.f32.mxu0 0.0
      %2940 = vmatmul.mubr.f32.gmra.mxu0 %v1282
      %v2941 = vpop.f32.mrf.mxu0
      %v2942 = vadd.f32 0.0, %v2941
      %v2943 = vpop.f32.mrf.mxu0
      %2944 = vmatprep.mubr.f32.mxu0 0.0
      %2945 = vmatmul.mubr.f32.gmra.mxu0 %v1285
      %v2946 = vpop.f32.mrf.mxu0
      %v2947 = vadd.f32 0.0, %v2946
      %v2948 = vpop.f32.mrf.mxu0
      %2949 = vmatprep.mubr.f32.mxu0 0.0
      %2950 = vmatmul.mubr.f32.gmra.mxu0 %v1288
      %v2951 = vpop.f32.mrf.mxu0
      %v2952 = vadd.f32 0.0, %v2951
      %v2953 = vpop.f32.mrf.mxu0
      %2954 = vmatprep.mubr.f32.mxu0 0.0
      %2955 = vmatmul.mubr.f32.gmra.mxu0 %v1291
      %v2956 = vpop.f32.mrf.mxu0
      %v2957 = vadd.f32 0.0, %v2956
      %v2958 = vpop.f32.mrf.mxu0
      %2959 = vmatprep.mubr.f32.mxu0 0.0
      %2960 = vmatmul.mubr.f32.gmra.mxu0 %v1294
      %v2961 = vpop.f32.mrf.mxu0
      %v2962 = vadd.f32 0.0, %v2961
      %v2963 = vpop.f32.mrf.mxu0
      %2964 = vmatprep.mubr.f32.mxu0 0.0
      %2965 = vmatmul.mubr.f32.gmra.mxu0 %v1297
      %v2966 = vpop.f32.mrf.mxu0
      %v2967 = vadd.f32 0.0, %v2966
      %v2968 = vpop.f32.mrf.mxu0
      %2969 = vmatprep.mubr.f32.mxu0 0.0
      %2970 = vmatmul.mubr.f32.gmra.mxu0 %v1300
      %v2971 = vpop.f32.mrf.mxu0
      %v2972 = vadd.f32 0.0, %v2971
      %v2973 = vpop.f32.mrf.mxu0
      %2974 = vmatprep.mubr.f32.mxu0 0.0
      %2975 = vmatmul.mubr.f32.gmra.mxu0 %v1303
      %v2976 = vpop.f32.mrf.mxu0
      %v2977 = vadd.f32 0.0, %v2976
      %v2978 = vpop.f32.mrf.mxu0
      %2979 = vmatprep.mubr.f32.mxu0 0.0
      %2980 = vmatmul.mubr.f32.gmra.mxu0 %v1306
      %v2981 = vpop.f32.mrf.mxu0
      %v2982 = vadd.f32 0.0, %v2981
      %v2983 = vpop.f32.mrf.mxu0
      %2984 = vmatprep.mubr.f32.mxu0 0.0
      %2985 = vmatmul.mubr.f32.gmra.mxu0 %v1309
      %v2986 = vpop.f32.mrf.mxu0
      %v2987 = vadd.f32 0.0, %v2986
      %v2988 = vpop.f32.mrf.mxu0
      %2989 = vmatprep.mubr.f32.mxu0 0.0
      %2990 = vmatmul.mubr.f32.gmra.mxu0 %v1312
      %v2991 = vpop.f32.mrf.mxu0
      %v2992 = vadd.f32 0.0, %v2991
      %v2993 = vpop.f32.mrf.mxu0
      %2994 = vmatprep.mubr.f32.mxu0 0.0
      %2995 = vmatmul.mubr.f32.gmra.mxu0 %v1315
      %v2996 = vpop.f32.mrf.mxu0
      %v2997 = vadd.f32 0.0, %v2996
      %v2998 = vpop.f32.mrf.mxu0
      %2999 = vmatprep.mubr.f32.mxu0 0.0
      %3000 = vmatmul.mubr.f32.gmra.mxu0 %v1318
      %v3001 = vpop.f32.mrf.mxu0
      %v3002 = vadd.f32 0.0, %v3001
      %v3003 = vpop.f32.mrf.mxu0
      %3004 = vmatprep.mubr.f32.mxu0 0.0
      %3005 = vmatmul.mubr.f32.gmra.mxu0 %v1321
      %v3006 = vpop.f32.mrf.mxu0
      %v3007 = vadd.f32 0.0, %v3006
      %v3008 = vpop.f32.mrf.mxu0
      %3009 = vmatprep.mubr.f32.mxu0 0.0
      %3010 = vmatmul.mubr.f32.gmra.mxu0 %v1324
      %v3011 = vpop.f32.mrf.mxu0
      %v3012 = vadd.f32 0.0, %v3011
      %v3013 = vpop.f32.mrf.mxu0
      %3014 = vmatprep.mubr.f32.mxu0 0.0
      %3015 = vmatmul.mubr.f32.gmra.mxu0 %v1327
      %v3016 = vpop.f32.mrf.mxu0
      %v3017 = vadd.f32 0.0, %v3016
      %v3018 = vpop.f32.mrf.mxu0
      %3019 = vmatprep.mubr.f32.mxu0 0.0
      %3020 = vmatmul.mubr.f32.gmra.mxu0 %v1330
      %v3021 = vpop.f32.mrf.mxu0
      %v3022 = vadd.f32 0.0, %v3021
      %v3023 = vpop.f32.mrf.mxu0
      %3024 = vmatprep.mubr.f32.mxu0 0.0
      %3025 = vmatmul.mubr.f32.gmra.mxu0 %v1333
      %v3026 = vpop.f32.mrf.mxu0
      %v3027 = vadd.f32 0.0, %v3026
      %v3028 = vpop.f32.mrf.mxu0
      %3029 = vmatprep.mubr.f32.mxu0 0.0
      %3030 = vmatmul.mubr.f32.gmra.mxu0 %v1336
      %v3031 = vpop.f32.mrf.mxu0
      %v3032 = vadd.f32 0.0, %v3031
      %v3033 = vpop.f32.mrf.mxu0
      %3034 = vmatprep.mubr.f32.mxu0 0.0
      %3035 = vmatmul.mubr.f32.gmra.mxu0 %v1339
      %v3036 = vpop.f32.mrf.mxu0
      %v3037 = vadd.f32 0.0, %v3036
      %v3038 = vpop.f32.mrf.mxu0
      %3039 = vmatprep.mubr.f32.mxu0 0.0
      %3040 = vmatmul.mubr.f32.gmra.mxu0 %v1342
      %v3041 = vpop.f32.mrf.mxu0
      %v3042 = vadd.f32 0.0, %v3041
      %v3043 = vpop.f32.mrf.mxu0
      %3044 = vmatprep.mubr.f32.mxu0 0.0
      %3045 = vmatmul.mubr.f32.gmra.mxu0 %v1345
      %v3046 = vpop.f32.mrf.mxu0
      %v3047 = vadd.f32 0.0, %v3046
      %v3048 = vpop.f32.mrf.mxu0
      %3049 = vmatprep.mubr.f32.mxu0 0.0
      %3050 = vmatmul.mubr.f32.gmra.mxu0 %v1348
      %v3051 = vpop.f32.mrf.mxu0
      %v3052 = vadd.f32 0.0, %v3051
      %v3053 = vpop.f32.mrf.mxu0
      %3054 = vmatprep.mubr.f32.mxu0 0.0
      %3055 = vmatmul.mubr.f32.gmra.mxu0 %v1351
      %v3056 = vpop.f32.mrf.mxu0
      %v3057 = vadd.f32 0.0, %v3056
      %v3058 = vpop.f32.mrf.mxu0
      %3059 = vmatprep.mubr.f32.mxu0 0.0
      %3060 = vmatmul.mubr.f32.gmra.mxu0 %v1354
      %v3061 = vpop.f32.mrf.mxu0
      %v3062 = vadd.f32 0.0, %v3061
      %v3063 = vpop.f32.mrf.mxu0
      %3064 = vmatprep.mubr.f32.mxu0 0.0
      %3065 = vmatmul.mubr.f32.gmra.mxu0 %v1357
      %v3066 = vpop.f32.mrf.mxu0
      %v3067 = vadd.f32 0.0, %v3066
      %v3068 = vpop.f32.mrf.mxu0
      %3069 = vmatprep.mubr.f32.mxu0 0.0
      %3070 = vmatmul.mubr.f32.gmra.mxu0 %v1360
      %v3071 = vpop.f32.mrf.mxu0
      %v3072 = vadd.f32 0.0, %v3071
      %v3073 = vpop.f32.mrf.mxu0
      %3074 = vmatprep.mubr.f32.mxu0 0.0
      %3075 = vmatmul.mubr.f32.gmra.mxu0 %v1363
      %v3076 = vpop.f32.mrf.mxu0
      %v3077 = vadd.f32 0.0, %v3076
      %v3078 = vpop.f32.mrf.mxu0
      %3079 = vmatprep.mubr.f32.mxu0 0.0
      %3080 = vmatmul.mubr.f32.gmra.mxu0 %v1366
      %v3081 = vpop.f32.mrf.mxu0
      %v3082 = vadd.f32 0.0, %v3081
      %v3083 = vpop.f32.mrf.mxu0
      %3084 = vmatprep.mubr.f32.mxu0 0.0
      %3085 = vmatmul.mubr.f32.gmra.mxu0 %v1369
      %v3086 = vpop.f32.mrf.mxu0
      %v3087 = vadd.f32 0.0, %v3086
      %v3088 = vpop.f32.mrf.mxu0
      %3089 = vmatprep.mubr.f32.mxu0 0.0
      %3090 = vmatmul.mubr.f32.gmra.mxu0 %v1372
      %v3091 = vpop.f32.mrf.mxu0
      %v3092 = vadd.f32 0.0, %v3091
      %v3093 = vpop.f32.mrf.mxu0
      %3094 = vmatprep.mubr.f32.mxu0 0.0
      %3095 = vmatmul.mubr.f32.gmra.mxu0 %v1375
      %v3096 = vpop.f32.mrf.mxu0
      %v3097 = vadd.f32 0.0, %v3096
      %v3098 = vpop.f32.mrf.mxu0
      %3099 = vmatprep.mubr.f32.mxu0 0.0
      %3100 = vmatmul.mubr.f32.gmra.mxu0 %v1378
      %v3101 = vpop.f32.mrf.mxu0
      %v3102 = vadd.f32 0.0, %v3101
      %v3103 = vpop.f32.mrf.mxu0
      %3104 = vmatprep.mubr.f32.mxu0 0.0
      %3105 = vmatmul.mubr.f32.gmra.mxu0 %v1381
      %v3106 = vpop.f32.mrf.mxu0
      %v3107 = vadd.f32 0.0, %v3106
      %v3108 = vpop.f32.mrf.mxu0
      %3109 = vmatprep.mubr.f32.mxu0 0.0
      %3110 = vmatmul.mubr.f32.gmra.mxu0 %v1384
      %v3111 = vpop.f32.mrf.mxu0
      %v3112 = vadd.f32 0.0, %v3111
      %v3113 = vpop.f32.mrf.mxu0
      %3114 = vmatprep.mubr.f32.mxu0 0.0
      %3115 = vmatmul.mubr.f32.gmra.mxu0 %v1387
      %v3116 = vpop.f32.mrf.mxu0
      %v3117 = vadd.f32 0.0, %v3116
      %v3118 = vpop.f32.mrf.mxu0
      %3119 = vmatprep.mubr.f32.mxu0 0.0
      %3120 = vmatmul.mubr.f32.gmra.mxu0 %v1390
      %v3121 = vpop.f32.mrf.mxu0
      %v3122 = vadd.f32 0.0, %v3121
      %v3123 = vpop.f32.mrf.mxu0
      %3124 = vmatprep.mubr.f32.mxu0 0.0
      %3125 = vmatmul.mubr.f32.gmra.mxu0 %v1393
      %v3126 = vpop.f32.mrf.mxu0
      %v3127 = vadd.f32 0.0, %v3126
      %v3128 = vpop.f32.mrf.mxu0
      %3129 = vmatprep.mubr.f32.mxu0 0.0
      %3130 = vmatmul.mubr.f32.gmra.mxu0 %v1396
      %v3131 = vpop.f32.mrf.mxu0
      %v3132 = vadd.f32 0.0, %v3131
      %v3133 = vpop.f32.mrf.mxu0
      %3134 = vmatprep.mubr.f32.mxu0 0.0
      %3135 = vmatmul.mubr.f32.gmra.mxu0 %v1399
      %v3136 = vpop.f32.mrf.mxu0
      %v3137 = vadd.f32 0.0, %v3136
      %v3138 = vpop.f32.mrf.mxu0
      %3139 = vmatprep.mubr.f32.mxu0 0.0
      %3140 = vmatmul.mubr.f32.gmra.mxu0 %v1402
      %v3141 = vpop.f32.mrf.mxu0
      %v3142 = vadd.f32 0.0, %v3141
      %v3143 = vpop.f32.mrf.mxu0
      %3144 = vmatprep.mubr.f32.mxu0 0.0
      %3145 = vmatmul.mubr.f32.gmra.mxu0 %v1405
      %v3146 = vpop.f32.mrf.mxu0
      %v3147 = vadd.f32 0.0, %v3146
      %v3148 = vpop.f32.mrf.mxu0
      %3149 = vmatprep.mubr.f32.mxu0 0.0
      %3150 = vmatmul.mubr.f32.gmra.mxu0 %v1408
      %v3151 = vpop.f32.mrf.mxu0
      %v3152 = vadd.f32 0.0, %v3151
      %v3153 = vpop.f32.mrf.mxu0
      %3154 = vmatprep.mubr.f32.mxu0 0.0
      %3155 = vmatmul.mubr.f32.gmra.mxu0 %v1411
      %v3156 = vpop.f32.mrf.mxu0
      %v3157 = vadd.f32 0.0, %v3156
      %v3158 = vpop.f32.mrf.mxu0
      %3159 = vmatprep.mubr.f32.mxu0 0.0
      %3160 = vmatmul.mubr.f32.gmra.mxu0 %v1414
      %v3161 = vpop.f32.mrf.mxu0
      %v3162 = vadd.f32 0.0, %v3161
      %v3163 = vpop.f32.mrf.mxu0
      %3164 = vmatprep.mubr.f32.mxu0 0.0
      %3165 = vmatmul.mubr.f32.gmra.mxu0 %v1417
      %v3166 = vpop.f32.mrf.mxu0
      %v3167 = vadd.f32 0.0, %v3166
      %v3168 = vpop.f32.mrf.mxu0
      %3169 = vmatprep.mubr.f32.mxu0 0.0
      %3170 = vmatmul.mubr.f32.gmra.mxu0 %v1420
      %v3171 = vpop.f32.mrf.mxu0
      %v3172 = vadd.f32 0.0, %v3171
      %v3173 = vpop.f32.mrf.mxu0
      %3174 = vmatprep.mubr.f32.mxu0 0.0
      %3175 = vmatmul.mubr.f32.gmra.mxu0 %v1423
      %v3176 = vpop.f32.mrf.mxu0
      %v3177 = vadd.f32 0.0, %v3176
      %v3178 = vpop.f32.mrf.mxu0
      %3179 = vmatprep.mubr.f32.mxu0 0.0
      %3180 = vmatmul.mubr.f32.gmra.mxu0 %v1426
      %v3181 = vpop.f32.mrf.mxu0
      %v3182 = vadd.f32 0.0, %v3181
      %v3183 = vpop.f32.mrf.mxu0
      %3184 = vmatprep.mubr.f32.mxu0 0.0
      %3185 = vmatmul.mubr.f32.gmra.mxu0 %v1429
      %v3186 = vpop.f32.mrf.mxu0
      %v3187 = vadd.f32 0.0, %v3186
      %v3188 = vpop.f32.mrf.mxu0
      %3189 = vmatprep.mubr.f32.mxu0 0.0
      %3190 = vmatmul.mubr.f32.gmra.mxu0 %v1432
      %v3191 = vpop.f32.mrf.mxu0
      %v3192 = vadd.f32 0.0, %v3191
      %v3193 = vpop.f32.mrf.mxu0
      %3194 = vmatprep.mubr.f32.mxu0 0.0
      %3195 = vmatmul.mubr.f32.gmra.mxu0 %v1435
      %v3196 = vpop.f32.mrf.mxu0
      %v3197 = vadd.f32 0.0, %v3196
      %v3198 = vpop.f32.mrf.mxu0
      %3199 = vmatprep.mubr.f32.mxu0 0.0
      %3200 = vmatmul.mubr.f32.gmra.mxu0 %v1438
      %v3201 = vpop.f32.mrf.mxu0
      %v3202 = vadd.f32 0.0, %v3201
      %v3203 = vpop.f32.mrf.mxu0
      %3204 = vmatprep.mubr.f32.mxu0 0.0
      %3205 = vmatmul.mubr.f32.gmra.mxu0 %v1441
      %v3206 = vpop.f32.mrf.mxu0
      %v3207 = vadd.f32 0.0, %v3206
      %v3208 = vpop.f32.mrf.mxu0
      %3209 = vmatprep.mubr.f32.mxu0 0.0
      %3210 = vmatmul.mubr.f32.gmra.mxu0 %v1444
      %v3211 = vpop.f32.mrf.mxu0
      %v3212 = vadd.f32 0.0, %v3211
      %v3213 = vpop.f32.mrf.mxu0
      %3214 = vmatprep.mubr.f32.mxu0 0.0
      %3215 = vmatmul.mubr.f32.gmra.mxu0 %v1447
      %v3216 = vpop.f32.mrf.mxu0
      %v3217 = vadd.f32 0.0, %v3216
      %v3218 = vpop.f32.mrf.mxu0
      %3219 = vmatprep.mubr.f32.mxu0 0.0
      %3220 = vmatmul.mubr.f32.gmra.mxu0 %v1450
      %v3221 = vpop.f32.mrf.mxu0
      %v3222 = vadd.f32 0.0, %v3221
      %v3223 = vpop.f32.mrf.mxu0
      %3224 = vmatprep.mubr.f32.mxu0 0.0
      %3225 = vmatmul.mubr.f32.gmra.mxu0 %v1453
      %v3226 = vpop.f32.mrf.mxu0
      %v3227 = vadd.f32 0.0, %v3226
      %v3228 = vpop.f32.mrf.mxu0
      %3229 = vmatprep.mubr.f32.mxu0 0.0
      %3230 = vmatmul.mubr.f32.gmra.mxu0 %v1456
      %v3231 = vpop.f32.mrf.mxu0
      %v3232 = vadd.f32 0.0, %v3231
      %v3233 = vpop.f32.mrf.mxu0
      %3234 = vmatprep.mubr.f32.mxu0 0.0
      %3235 = vmatmul.mubr.f32.gmra.mxu0 %v1459
      %v3236 = vpop.f32.mrf.mxu0
      %v3237 = vadd.f32 0.0, %v3236
      %v3238 = vpop.f32.mrf.mxu0
      %3239 = vmatprep.mubr.f32.mxu0 0.0
      %3240 = vmatmul.mubr.f32.gmra.mxu0 %v1462
      %v3241 = vpop.f32.mrf.mxu0
      %v3242 = vadd.f32 0.0, %v3241
      %v3243 = vpop.f32.mrf.mxu0
      %3244 = vmatprep.mubr.f32.mxu0 0.0
      %3245 = vmatmul.mubr.f32.gmra.mxu0 %v1465
      %v3246 = vpop.f32.mrf.mxu0
      %v3247 = vadd.f32 0.0, %v3246
      %v3248 = vpop.f32.mrf.mxu0
      %3249 = vmatprep.mubr.f32.mxu0 0.0
      %3250 = vmatmul.mubr.f32.gmra.mxu0 %v1468
      %v3251 = vpop.f32.mrf.mxu0
      %v3252 = vadd.f32 0.0, %v3251
      %v3253 = vpop.f32.mrf.mxu0
      %3254 = vmatprep.mubr.f32.mxu0 0.0
      %3255 = vmatmul.mubr.f32.gmra.mxu0 %v1471
      %v3256 = vpop.f32.mrf.mxu0
      %v3257 = vadd.f32 0.0, %v3256
      %v3258 = vpop.f32.mrf.mxu0
      %3259 = vmatprep.mubr.f32.mxu0 0.0
      %3260 = vmatmul.mubr.f32.gmra.mxu0 %v1474
      %v3261 = vpop.f32.mrf.mxu0
      %v3262 = vadd.f32 0.0, %v3261
      %v3263 = vpop.f32.mrf.mxu0
      %3264 = vmatprep.mubr.f32.mxu0 0.0
      %3265 = vmatmul.mubr.f32.gmra.mxu0 %v1477
      %v3266 = vpop.f32.mrf.mxu0
      %v3267 = vadd.f32 0.0, %v3266
      %v3268 = vpop.f32.mrf.mxu0
      %3269 = vmatprep.mubr.f32.mxu0 0.0
      %3270 = vmatmul.mubr.f32.gmra.mxu0 %v1480
      %v3271 = vpop.f32.mrf.mxu0
      %v3272 = vadd.f32 0.0, %v3271
      %v3273 = vpop.f32.mrf.mxu0
      %3274 = vmatprep.mubr.f32.mxu0 0.0
      %3275 = vmatmul.mubr.f32.gmra.mxu0 %v1483
      %v3276 = vpop.f32.mrf.mxu0
      %v3277 = vadd.f32 0.0, %v3276
      %v3278 = vpop.f32.mrf.mxu0
      %3279 = vmatprep.mubr.f32.mxu0 0.0
      %3280 = vmatmul.mubr.f32.gmra.mxu0 %v1486
      %v3281 = vpop.f32.mrf.mxu0
      %v3282 = vadd.f32 0.0, %v3281
      %v3283 = vpop.f32.mrf.mxu0
      %3284 = vmatprep.mubr.f32.mxu0 0.0
      %3285 = vmatmul.mubr.f32.gmra.mxu0 %v1489
      %v3286 = vpop.f32.mrf.mxu0
      %v3287 = vadd.f32 0.0, %v3286
      %v3288 = vpop.f32.mrf.mxu0
      %3289 = vmatprep.mubr.f32.mxu0 0.0
      %3290 = vmatmul.mubr.f32.gmra.mxu0 %v1492
      %v3291 = vpop.f32.mrf.mxu0
      %v3292 = vadd.f32 0.0, %v3291
      %v3293 = vpop.f32.mrf.mxu0
      %3294 = vmatprep.mubr.f32.mxu0 0.0
      %3295 = vmatmul.mubr.f32.gmra.mxu0 %v1495
      %v3296 = vpop.f32.mrf.mxu0
      %v3297 = vadd.f32 0.0, %v3296
      %v3298 = vpop.f32.mrf.mxu0
      %3299 = vmatprep.mubr.f32.mxu0 0.0
      %3300 = vmatmul.mubr.f32.gmra.mxu0 %v1498
      %v3301 = vpop.f32.mrf.mxu0
      %v3302 = vadd.f32 0.0, %v3301
      %v3303 = vpop.f32.mrf.mxu0
      %3304 = vmatprep.mubr.f32.mxu0 0.0
      %3305 = vmatmul.mubr.f32.gmra.mxu0 %v1501
      %v3306 = vpop.f32.mrf.mxu0
      %v3307 = vadd.f32 0.0, %v3306
      %v3308 = vpop.f32.mrf.mxu0
      %3309 = vmatprep.mubr.f32.mxu0 0.0
      %3310 = vmatmul.mubr.f32.gmra.mxu0 %v1504
      %v3311 = vpop.f32.mrf.mxu0
      %v3312 = vadd.f32 0.0, %v3311
      %v3313 = vpop.f32.mrf.mxu0
      %3314 = vmatprep.mubr.f32.mxu0 0.0
      %3315 = vmatmul.mubr.f32.gmra.mxu0 %v1507
      %v3316 = vpop.f32.mrf.mxu0
      %v3317 = vadd.f32 0.0, %v3316
      %v3318 = vpop.f32.mrf.mxu0
      %3319 = vmatprep.mubr.f32.mxu0 0.0
      %3320 = vmatmul.mubr.f32.gmra.mxu0 %v1510
      %v3321 = vpop.f32.mrf.mxu0
      %v3322 = vadd.f32 0.0, %v3321
      %v3323 = vpop.f32.mrf.mxu0
      %3324 = vmatprep.mubr.f32.mxu0 0.0
      %3325 = vmatmul.mubr.f32.gmra.mxu0 %v1513
      %v3326 = vpop.f32.mrf.mxu0
      %v3327 = vadd.f32 0.0, %v3326
      %v3328 = vpop.f32.mrf.mxu0
      %3329 = vmatprep.mubr.f32.mxu0 0.0
      %3330 = vmatmul.mubr.f32.gmra.mxu0 %v1516
      %v3331 = vpop.f32.mrf.mxu0
      %v3332 = vadd.f32 0.0, %v3331
      %v3333 = vpop.f32.mrf.mxu0
      %3334 = vmatprep.mubr.f32.mxu0 0.0
      %3335 = vmatmul.mubr.f32.gmra.mxu0 %v1519
      %v3336 = vpop.f32.mrf.mxu0
      %v3337 = vadd.f32 0.0, %v3336
      %v3338 = vpop.f32.mrf.mxu0
      %3339 = vmatprep.mubr.f32.mxu0 0.0
      %3340 = vmatmul.mubr.f32.gmra.mxu0 %v1522
      %v3341 = vpop.f32.mrf.mxu0
      %v3342 = vadd.f32 0.0, %v3341
      %v3343 = vpop.f32.mrf.mxu0
      %3344 = vmatprep.mubr.f32.mxu0 0.0
      %3345 = vmatmul.mubr.f32.gmra.mxu0 %v1525
      %v3346 = vpop.f32.mrf.mxu0
      %v3347 = vadd.f32 0.0, %v3346
      %v3348 = vpop.f32.mrf.mxu0
      %3349 = vmatprep.mubr.f32.mxu0 0.0
      %3350 = vmatmul.mubr.f32.gmra.mxu0 %v1528
      %v3351 = vpop.f32.mrf.mxu0
      %v3352 = vadd.f32 0.0, %v3351
      %v3353 = vpop.f32.mrf.mxu0
      %3354 = vmatprep.mubr.f32.mxu0 0.0
      %3355 = vmatmul.mubr.f32.gmra.mxu0 %v1531
      %v3356 = vpop.f32.mrf.mxu0
      %v3357 = vadd.f32 0.0, %v3356
      %v3358 = vpop.f32.mrf.mxu0
      %3359 = vmatprep.mubr.f32.mxu0 0.0
      %3360 = vmatmul.mubr.f32.gmra.mxu0 %v1534
      %v3361 = vpop.f32.mrf.mxu0
      %v3362 = vadd.f32 0.0, %v3361
      %v3363 = vpop.f32.mrf.mxu0
      %3364 = vmatprep.mubr.f32.mxu0 0.0
      %3365 = vmatmul.mubr.f32.gmra.mxu0 %v1537
      %v3366 = vpop.f32.mrf.mxu0
      %v3367 = vadd.f32 0.0, %v3366
      %v3368 = vpop.f32.mrf.mxu0
      %3369 = vmatprep.mubr.f32.mxu0 0.0
      %3370 = vmatmul.mubr.f32.gmra.mxu0 %v1540
      %v3371 = vpop.f32.mrf.mxu0
      %v3372 = vadd.f32 0.0, %v3371
      %v3373 = vpop.f32.mrf.mxu0
      %3374 = vmatprep.mubr.f32.mxu0 0.0
      %3375 = vmatmul.mubr.f32.gmra.mxu0 %v1543
      %v3376 = vpop.f32.mrf.mxu0
      %v3377 = vadd.f32 0.0, %v3376
      %v3378 = vpop.f32.mrf.mxu0
      %3379 = vmatprep.mubr.f32.mxu0 0.0
      %3380 = vmatmul.mubr.f32.gmra.mxu0 %v1546
      %v3381 = vpop.f32.mrf.mxu0
      %v3382 = vadd.f32 0.0, %v3381
      %v3383 = vpop.f32.mrf.mxu0
      %3384 = vmatprep.mubr.f32.mxu0 0.0
      %3385 = vmatmul.mubr.f32.gmra.mxu0 %v1549
      %v3386 = vpop.f32.mrf.mxu0
      %v3387 = vadd.f32 0.0, %v3386
      %v3388 = vpop.f32.mrf.mxu0
      %3389 = vmatprep.mubr.f32.mxu0 0.0
      %3390 = vmatmul.mubr.f32.gmra.mxu0 %v1552
      %v3391 = vpop.f32.mrf.mxu0
      %v3392 = vadd.f32 0.0, %v3391
      %v3393 = vpop.f32.mrf.mxu0
      %3394 = vmatprep.mubr.f32.mxu0 0.0
      %3395 = vmatmul.mubr.f32.gmra.mxu0 %v1555
      %v3396 = vpop.f32.mrf.mxu0
      %v3397 = vadd.f32 0.0, %v3396
      %v3398 = vpop.f32.mrf.mxu0
      %3399 = vmatprep.mubr.f32.mxu0 0.0
      %3400 = vmatmul.mubr.f32.gmra.mxu0 %v1558
      %v3401 = vpop.f32.mrf.mxu0
      %v3402 = vadd.f32 0.0, %v3401
      %v3403 = vpop.f32.mrf.mxu0
      %3404 = vmatprep.mubr.f32.mxu0 0.0
      %3405 = vmatmul.mubr.f32.gmra.mxu0 %v1561
      %v3406 = vpop.f32.mrf.mxu0
      %v3407 = vadd.f32 0.0, %v3406
      %v3408 = vpop.f32.mrf.mxu0
      %3409 = vmatprep.mubr.f32.mxu0 0.0
      %3410 = vmatmul.mubr.f32.gmra.mxu0 %v1564
      %v3411 = vpop.f32.mrf.mxu0
      %v3412 = vadd.f32 0.0, %v3411
      %v3413 = vpop.f32.mrf.mxu0
      %3414 = vmatprep.mubr.f32.mxu0 0.0
      %3415 = vmatmul.mubr.f32.gmra.mxu0 %v1567
      %v3416 = vpop.f32.mrf.mxu0
      %v3417 = vadd.f32 0.0, %v3416
      %v3418 = vpop.f32.mrf.mxu0
      %3419 = vmatprep.mubr.f32.mxu0 0.0
      %3420 = vmatmul.mubr.f32.gmra.mxu0 %v1570
      %v3421 = vpop.f32.mrf.mxu0
      %v3422 = vadd.f32 0.0, %v3421
      %v3423 = vpop.f32.mrf.mxu0
      %3424 = vmatprep.mubr.f32.mxu0 0.0
      %3425 = vmatmul.mubr.f32.gmra.mxu0 %v1573
      %v3426 = vpop.f32.mrf.mxu0
      %v3427 = vadd.f32 0.0, %v3426
      %v3428 = vpop.f32.mrf.mxu0
      %3429 = vmatprep.mubr.f32.mxu0 0.0
      %3430 = vmatmul.mubr.f32.gmra.mxu0 %v1576
      %v3431 = vpop.f32.mrf.mxu0
      %v3432 = vadd.f32 0.0, %v3431
      %v3433 = vpop.f32.mrf.mxu0
      %3434 = vmatprep.mubr.f32.mxu0 0.0
      %3435 = vmatmul.mubr.f32.gmra.mxu0 %v1579
      %v3436 = vpop.f32.mrf.mxu0
      %v3437 = vadd.f32 0.0, %v3436
      %v3438 = vpop.f32.mrf.mxu0
      %3439 = vmatprep.mubr.f32.mxu0 0.0
      %3440 = vmatmul.mubr.f32.gmra.mxu0 %v1582
      %v3441 = vpop.f32.mrf.mxu0
      %v3442 = vadd.f32 0.0, %v3441
      %v3443 = vpop.f32.mrf.mxu0
      %3444 = vmatprep.mubr.f32.mxu0 0.0
      %3445 = vmatmul.mubr.f32.gmra.mxu0 %v1585
      %v3446 = vpop.f32.mrf.mxu0
      %v3447 = vadd.f32 0.0, %v3446
      %v3448 = vpop.f32.mrf.mxu0
      %3449 = vmatprep.mubr.f32.mxu0 0.0
      %3450 = vmatmul.mubr.f32.gmra.mxu0 %v1588
      %v3451 = vpop.f32.mrf.mxu0
      %v3452 = vadd.f32 0.0, %v3451
      %v3453 = vpop.f32.mrf.mxu0
      %3454 = vmatprep.mubr.f32.mxu0 0.0
      %3455 = vmatmul.mubr.f32.gmra.mxu0 %v1591
      %v3456 = vpop.f32.mrf.mxu0
      %v3457 = vadd.f32 0.0, %v3456
      %v3458 = vpop.f32.mrf.mxu0
      %3459 = vmatprep.mubr.f32.mxu0 0.0
      %3460 = vmatmul.mubr.f32.gmra.mxu0 %v1594
      %v3461 = vpop.f32.mrf.mxu0
      %v3462 = vadd.f32 0.0, %v3461
      %v3463 = vpop.f32.mrf.mxu0
      %3464 = vmatprep.mubr.f32.mxu0 0.0
      %3465 = vmatmul.mubr.f32.gmra.mxu0 %v1597
      %v3466 = vpop.f32.mrf.mxu0
      %v3467 = vadd.f32 0.0, %v3466
      %v3468 = vpop.f32.mrf.mxu0
      %3469 = vmatprep.mubr.f32.mxu0 0.0
      %3470 = vmatmul.mubr.f32.gmra.mxu0 %v1600
      %v3471 = vpop.f32.mrf.mxu0
      %v3472 = vadd.f32 0.0, %v3471
      %v3473 = vpop.f32.mrf.mxu0
      %3474 = vmatprep.mubr.f32.mxu0 0.0
      %3475 = vmatmul.mubr.f32.gmra.mxu0 %v1603
      %v3476 = vpop.f32.mrf.mxu0
      %v3477 = vadd.f32 0.0, %v3476
      %v3478 = vpop.f32.mrf.mxu0
      %3479 = vmatprep.mubr.f32.mxu0 0.0
      %3480 = vmatmul.mubr.f32.gmra.mxu0 %v1606
      %v3481 = vpop.f32.mrf.mxu0
      %v3482 = vadd.f32 0.0, %v3481
      %v3483 = vpop.f32.mrf.mxu0
      %3484 = vmatprep.mubr.f32.mxu0 0.0
      %3485 = vmatmul.mubr.f32.gmra.mxu0 %v1609
      %v3486 = vpop.f32.mrf.mxu0
      %v3487 = vadd.f32 0.0, %v3486
      %v3488 = vpop.f32.mrf.mxu0
      %3489 = vmatprep.mubr.f32.mxu0 0.0
      %3490 = vmatmul.mubr.f32.gmra.mxu0 %v1612
      %v3491 = vpop.f32.mrf.mxu0
      %v3492 = vadd.f32 0.0, %v3491
      %v3493 = vpop.f32.mrf.mxu0
      %3494 = vmatprep.mubr.f32.mxu0 0.0
      %3495 = vmatmul.mubr.f32.gmra.mxu0 %v1615
      %v3496 = vpop.f32.mrf.mxu0
      %v3497 = vadd.f32 0.0, %v3496
      %v3498 = vpop.f32.mrf.mxu0
      %3499 = vmatprep.mubr.f32.mxu0 0.0
      %3500 = vmatmul.mubr.f32.gmra.mxu0 %v1618
      %v3501 = vpop.f32.mrf.mxu0
      %v3502 = vadd.f32 0.0, %v3501
      %v3503 = vpop.f32.mrf.mxu0
      %3504 = vmatprep.mubr.f32.mxu0 0.0
      %3505 = vmatmul.mubr.f32.gmra.mxu0 %v1621
      %v3506 = vpop.f32.mrf.mxu0
      %v3507 = vadd.f32 0.0, %v3506
      %v3508 = vpop.f32.mrf.mxu0
      %3509 = vmatprep.mubr.f32.mxu0 0.0
      %3510 = vmatmul.mubr.f32.gmra.mxu0 %v1624
      %v3511 = vpop.f32.mrf.mxu0
      %v3512 = vadd.f32 0.0, %v3511
      %v3513 = vpop.f32.mrf.mxu0
      %3514 = vmatprep.mubr.f32.mxu0 0.0
      %3515 = vmatmul.mubr.f32.gmra.mxu0 %v1627
      %v3516 = vpop.f32.mrf.mxu0
      %v3517 = vadd.f32 0.0, %v3516
      %v3518 = vpop.f32.mrf.mxu0
      %3519 = vmatprep.mubr.f32.mxu0 0.0
      %3520 = vmatmul.mubr.f32.gmra.mxu0 %v1630
      %v3521 = vpop.f32.mrf.mxu0
      %v3522 = vadd.f32 0.0, %v3521
      %v3523 = vpop.f32.mrf.mxu0
      %3524 = vmatprep.mubr.f32.mxu0 0.0
      %3525 = vmatmul.mubr.f32.gmra.mxu0 %v1633
      %v3526 = vpop.f32.mrf.mxu0
      %v3527 = vadd.f32 0.0, %v3526
      %v3528 = vpop.f32.mrf.mxu0
      %3529 = vmatprep.mubr.f32.mxu0 0.0
      %3530 = vmatmul.mubr.f32.gmra.mxu0 %v1636
      %v3531 = vpop.f32.mrf.mxu0
      %v3532 = vadd.f32 0.0, %v3531
      %v3533 = vpop.f32.mrf.mxu0
      %3534 = vmatprep.mubr.f32.mxu0 0.0
      %3535 = vmatmul.mubr.f32.gmra.mxu0 %v1639
      %v3536 = vpop.f32.mrf.mxu0
      %v3537 = vadd.f32 0.0, %v3536
      %v3538 = vpop.f32.mrf.mxu0
      %3539 = vmatprep.mubr.f32.mxu0 0.0
      %3540 = vmatmul.mubr.f32.gmra.mxu0 %v1642
      %v3541 = vpop.f32.mrf.mxu0
      %v3542 = vadd.f32 0.0, %v3541
      %v3543 = vpop.f32.mrf.mxu0
      %3544 = vmatprep.mubr.f32.mxu0 0.0
      %3545 = vmatmul.mubr.f32.gmra.mxu0 %v1645
      %v3546 = vpop.f32.mrf.mxu0
      %v3547 = vadd.f32 0.0, %v3546
      %v3548 = vpop.f32.mrf.mxu0
      %3549 = vmatprep.mubr.f32.mxu0 0.0
      %3550 = vmatmul.mubr.f32.gmra.mxu0 %v1648
      %v3551 = vpop.f32.mrf.mxu0
      %v3552 = vadd.f32 0.0, %v3551
      %v3553 = vpop.f32.mrf.mxu0
      %3554 = vmatprep.mubr.f32.mxu0 0.0
      %3555 = vmatmul.mubr.f32.gmra.mxu0 %v1651
      %v3556 = vpop.f32.mrf.mxu0
      %v3557 = vadd.f32 0.0, %v3556
      %v3558 = vpop.f32.mrf.mxu0
      %3559 = vmatprep.mubr.f32.mxu0 0.0
      %3560 = vmatmul.mubr.f32.gmra.mxu0 %v1654
      %v3561 = vpop.f32.mrf.mxu0
      %v3562 = vadd.f32 0.0, %v3561
      %v3563 = vpop.f32.mrf.mxu0
      %3564 = vmatprep.mubr.f32.mxu0 0.0
      %3565 = vmatmul.mubr.f32.gmra.mxu0 %v1657
      %v3566 = vpop.f32.mrf.mxu0
      %v3567 = vadd.f32 0.0, %v3566
      %v3568 = vpop.f32.mrf.mxu0
      %3569 = vmatprep.mubr.f32.mxu0 0.0
      %3570 = vmatmul.mubr.f32.gmra.mxu0 %v1660
      %v3571 = vpop.f32.mrf.mxu0
      %v3572 = vadd.f32 0.0, %v3571
      %v3573 = vpop.f32.mrf.mxu0
      %3574 = vmatprep.mubr.f32.mxu0 0.0
      %3575 = vmatmul.mubr.f32.gmra.mxu0 %v1663
      %v3576 = vpop.f32.mrf.mxu0
      %v3577 = vadd.f32 0.0, %v3576
      %v3578 = vpop.f32.mrf.mxu0
      %3579 = vmatprep.mubr.f32.mxu0 0.0
      %3580 = vmatmul.mubr.f32.gmra.mxu0 %v1666
      %v3581 = vpop.f32.mrf.mxu0
      %v3582 = vadd.f32 0.0, %v3581
      %v3583 = vpop.f32.mrf.mxu0
      %3584 = vmatprep.mubr.f32.mxu0 0.0
      %3585 = vmatmul.mubr.f32.gmra.mxu0 %v1669
      %v3586 = vpop.f32.mrf.mxu0
      %v3587 = vadd.f32 0.0, %v3586
      %v3588 = vpop.f32.mrf.mxu0
      %3589 = vmatprep.mubr.f32.mxu0 0.0
      %3590 = vmatmul.mubr.f32.gmra.mxu0 %v1672
      %v3591 = vpop.f32.mrf.mxu0
      %v3592 = vadd.f32 0.0, %v3591
      %v3593 = vpop.f32.mrf.mxu0
      %3594 = vmatprep.mubr.f32.mxu0 0.0
      %3595 = vmatmul.mubr.f32.gmra.mxu0 %v1675
      %v3596 = vpop.f32.mrf.mxu0
      %v3597 = vadd.f32 0.0, %v3596
      %v3598 = vpop.f32.mrf.mxu0
      %3599 = vmatprep.mubr.f32.mxu0 0.0
      %3600 = vmatmul.mubr.f32.gmra.mxu0 %v1678
      %v3601 = vpop.f32.mrf.mxu0
      %v3602 = vadd.f32 0.0, %v3601
      %v3603 = vpop.f32.mrf.mxu0
      %3604 = vmatprep.mubr.f32.mxu0 0.0
      %3605 = vmatmul.mubr.f32.gmra.mxu0 %v1681
      %v3606 = vpop.f32.mrf.mxu0
      %v3607 = vadd.f32 0.0, %v3606
      %v3608 = vpop.f32.mrf.mxu0
      %3609 = vmatprep.mubr.f32.mxu0 0.0
      %3610 = vmatmul.mubr.f32.gmra.mxu0 %v1684
      %v3611 = vpop.f32.mrf.mxu0
      %v3612 = vadd.f32 0.0, %v3611
      %v3613 = vpop.f32.mrf.mxu0
      %3614 = vmatprep.mubr.f32.mxu0 0.0
      %3615 = vmatmul.mubr.f32.gmra.mxu0 %v1687
      %v3616 = vpop.f32.mrf.mxu0
      %v3617 = vadd.f32 0.0, %v3616
      %v3618 = vpop.f32.mrf.mxu0
      %3619 = vmatprep.mubr.f32.mxu0 0.0
      %3620 = vmatmul.mubr.f32.gmra.mxu0 %v1690
      %v3621 = vpop.f32.mrf.mxu0
      %v3622 = vadd.f32 0.0, %v3621
      %v3623 = vpop.f32.mrf.mxu0
      %3624 = vmatprep.mubr.f32.mxu0 0.0
      %3625 = vmatmul.mubr.f32.gmra.mxu0 %v1693
      %v3626 = vpop.f32.mrf.mxu0
      %v3627 = vadd.f32 0.0, %v3626
      %v3628 = vpop.f32.mrf.mxu0
      %3629 = vmatprep.mubr.f32.mxu0 0.0
      %3630 = vmatmul.mubr.f32.gmra.mxu0 %v1696
      %v3631 = vpop.f32.mrf.mxu0
      %v3632 = vadd.f32 0.0, %v3631
      %v3633 = vpop.f32.mrf.mxu0
      %3634 = vmatprep.mubr.f32.mxu0 0.0
      %3635 = vmatmul.mubr.f32.gmra.mxu0 %v1699
      %v3636 = vpop.f32.mrf.mxu0
      %v3637 = vadd.f32 0.0, %v3636
      %v3638 = vpop.f32.mrf.mxu0
      %3639 = vmatprep.mubr.f32.mxu0 0.0
      %3640 = vmatmul.mubr.f32.gmra.mxu0 %v1702
      %v3641 = vpop.f32.mrf.mxu0
      %v3642 = vadd.f32 0.0, %v3641
      %v3643 = vpop.f32.mrf.mxu0
      %3644 = vmatprep.mubr.f32.mxu0 0.0
      %3645 = vmatmul.mubr.f32.gmra.mxu0 %v1705
      %v3646 = vpop.f32.mrf.mxu0
      %v3647 = vadd.f32 0.0, %v3646
      %v3648 = vpop.f32.mrf.mxu0
      %3649 = vmatprep.mubr.f32.mxu0 0.0
      %3650 = vmatmul.mubr.f32.gmra.mxu0 %v1708
      %v3651 = vpop.f32.mrf.mxu0
      %v3652 = vadd.f32 0.0, %v3651
      %v3653 = vpop.f32.mrf.mxu0
      %3654 = vmatprep.mubr.f32.mxu0 0.0
      %3655 = vmatmul.mubr.f32.gmra.mxu0 %v1711
      %v3656 = vpop.f32.mrf.mxu0
      %v3657 = vadd.f32 0.0, %v3656
      %v3658 = vpop.f32.mrf.mxu0
      %3659 = vmatprep.mubr.f32.mxu0 0.0
      %3660 = vmatmul.mubr.f32.gmra.mxu0 %v1714
      %v3661 = vpop.f32.mrf.mxu0
      %v3662 = vadd.f32 0.0, %v3661
      %v3663 = vpop.f32.mrf.mxu0
      %3664 = vmatprep.mubr.f32.mxu0 0.0
      %3665 = vmatmul.mubr.f32.gmra.mxu0 %v1717
      %v3666 = vpop.f32.mrf.mxu0
      %v3667 = vadd.f32 0.0, %v3666
      %v3668 = vpop.f32.mrf.mxu0
      %3669 = vmatprep.mubr.f32.mxu0 0.0
      %3670 = vmatmul.mubr.f32.gmra.mxu0 %v1720
      %v3671 = vpop.f32.mrf.mxu0
      %v3672 = vadd.f32 0.0, %v3671
      %v3673 = vpop.f32.mrf.mxu0
      %3674 = vmatprep.mubr.f32.mxu0 0.0
      %3675 = vmatmul.mubr.f32.gmra.mxu0 %v1723
      %v3676 = vpop.f32.mrf.mxu0
      %v3677 = vadd.f32 0.0, %v3676
      %v3678 = vpop.f32.mrf.mxu0
      %3679 = vmatprep.mubr.f32.mxu0 0.0
      %3680 = vmatmul.mubr.f32.gmra.mxu0 %v1726
      %v3681 = vpop.f32.mrf.mxu0
      %v3682 = vadd.f32 0.0, %v3681
      %v3683 = vpop.f32.mrf.mxu0
      %3684 = vmatprep.mubr.f32.mxu0 0.0
      %3685 = vmatmul.mubr.f32.gmra.mxu0 %v1729
      %v3686 = vpop.f32.mrf.mxu0
      %v3687 = vadd.f32 0.0, %v3686
      %v3688 = vpop.f32.mrf.mxu0
      %3689 = vmatprep.mubr.f32.mxu0 0.0
      %3690 = vmatmul.mubr.f32.gmra.mxu0 %v1732
      %v3691 = vpop.f32.mrf.mxu0
      %v3692 = vadd.f32 0.0, %v3691
      %v3693 = vpop.f32.mrf.mxu0
      %3694 = vmatprep.mubr.f32.mxu0 0.0
      %3695 = vmatmul.mubr.f32.gmra.mxu0 %v1735
      %v3696 = vpop.f32.mrf.mxu0
      %v3697 = vadd.f32 0.0, %v3696
      %v3698 = vpop.f32.mrf.mxu0
      %3699 = vmatprep.mubr.f32.mxu0 0.0
      %3700 = vmatmul.mubr.f32.gmra.mxu0 %v1738
      %v3701 = vpop.f32.mrf.mxu0
      %v3702 = vadd.f32 0.0, %v3701
      %v3703 = vpop.f32.mrf.mxu0
      %3704 = vmatprep.mubr.f32.mxu0 0.0
      %3705 = vmatmul.mubr.f32.gmra.mxu0 %v1741
      %v3706 = vpop.f32.mrf.mxu0
      %v3707 = vadd.f32 0.0, %v3706
      %v3708 = vpop.f32.mrf.mxu0
      %3709 = vmatprep.mubr.f32.mxu0 0.0
      %3710 = vmatmul.mubr.f32.gmra.mxu0 %v1744
      %v3711 = vpop.f32.mrf.mxu0
      %v3712 = vadd.f32 0.0, %v3711
      %v3713 = vpop.f32.mrf.mxu0
      %3714 = vmatprep.mubr.f32.mxu0 0.0
      %3715 = vmatmul.mubr.f32.gmra.mxu0 %v1747
      %v3716 = vpop.f32.mrf.mxu0
      %v3717 = vadd.f32 0.0, %v3716
      %v3718 = vpop.f32.mrf.mxu0
      %3719 = vmatprep.mubr.f32.mxu0 0.0
      %3720 = vmatmul.mubr.f32.gmra.mxu0 %v1750
      %v3721 = vpop.f32.mrf.mxu0
      %v3722 = vadd.f32 0.0, %v3721
      %v3723 = vpop.f32.mrf.mxu0
      %3724 = vmatprep.mubr.f32.mxu0 0.0
      %3725 = vmatmul.mubr.f32.gmra.mxu0 %v1753
      %v3726 = vpop.f32.mrf.mxu0
      %v3727 = vadd.f32 0.0, %v3726
      %v3728 = vpop.f32.mrf.mxu0
      %3729 = vmatprep.mubr.f32.mxu0 0.0
      %3730 = vmatmul.mubr.f32.gmra.mxu0 %v1756
      %v3731 = vpop.f32.mrf.mxu0
      %v3732 = vadd.f32 0.0, %v3731
      %v3733 = vpop.f32.mrf.mxu0
      %3734 = vmatprep.mubr.f32.mxu0 0.0
      %3735 = vmatmul.mubr.f32.gmra.mxu0 %v1759
      %v3736 = vpop.f32.mrf.mxu0
      %v3737 = vadd.f32 0.0, %v3736
      %v3738 = vpop.f32.mrf.mxu0
      %3739 = vmatprep.mubr.f32.mxu0 0.0
      %3740 = vmatmul.mubr.f32.gmra.mxu0 %v1762
      %v3741 = vpop.f32.mrf.mxu0
      %v3742 = vadd.f32 0.0, %v3741
      %v3743 = vpop.f32.mrf.mxu0
      %3744 = vmatprep.mubr.f32.mxu0 0.0
      %3745 = vmatmul.mubr.f32.gmra.mxu0 %v1765
      %v3746 = vpop.f32.mrf.mxu0
      %v3747 = vadd.f32 0.0, %v3746
      %v3748 = vpop.f32.mrf.mxu0
      %3749 = vmatprep.mubr.f32.mxu0 0.0
      %3750 = vmatmul.mubr.f32.gmra.mxu0 %v1768
      %v3751 = vpop.f32.mrf.mxu0
      %v3752 = vadd.f32 0.0, %v3751
      %v3753 = vpop.f32.mrf.mxu0
      %3754 = vmatprep.mubr.f32.mxu0 0.0
      %3755 = vmatmul.mubr.f32.gmra.mxu0 %v1771
      %v3756 = vpop.f32.mrf.mxu0
      %v3757 = vadd.f32 0.0, %v3756
      %v3758 = vpop.f32.mrf.mxu0
      %3759 = vmatprep.mubr.f32.mxu0 0.0
      %3760 = vmatmul.mubr.f32.gmra.mxu0 %v1774
      %v3761 = vpop.f32.mrf.mxu0
      %v3762 = vadd.f32 0.0, %v3761
      %v3763 = vpop.f32.mrf.mxu0
      %3764 = vmatprep.mubr.f32.mxu0 0.0
      %3765 = vmatmul.mubr.f32.gmra.mxu0 %v1777
      %v3766 = vpop.f32.mrf.mxu0
      %v3767 = vadd.f32 0.0, %v3766
      %v3768 = vpop.f32.mrf.mxu0
      %3769 = vmatprep.mubr.f32.mxu0 0.0
      %3770 = vmatmul.mubr.f32.gmra.mxu0 %v1780
      %v3771 = vpop.f32.mrf.mxu0
      %v3772 = vadd.f32 0.0, %v3771
      %v3773 = vpop.f32.mrf.mxu0
      %3774 = vmatprep.mubr.f32.mxu0 0.0
      %3775 = vmatmul.mubr.f32.gmra.mxu0 %v1783
      %v3776 = vpop.f32.mrf.mxu0
      %v3777 = vadd.f32 0.0, %v3776
      %v3778 = vpop.f32.mrf.mxu0
      %3779 = vmatprep.mubr.f32.mxu0 0.0
      %3780 = vmatmul.mubr.f32.gmra.mxu0 %v1786
      %v3781 = vpop.f32.mrf.mxu0
      %v3782 = vadd.f32 0.0, %v3781
      %v3783 = vpop.f32.mrf.mxu0
      %3784 = vmatprep.mubr.f32.mxu0 0.0
      %3785 = vmatmul.mubr.f32.gmra.mxu0 %v1789
      %v3786 = vpop.f32.mrf.mxu0
      %v3787 = vadd.f32 0.0, %v3786
      %v3788 = vpop.f32.mrf.mxu0
      %3789 = vmatprep.mubr.f32.mxu0 0.0
      %3790 = vmatmul.mubr.f32.gmra.mxu0 %v1792
      %v3791 = vpop.f32.mrf.mxu0
      %v3792 = vadd.f32 0.0, %v3791
      %v3793 = vpop.f32.mrf.mxu0
      %3794 = vmatprep.mubr.f32.mxu0 0.0
      %3795 = vmatmul.mubr.f32.gmra.mxu0 %v1795
      %v3796 = vpop.f32.mrf.mxu0
      %v3797 = vadd.f32 0.0, %v3796
      %v3798 = vpop.f32.mrf.mxu0
      %3799 = vmatprep.mubr.f32.mxu0 0.0
      %3800 = vmatmul.mubr.f32.gmra.mxu0 %v1798
      %v3801 = vpop.f32.mrf.mxu0
      %v3802 = vadd.f32 0.0, %v3801
      %v3803 = vpop.f32.mrf.mxu0
      %3804 = vmatprep.mubr.f32.mxu0 0.0
      %3805 = vmatmul.mubr.f32.gmra.mxu0 %v1801
      %v3806 = vpop.f32.mrf.mxu0
      %v3807 = vadd.f32 0.0, %v3806
      %v3808 = vpop.f32.mrf.mxu0
      %3809 = vmatprep.mubr.f32.mxu0 0.0
      %3810 = vmatmul.mubr.f32.gmra.mxu0 %v1804
      %v3811 = vpop.f32.mrf.mxu0
      %v3812 = vadd.f32 0.0, %v3811
      %v3813 = vpop.f32.mrf.mxu0
      %3814 = vmatprep.mubr.f32.mxu0 0.0
      %3815 = vmatmul.mubr.f32.gmra.mxu0 %v1807
      %v3816 = vpop.f32.mrf.mxu0
      %v3817 = vadd.f32 0.0, %v3816
      %v3818 = vpop.f32.mrf.mxu0
      %3819 = vmatprep.mubr.f32.mxu0 0.0
      %3820 = vmatmul.mubr.f32.gmra.mxu0 %v1810
      %v3821 = vpop.f32.mrf.mxu0
      %v3822 = vadd.f32 0.0, %v3821
      %v3823 = vpop.f32.mrf.mxu0
      %3824 = vmatprep.mubr.f32.mxu0 0.0
      %3825 = vmatmul.mubr.f32.gmra.mxu0 %v1813
      %v3826 = vpop.f32.mrf.mxu0
      %v3827 = vadd.f32 0.0, %v3826
      %v3828 = vpop.f32.mrf.mxu0
      %3829 = vmatprep.mubr.f32.mxu0 0.0
      %3830 = vmatmul.mubr.f32.gmra.mxu0 %v1816
      %v3831 = vpop.f32.mrf.mxu0
      %v3832 = vadd.f32 0.0, %v3831
      %v3833 = vpop.f32.mrf.mxu0
      %3834 = vmatprep.mubr.f32.mxu0 0.0
      %3835 = vmatmul.mubr.f32.gmra.mxu0 %v1819
      %v3836 = vpop.f32.mrf.mxu0
      %v3837 = vadd.f32 0.0, %v3836
      %v3838 = vpop.f32.mrf.mxu0
      %3839 = vmatprep.mubr.f32.mxu0 0.0
      %3840 = vmatmul.mubr.f32.gmra.mxu0 %v1822
      %v3841 = vpop.f32.mrf.mxu0
      %v3842 = vadd.f32 0.0, %v3841
      %v3843 = vpop.f32.mrf.mxu0
      %3844 = vmatprep.mubr.f32.mxu0 0.0
      %3845 = vmatmul.mubr.f32.gmra.mxu0 %v1825
      %v3846 = vpop.f32.mrf.mxu0
      %v3847 = vadd.f32 0.0, %v3846
      %v3848 = vpop.f32.mrf.mxu0
      %3849 = vmatprep.mubr.f32.mxu0 0.0
      %3850 = vmatmul.mubr.f32.gmra.mxu0 %v1828
      %v3851 = vpop.f32.mrf.mxu0
      %v3852 = vadd.f32 0.0, %v3851
      %v3853 = vpop.f32.mrf.mxu0
      %3854 = vdwg.mxu0
      %v3855 = vld [vmem:[%s3] sm:$0xff]
      %v3856 = vld [vmem:[%s3 + $0x8] sm:$0xff]
      %v3857 = vld [vmem:[%s3 + $0x10] sm:$0xff]
      %v3858 = vld [vmem:[%s3 + $0x18] sm:$0xff]
      %v3859 = vld [vmem:[%s3 + $0x20] sm:$0xff]
      %v3860 = vld [vmem:[%s3 + $0x28] sm:$0xff]
      %v3861 = vld [vmem:[%s3 + $0x30] sm:$0xff]
      %v3862 = vld [vmem:[%s3 + $0x38] sm:$0xff]
      %v3863 = vld [vmem:[%s3 + $0x40] sm:$0xff]
      %v3864 = vld [vmem:[%s3 + $0x48] sm:$0xff]
      %v3865 = vld [vmem:[%s3 + $0x50] sm:$0xff]
      %v3866 = vld [vmem:[%s3 + $0x58] sm:$0xff]
      %v3867 = vld [vmem:[%s3 + $0x60] sm:$0xff]
      %v3868 = vld [vmem:[%s3 + $0x68] sm:$0xff]
      %v3869 = vld [vmem:[%s3 + $0x70] sm:$0xff]
      %v3870 = vld [vmem:[%s3 + $0x78] sm:$0xff]
      %v3871 = vld [vmem:[%s3 + $0x80] sm:$0xff]
      %v3872 = vld [vmem:[%s3 + $0x88] sm:$0xff]
      %v3873 = vld [vmem:[%s3 + $0x90] sm:$0xff]
      %v3874 = vld [vmem:[%s3 + $0x98] sm:$0xff]
      %v3875 = vld [vmem:[%s3 + $0xa0] sm:$0xff]
      %v3876 = vld [vmem:[%s3 + $0xa8] sm:$0xff]
      %v3877 = vld [vmem:[%s3 + $0xb0] sm:$0xff]
      %v3878 = vld [vmem:[%s3 + $0xb8] sm:$0xff]
      %v3879 = vld [vmem:[%s3 + $0xc0] sm:$0xff]
      %v3880 = vld [vmem:[%s3 + $0xc8] sm:$0xff]
      %v3881 = vld [vmem:[%s3 + $0xd0] sm:$0xff]
      %v3882 = vld [vmem:[%s3 + $0xd8] sm:$0xff]
      %v3883 = vld [vmem:[%s3 + $0xe0] sm:$0xff]
      %v3884 = vld [vmem:[%s3 + $0xe8] sm:$0xff]
      %v3885 = vld [vmem:[%s3 + $0xf0] sm:$0xff]
      %v3886 = vld [vmem:[%s3 + $0xf8] sm:$0xff]
      %v3887 = vld [vmem:[%s3 + $0x100] sm:$0xff]
      %v3888 = vld [vmem:[%s3 + $0x108] sm:$0xff]
      %v3889 = vld [vmem:[%s3 + $0x110] sm:$0xff]
      %v3890 = vld [vmem:[%s3 + $0x118] sm:$0xff]
      %v3891 = vld [vmem:[%s3 + $0x120] sm:$0xff]
      %v3892 = vld [vmem:[%s3 + $0x128] sm:$0xff]
      %v3893 = vld [vmem:[%s3 + $0x130] sm:$0xff]
      %v3894 = vld [vmem:[%s3 + $0x138] sm:$0xff]
      %v3895 = vld [vmem:[%s3 + $0x140] sm:$0xff]
      %v3896 = vld [vmem:[%s3 + $0x148] sm:$0xff]
      %v3897 = vld [vmem:[%s3 + $0x150] sm:$0xff]
      %v3898 = vld [vmem:[%s3 + $0x158] sm:$0xff]
      %v3899 = vld [vmem:[%s3 + $0x160] sm:$0xff]
      %v3900 = vld [vmem:[%s3 + $0x168] sm:$0xff]
      %v3901 = vld [vmem:[%s3 + $0x170] sm:$0xff]
      %v3902 = vld [vmem:[%s3 + $0x178] sm:$0xff]
      %v3903 = vld [vmem:[%s3 + $0x180] sm:$0xff]
      %v3904 = vld [vmem:[%s3 + $0x188] sm:$0xff]
      %v3905 = vld [vmem:[%s3 + $0x190] sm:$0xff]
      %v3906 = vld [vmem:[%s3 + $0x198] sm:$0xff]
      %v3907 = vld [vmem:[%s3 + $0x1a0] sm:$0xff]
      %v3908 = vld [vmem:[%s3 + $0x1a8] sm:$0xff]
      %v3909 = vld [vmem:[%s3 + $0x1b0] sm:$0xff]
      %v3910 = vld [vmem:[%s3 + $0x1b8] sm:$0xff]
      %v3911 = vld [vmem:[%s3 + $0x1c0] sm:$0xff]
      %v3912 = vld [vmem:[%s3 + $0x1c8] sm:$0xff]
      %v3913 = vld [vmem:[%s3 + $0x1d0] sm:$0xff]
      %v3914 = vld [vmem:[%s3 + $0x1d8] sm:$0xff]
      %v3915 = vld [vmem:[%s3 + $0x1e0] sm:$0xff]
      %v3916 = vld [vmem:[%s3 + $0x1e8] sm:$0xff]
      %v3917 = vld [vmem:[%s3 + $0x1f0] sm:$0xff]
      %v3918 = vld [vmem:[%s3 + $0x1f8] sm:$0xff]
      %v3919 = vld [vmem:[%s3 + $0x200] sm:$0xff]
      %v3920 = vld [vmem:[%s3 + $0x208] sm:$0xff]
      %v3921 = vld [vmem:[%s3 + $0x210] sm:$0xff]
      %v3922 = vld [vmem:[%s3 + $0x218] sm:$0xff]
      %v3923 = vld [vmem:[%s3 + $0x220] sm:$0xff]
      %v3924 = vld [vmem:[%s3 + $0x228] sm:$0xff]
      %v3925 = vld [vmem:[%s3 + $0x230] sm:$0xff]
      %v3926 = vld [vmem:[%s3 + $0x238] sm:$0xff]
      %v3927 = vld [vmem:[%s3 + $0x240] sm:$0xff]
      %v3928 = vld [vmem:[%s3 + $0x248] sm:$0xff]
      %v3929 = vld [vmem:[%s3 + $0x250] sm:$0xff]
      %v3930 = vld [vmem:[%s3 + $0x258] sm:$0xff]
      %v3931 = vld [vmem:[%s3 + $0x260] sm:$0xff]
      %v3932 = vld [vmem:[%s3 + $0x268] sm:$0xff]
      %v3933 = vld [vmem:[%s3 + $0x270] sm:$0xff]
      %v3934 = vld [vmem:[%s3 + $0x278] sm:$0xff]
      %v3935 = vld [vmem:[%s3 + $0x280] sm:$0xff]
      %v3936 = vld [vmem:[%s3 + $0x288] sm:$0xff]
      %v3937 = vld [vmem:[%s3 + $0x290] sm:$0xff]
      %v3938 = vld [vmem:[%s3 + $0x298] sm:$0xff]
      %v3939 = vld [vmem:[%s3 + $0x2a0] sm:$0xff]
      %v3940 = vld [vmem:[%s3 + $0x2a8] sm:$0xff]
      %v3941 = vld [vmem:[%s3 + $0x2b0] sm:$0xff]
      %v3942 = vld [vmem:[%s3 + $0x2b8] sm:$0xff]
      %v3943 = vld [vmem:[%s3 + $0x2c0] sm:$0xff]
      %v3944 = vld [vmem:[%s3 + $0x2c8] sm:$0xff]
      %v3945 = vld [vmem:[%s3 + $0x2d0] sm:$0xff]
      %v3946 = vld [vmem:[%s3 + $0x2d8] sm:$0xff]
      %v3947 = vld [vmem:[%s3 + $0x2e0] sm:$0xff]
      %v3948 = vld [vmem:[%s3 + $0x2e8] sm:$0xff]
      %v3949 = vld [vmem:[%s3 + $0x2f0] sm:$0xff]
      %v3950 = vld [vmem:[%s3 + $0x2f8] sm:$0xff]
      %v3951 = vld [vmem:[%s3 + $0x300] sm:$0xff]
      %v3952 = vld [vmem:[%s3 + $0x308] sm:$0xff]
      %v3953 = vld [vmem:[%s3 + $0x310] sm:$0xff]
      %v3954 = vld [vmem:[%s3 + $0x318] sm:$0xff]
      %v3955 = vld [vmem:[%s3 + $0x320] sm:$0xff]
      %v3956 = vld [vmem:[%s3 + $0x328] sm:$0xff]
      %v3957 = vld [vmem:[%s3 + $0x330] sm:$0xff]
      %v3958 = vld [vmem:[%s3 + $0x338] sm:$0xff]
      %v3959 = vld [vmem:[%s3 + $0x340] sm:$0xff]
      %v3960 = vld [vmem:[%s3 + $0x348] sm:$0xff]
      %v3961 = vld [vmem:[%s3 + $0x350] sm:$0xff]
      %v3962 = vld [vmem:[%s3 + $0x358] sm:$0xff]
      %v3963 = vld [vmem:[%s3 + $0x360] sm:$0xff]
      %v3964 = vld [vmem:[%s3 + $0x368] sm:$0xff]
      %v3965 = vld [vmem:[%s3 + $0x370] sm:$0xff]
      %v3966 = vld [vmem:[%s3 + $0x378] sm:$0xff]
      %v3967 = vld [vmem:[%s3 + $0x380] sm:$0xff]
      %v3968 = vld [vmem:[%s3 + $0x388] sm:$0xff]
      %v3969 = vld [vmem:[%s3 + $0x390] sm:$0xff]
      %v3970 = vld [vmem:[%s3 + $0x398] sm:$0xff]
      %v3971 = vld [vmem:[%s3 + $0x3a0] sm:$0xff]
      %v3972 = vld [vmem:[%s3 + $0x3a8] sm:$0xff]
      %v3973 = vld [vmem:[%s3 + $0x3b0] sm:$0xff]
      %v3974 = vld [vmem:[%s3 + $0x3b8] sm:$0xff]
      %v3975 = vld [vmem:[%s3 + $0x3c0] sm:$0xff]
      %v3976 = vld [vmem:[%s3 + $0x3c8] sm:$0xff]
      %v3977 = vld [vmem:[%s3 + $0x3d0] sm:$0xff]
      %v3978 = vld [vmem:[%s3 + $0x3d8] sm:$0xff]
      %v3979 = vld [vmem:[%s3 + $0x3e0] sm:$0xff]
      %v3980 = vld [vmem:[%s3 + $0x3e8] sm:$0xff]
      %v3981 = vld [vmem:[%s3 + $0x3f0] sm:$0xff]
      %v3982 = vld [vmem:[%s3 + $0x3f8] sm:$0xff]
      %v3983 = vld [vmem:[%s3 + $0x400] sm:$0xff]
      %v3984 = vld [vmem:[%s3 + $0x408] sm:$0xff]
      %v3985 = vld [vmem:[%s3 + $0x410] sm:$0xff]
      %v3986 = vld [vmem:[%s3 + $0x418] sm:$0xff]
      %v3987 = vld [vmem:[%s3 + $0x420] sm:$0xff]
      %v3988 = vld [vmem:[%s3 + $0x428] sm:$0xff]
      %v3989 = vld [vmem:[%s3 + $0x430] sm:$0xff]
      %v3990 = vld [vmem:[%s3 + $0x438] sm:$0xff]
      %v3991 = vld [vmem:[%s3 + $0x440] sm:$0xff]
      %v3992 = vld [vmem:[%s3 + $0x448] sm:$0xff]
      %v3993 = vld [vmem:[%s3 + $0x450] sm:$0xff]
      %v3994 = vld [vmem:[%s3 + $0x458] sm:$0xff]
      %v3995 = vld [vmem:[%s3 + $0x460] sm:$0xff]
      %v3996 = vld [vmem:[%s3 + $0x468] sm:$0xff]
      %v3997 = vld [vmem:[%s3 + $0x470] sm:$0xff]
      %v3998 = vld [vmem:[%s3 + $0x478] sm:$0xff]
      %v3999 = vld [vmem:[%s3 + $0x480] sm:$0xff]
      %v4000 = vld [vmem:[%s3 + $0x488] sm:$0xff]
      %v4001 = vld [vmem:[%s3 + $0x490] sm:$0xff]
      %v4002 = vld [vmem:[%s3 + $0x498] sm:$0xff]
      %v4003 = vld [vmem:[%s3 + $0x4a0] sm:$0xff]
      %v4004 = vld [vmem:[%s3 + $0x4a8] sm:$0xff]
      %v4005 = vld [vmem:[%s3 + $0x4b0] sm:$0xff]
      %v4006 = vld [vmem:[%s3 + $0x4b8] sm:$0xff]
      %v4007 = vld [vmem:[%s3 + $0x4c0] sm:$0xff]
      %v4008 = vld [vmem:[%s3 + $0x4c8] sm:$0xff]
      %v4009 = vld [vmem:[%s3 + $0x4d0] sm:$0xff]
      %v4010 = vld [vmem:[%s3 + $0x4d8] sm:$0xff]
      %v4011 = vld [vmem:[%s3 + $0x4e0] sm:$0xff]
      %v4012 = vld [vmem:[%s3 + $0x4e8] sm:$0xff]
      %v4013 = vld [vmem:[%s3 + $0x4f0] sm:$0xff]
      %v4014 = vld [vmem:[%s3 + $0x4f8] sm:$0xff]
      %v4015 = vld [vmem:[%s3 + $0x500] sm:$0xff]
      %v4016 = vld [vmem:[%s3 + $0x508] sm:$0xff]
      %v4017 = vld [vmem:[%s3 + $0x510] sm:$0xff]
      %v4018 = vld [vmem:[%s3 + $0x518] sm:$0xff]
      %v4019 = vld [vmem:[%s3 + $0x520] sm:$0xff]
      %v4020 = vld [vmem:[%s3 + $0x528] sm:$0xff]
      %v4021 = vld [vmem:[%s3 + $0x530] sm:$0xff]
      %v4022 = vld [vmem:[%s3 + $0x538] sm:$0xff]
      %v4023 = vld [vmem:[%s3 + $0x540] sm:$0xff]
      %v4024 = vld [vmem:[%s3 + $0x548] sm:$0xff]
      %v4025 = vld [vmem:[%s3 + $0x550] sm:$0xff]
      %v4026 = vld [vmem:[%s3 + $0x558] sm:$0xff]
      %v4027 = vld [vmem:[%s3 + $0x560] sm:$0xff]
      %v4028 = vld [vmem:[%s3 + $0x568] sm:$0xff]
      %v4029 = vld [vmem:[%s3 + $0x570] sm:$0xff]
      %v4030 = vld [vmem:[%s3 + $0x578] sm:$0xff]
      %v4031 = vld [vmem:[%s3 + $0x580] sm:$0xff]
      %v4032 = vld [vmem:[%s3 + $0x588] sm:$0xff]
      %v4033 = vld [vmem:[%s3 + $0x590] sm:$0xff]
      %v4034 = vld [vmem:[%s3 + $0x598] sm:$0xff]
      %v4035 = vld [vmem:[%s3 + $0x5a0] sm:$0xff]
      %v4036 = vld [vmem:[%s3 + $0x5a8] sm:$0xff]
      %v4037 = vld [vmem:[%s3 + $0x5b0] sm:$0xff]
      %v4038 = vld [vmem:[%s3 + $0x5b8] sm:$0xff]
      %v4039 = vld [vmem:[%s3 + $0x5c0] sm:$0xff]
      %v4040 = vld [vmem:[%s3 + $0x5c8] sm:$0xff]
      %v4041 = vld [vmem:[%s3 + $0x5d0] sm:$0xff]
      %v4042 = vld [vmem:[%s3 + $0x5d8] sm:$0xff]
      %v4043 = vld [vmem:[%s3 + $0x5e0] sm:$0xff]
      %v4044 = vld [vmem:[%s3 + $0x5e8] sm:$0xff]
      %v4045 = vld [vmem:[%s3 + $0x5f0] sm:$0xff]
      %v4046 = vld [vmem:[%s3 + $0x5f8] sm:$0xff]
      %v4047 = vld [vmem:[%s3 + $0x600] sm:$0xff]
      %v4048 = vld [vmem:[%s3 + $0x608] sm:$0xff]
      %v4049 = vld [vmem:[%s3 + $0x610] sm:$0xff]
      %v4050 = vld [vmem:[%s3 + $0x618] sm:$0xff]
      %v4051 = vld [vmem:[%s3 + $0x620] sm:$0xff]
      %v4052 = vld [vmem:[%s3 + $0x628] sm:$0xff]
      %v4053 = vld [vmem:[%s3 + $0x630] sm:$0xff]
      %v4054 = vld [vmem:[%s3 + $0x638] sm:$0xff]
      %v4055 = vld [vmem:[%s3 + $0x640] sm:$0xff]
      %v4056 = vld [vmem:[%s3 + $0x648] sm:$0xff]
      %v4057 = vld [vmem:[%s3 + $0x650] sm:$0xff]
      %v4058 = vld [vmem:[%s3 + $0x658] sm:$0xff]
      %v4059 = vld [vmem:[%s3 + $0x660] sm:$0xff]
      %v4060 = vld [vmem:[%s3 + $0x668] sm:$0xff]
      %v4061 = vld [vmem:[%s3 + $0x670] sm:$0xff]
      %v4062 = vld [vmem:[%s3 + $0x678] sm:$0xff]
      %v4063 = vld [vmem:[%s3 + $0x680] sm:$0xff]
      %v4064 = vld [vmem:[%s3 + $0x688] sm:$0xff]
      %v4065 = vld [vmem:[%s3 + $0x690] sm:$0xff]
      %v4066 = vld [vmem:[%s3 + $0x698] sm:$0xff]
      %v4067 = vld [vmem:[%s3 + $0x6a0] sm:$0xff]
      %v4068 = vld [vmem:[%s3 + $0x6a8] sm:$0xff]
      %v4069 = vld [vmem:[%s3 + $0x6b0] sm:$0xff]
      %v4070 = vld [vmem:[%s3 + $0x6b8] sm:$0xff]
      %v4071 = vld [vmem:[%s3 + $0x6c0] sm:$0xff]
      %v4072 = vld [vmem:[%s3 + $0x6c8] sm:$0xff]
      %v4073 = vld [vmem:[%s3 + $0x6d0] sm:$0xff]
      %v4074 = vld [vmem:[%s3 + $0x6d8] sm:$0xff]
      %v4075 = vld [vmem:[%s3 + $0x6e0] sm:$0xff]
      %v4076 = vld [vmem:[%s3 + $0x6e8] sm:$0xff]
      %v4077 = vld [vmem:[%s3 + $0x6f0] sm:$0xff]
      %v4078 = vld [vmem:[%s3 + $0x6f8] sm:$0xff]
      %v4079 = vld [vmem:[%s3 + $0x700] sm:$0xff]
      %v4080 = vld [vmem:[%s3 + $0x708] sm:$0xff]
      %v4081 = vld [vmem:[%s3 + $0x710] sm:$0xff]
      %v4082 = vld [vmem:[%s3 + $0x718] sm:$0xff]
      %v4083 = vld [vmem:[%s3 + $0x720] sm:$0xff]
      %v4084 = vld [vmem:[%s3 + $0x728] sm:$0xff]
      %v4085 = vld [vmem:[%s3 + $0x730] sm:$0xff]
      %v4086 = vld [vmem:[%s3 + $0x738] sm:$0xff]
      %v4087 = vld [vmem:[%s3 + $0x740] sm:$0xff]
      %v4088 = vld [vmem:[%s3 + $0x748] sm:$0xff]
      %v4089 = vld [vmem:[%s3 + $0x750] sm:$0xff]
      %v4090 = vld [vmem:[%s3 + $0x758] sm:$0xff]
      %v4091 = vld [vmem:[%s3 + $0x760] sm:$0xff]
      %v4092 = vld [vmem:[%s3 + $0x768] sm:$0xff]
      %v4093 = vld [vmem:[%s3 + $0x770] sm:$0xff]
      %v4094 = vld [vmem:[%s3 + $0x778] sm:$0xff]
      %v4095 = vld [vmem:[%s3 + $0x780] sm:$0xff]
      %v4096 = vld [vmem:[%s3 + $0x788] sm:$0xff]
      %v4097 = vld [vmem:[%s3 + $0x790] sm:$0xff]
      %v4098 = vld [vmem:[%s3 + $0x798] sm:$0xff]
      %v4099 = vld [vmem:[%s3 + $0x7a0] sm:$0xff]
      %v4100 = vld [vmem:[%s3 + $0x7a8] sm:$0xff]
      %v4101 = vld [vmem:[%s3 + $0x7b0] sm:$0xff]
      %v4102 = vld [vmem:[%s3 + $0x7b8] sm:$0xff]
      %v4103 = vld [vmem:[%s3 + $0x7c0] sm:$0xff]
      %v4104 = vld [vmem:[%s3 + $0x7c8] sm:$0xff]
      %v4105 = vld [vmem:[%s3 + $0x7d0] sm:$0xff]
      %v4106 = vld [vmem:[%s3 + $0x7d8] sm:$0xff]
      %v4107 = vld [vmem:[%s3 + $0x7e0] sm:$0xff]
      %v4108 = vld [vmem:[%s3 + $0x7e8] sm:$0xff]
      %v4109 = vld [vmem:[%s3 + $0x7f0] sm:$0xff]
      %v4110 = vld [vmem:[%s3 + $0x7f8] sm:$0xff]
      %v4111 = vld [vmem:[%s3 + $0x800] sm:$0xff]
      %v4112 = vld [vmem:[%s3 + $0x808] sm:$0xff]
      %v4113 = vld [vmem:[%s3 + $0x810] sm:$0xff]
      %v4114 = vld [vmem:[%s3 + $0x818] sm:$0xff]
      %v4115 = vld [vmem:[%s3 + $0x820] sm:$0xff]
      %v4116 = vld [vmem:[%s3 + $0x828] sm:$0xff]
      %v4117 = vld [vmem:[%s3 + $0x830] sm:$0xff]
      %v4118 = vld [vmem:[%s3 + $0x838] sm:$0xff]
      %v4119 = vld [vmem:[%s3 + $0x840] sm:$0xff]
      %v4120 = vld [vmem:[%s3 + $0x848] sm:$0xff]
      %v4121 = vld [vmem:[%s3 + $0x850] sm:$0xff]
      %v4122 = vld [vmem:[%s3 + $0x858] sm:$0xff]
      %v4123 = vld [vmem:[%s3 + $0x860] sm:$0xff]
      %v4124 = vld [vmem:[%s3 + $0x868] sm:$0xff]
      %v4125 = vld [vmem:[%s3 + $0x870] sm:$0xff]
      %v4126 = vld [vmem:[%s3 + $0x878] sm:$0xff]
      %v4127 = vld [vmem:[%s3 + $0x880] sm:$0xff]
      %v4128 = vld [vmem:[%s3 + $0x888] sm:$0xff]
      %v4129 = vld [vmem:[%s3 + $0x890] sm:$0xff]
      %v4130 = vld [vmem:[%s3 + $0x898] sm:$0xff]
      %v4131 = vld [vmem:[%s3 + $0x8a0] sm:$0xff]
      %v4132 = vld [vmem:[%s3 + $0x8a8] sm:$0xff]
      %v4133 = vld [vmem:[%s3 + $0x8b0] sm:$0xff]
      %v4134 = vld [vmem:[%s3 + $0x8b8] sm:$0xff]
      %v4135 = vld [vmem:[%s3 + $0x8c0] sm:$0xff]
      %v4136 = vld [vmem:[%s3 + $0x8c8] sm:$0xff]
      %v4137 = vld [vmem:[%s3 + $0x8d0] sm:$0xff]
      %v4138 = vld [vmem:[%s3 + $0x8d8] sm:$0xff]
      %v4139 = vld [vmem:[%s3 + $0x8e0] sm:$0xff]
      %v4140 = vld [vmem:[%s3 + $0x8e8] sm:$0xff]
      %v4141 = vld [vmem:[%s3 + $0x8f0] sm:$0xff]
      %v4142 = vld [vmem:[%s3 + $0x8f8] sm:$0xff]
      %v4143 = vld [vmem:[%s3 + $0x900] sm:$0xff]
      %v4144 = vld [vmem:[%s3 + $0x908] sm:$0xff]
      %v4145 = vld [vmem:[%s3 + $0x910] sm:$0xff]
      %v4146 = vld [vmem:[%s3 + $0x918] sm:$0xff]
      %v4147 = vld [vmem:[%s3 + $0x920] sm:$0xff]
      %v4148 = vld [vmem:[%s3 + $0x928] sm:$0xff]
      %v4149 = vld [vmem:[%s3 + $0x930] sm:$0xff]
      %v4150 = vld [vmem:[%s3 + $0x938] sm:$0xff]
      %v4151 = vld [vmem:[%s3 + $0x940] sm:$0xff]
      %v4152 = vld [vmem:[%s3 + $0x948] sm:$0xff]
      %v4153 = vld [vmem:[%s3 + $0x950] sm:$0xff]
      %v4154 = vld [vmem:[%s3 + $0x958] sm:$0xff]
      %v4155 = vld [vmem:[%s3 + $0x960] sm:$0xff]
      %v4156 = vld [vmem:[%s3 + $0x968] sm:$0xff]
      %v4157 = vld [vmem:[%s3 + $0x970] sm:$0xff]
      %v4158 = vld [vmem:[%s3 + $0x978] sm:$0xff]
      %v4159 = vld [vmem:[%s3 + $0x980] sm:$0xff]
      %v4160 = vld [vmem:[%s3 + $0x988] sm:$0xff]
      %v4161 = vld [vmem:[%s3 + $0x990] sm:$0xff]
      %v4162 = vld [vmem:[%s3 + $0x998] sm:$0xff]
      %v4163 = vld [vmem:[%s3 + $0x9a0] sm:$0xff]
      %v4164 = vld [vmem:[%s3 + $0x9a8] sm:$0xff]
      %v4165 = vld [vmem:[%s3 + $0x9b0] sm:$0xff]
      %v4166 = vld [vmem:[%s3 + $0x9b8] sm:$0xff]
      %v4167 = vld [vmem:[%s3 + $0x9c0] sm:$0xff]
      %v4168 = vld [vmem:[%s3 + $0x9c8] sm:$0xff]
      %v4169 = vld [vmem:[%s3 + $0x9d0] sm:$0xff]
      %v4170 = vld [vmem:[%s3 + $0x9d8] sm:$0xff]
      %v4171 = vld [vmem:[%s3 + $0x9e0] sm:$0xff]
      %v4172 = vld [vmem:[%s3 + $0x9e8] sm:$0xff]
      %v4173 = vld [vmem:[%s3 + $0x9f0] sm:$0xff]
      %v4174 = vld [vmem:[%s3 + $0x9f8] sm:$0xff]
      %v4175 = vld [vmem:[%s3 + $0xa00] sm:$0xff]
      %v4176 = vld [vmem:[%s3 + $0xa08] sm:$0xff]
      %v4177 = vld [vmem:[%s3 + $0xa10] sm:$0xff]
      %v4178 = vld [vmem:[%s3 + $0xa18] sm:$0xff]
      %v4179 = vld [vmem:[%s3 + $0xa20] sm:$0xff]
      %v4180 = vld [vmem:[%s3 + $0xa28] sm:$0xff]
      %v4181 = vld [vmem:[%s3 + $0xa30] sm:$0xff]
      %v4182 = vld [vmem:[%s3 + $0xa38] sm:$0xff]
      %v4183 = vld [vmem:[%s3 + $0xa40] sm:$0xff]
      %v4184 = vld [vmem:[%s3 + $0xa48] sm:$0xff]
      %v4185 = vld [vmem:[%s3 + $0xa50] sm:$0xff]
      %v4186 = vld [vmem:[%s3 + $0xa58] sm:$0xff]
      %v4187 = vld [vmem:[%s3 + $0xa60] sm:$0xff]
      %v4188 = vld [vmem:[%s3 + $0xa68] sm:$0xff]
      %v4189 = vld [vmem:[%s3 + $0xa70] sm:$0xff]
      %v4190 = vld [vmem:[%s3 + $0xa78] sm:$0xff]
      %v4191 = vld [vmem:[%s3 + $0xa80] sm:$0xff]
      %v4192 = vld [vmem:[%s3 + $0xa88] sm:$0xff]
      %v4193 = vld [vmem:[%s3 + $0xa90] sm:$0xff]
      %v4194 = vld [vmem:[%s3 + $0xa98] sm:$0xff]
      %v4195 = vld [vmem:[%s3 + $0xaa0] sm:$0xff]
      %v4196 = vld [vmem:[%s3 + $0xaa8] sm:$0xff]
      %v4197 = vld [vmem:[%s3 + $0xab0] sm:$0xff]
      %v4198 = vld [vmem:[%s3 + $0xab8] sm:$0xff]
      %v4199 = vld [vmem:[%s3 + $0xac0] sm:$0xff]
      %v4200 = vld [vmem:[%s3 + $0xac8] sm:$0xff]
      %v4201 = vld [vmem:[%s3 + $0xad0] sm:$0xff]
      %v4202 = vld [vmem:[%s3 + $0xad8] sm:$0xff]
      %v4203 = vld [vmem:[%s3 + $0xae0] sm:$0xff]
      %v4204 = vld [vmem:[%s3 + $0xae8] sm:$0xff]
      %v4205 = vld [vmem:[%s3 + $0xaf0] sm:$0xff]
      %v4206 = vld [vmem:[%s3 + $0xaf8] sm:$0xff]
      %v4207 = vld [vmem:[%s3 + $0xb00] sm:$0xff]
      %v4208 = vld [vmem:[%s3 + $0xb08] sm:$0xff]
      %v4209 = vld [vmem:[%s3 + $0xb10] sm:$0xff]
      %v4210 = vld [vmem:[%s3 + $0xb18] sm:$0xff]
      %v4211 = vld [vmem:[%s3 + $0xb20] sm:$0xff]
      %v4212 = vld [vmem:[%s3 + $0xb28] sm:$0xff]
      %v4213 = vld [vmem:[%s3 + $0xb30] sm:$0xff]
      %v4214 = vld [vmem:[%s3 + $0xb38] sm:$0xff]
      %v4215 = vld [vmem:[%s3 + $0xb40] sm:$0xff]
      %v4216 = vld [vmem:[%s3 + $0xb48] sm:$0xff]
      %v4217 = vld [vmem:[%s3 + $0xb50] sm:$0xff]
      %v4218 = vld [vmem:[%s3 + $0xb58] sm:$0xff]
      %v4219 = vld [vmem:[%s3 + $0xb60] sm:$0xff]
      %v4220 = vld [vmem:[%s3 + $0xb68] sm:$0xff]
      %v4221 = vld [vmem:[%s3 + $0xb70] sm:$0xff]
      %v4222 = vld [vmem:[%s3 + $0xb78] sm:$0xff]
      %v4223 = vld [vmem:[%s3 + $0xb80] sm:$0xff]
      %v4224 = vld [vmem:[%s3 + $0xb88] sm:$0xff]
      %v4225 = vld [vmem:[%s3 + $0xb90] sm:$0xff]
      %v4226 = vld [vmem:[%s3 + $0xb98] sm:$0xff]
      %v4227 = vld [vmem:[%s3 + $0xba0] sm:$0xff]
      %v4228 = vld [vmem:[%s3 + $0xba8] sm:$0xff]
      %v4229 = vld [vmem:[%s3 + $0xbb0] sm:$0xff]
      %v4230 = vld [vmem:[%s3 + $0xbb8] sm:$0xff]
      %v4231 = vld [vmem:[%s3 + $0xbc0] sm:$0xff]
      %v4232 = vld [vmem:[%s3 + $0xbc8] sm:$0xff]
      %v4233 = vld [vmem:[%s3 + $0xbd0] sm:$0xff]
      %v4234 = vld [vmem:[%s3 + $0xbd8] sm:$0xff]
      %v4235 = vld [vmem:[%s3 + $0xbe0] sm:$0xff]
      %v4236 = vld [vmem:[%s3 + $0xbe8] sm:$0xff]
      %v4237 = vld [vmem:[%s3 + $0xbf0] sm:$0xff]
      %v4238 = vld [vmem:[%s3 + $0xbf8] sm:$0xff]
      %v4239 = vld [vmem:[%s3 + $0xc00] sm:$0xff]
      %v4240 = vld [vmem:[%s3 + $0xc08] sm:$0xff]
      %v4241 = vld [vmem:[%s3 + $0xc10] sm:$0xff]
      %v4242 = vld [vmem:[%s3 + $0xc18] sm:$0xff]
      %v4243 = vld [vmem:[%s3 + $0xc20] sm:$0xff]
      %v4244 = vld [vmem:[%s3 + $0xc28] sm:$0xff]
      %v4245 = vld [vmem:[%s3 + $0xc30] sm:$0xff]
      %v4246 = vld [vmem:[%s3 + $0xc38] sm:$0xff]
      %v4247 = vmul.f32 %v1897, %v3855
      %v4248 = vmul.f32 %v1902, %v3856
      %v4249 = vmul.f32 %v1907, %v3857
      %v4250 = vmul.f32 %v1912, %v3858
      %v4251 = vmul.f32 %v1917, %v3859
      %v4252 = vmul.f32 %v1922, %v3860
      %v4253 = vmul.f32 %v1927, %v3861
      %v4254 = vmul.f32 %v1932, %v3862
      %v4255 = vmul.f32 %v1937, %v3863
      %v4256 = vmul.f32 %v1942, %v3864
      %v4257 = vmul.f32 %v1947, %v3865
      %v4258 = vmul.f32 %v1952, %v3866
      %v4259 = vmul.f32 %v1957, %v3867
      %v4260 = vmul.f32 %v1962, %v3868
      %v4261 = vmul.f32 %v1967, %v3869
      %v4262 = vmul.f32 %v1972, %v3870
      %v4263 = vmul.f32 %v1977, %v3871
      %v4264 = vmul.f32 %v1982, %v3872
      %v4265 = vmul.f32 %v1987, %v3873
      %v4266 = vmul.f32 %v1992, %v3874
      %v4267 = vmul.f32 %v1997, %v3875
      %v4268 = vmul.f32 %v2002, %v3876
      %v4269 = vmul.f32 %v2007, %v3877
      %v4270 = vmul.f32 %v2012, %v3878
      %v4271 = vmul.f32 %v2017, %v3879
      %v4272 = vmul.f32 %v2022, %v3880
      %v4273 = vmul.f32 %v2027, %v3881
      %v4274 = vmul.f32 %v2032, %v3882
      %v4275 = vmul.f32 %v2037, %v3883
      %v4276 = vmul.f32 %v2042, %v3884
      %v4277 = vmul.f32 %v2047, %v3885
      %v4278 = vmul.f32 %v2052, %v3886
      %v4279 = vmul.f32 %v2057, %v3887
      %v4280 = vmul.f32 %v2062, %v3888
      %v4281 = vmul.f32 %v2067, %v3889
      %v4282 = vmul.f32 %v2072, %v3890
      %v4283 = vmul.f32 %v2077, %v3891
      %v4284 = vmul.f32 %v2082, %v3892
      %v4285 = vmul.f32 %v2087, %v3893
      %v4286 = vmul.f32 %v2092, %v3894
      %v4287 = vmul.f32 %v2097, %v3895
      %v4288 = vmul.f32 %v2102, %v3896
      %v4289 = vmul.f32 %v2107, %v3897
      %v4290 = vmul.f32 %v2112, %v3898
      %v4291 = vmul.f32 %v2117, %v3899
      %v4292 = vmul.f32 %v2122, %v3900
      %v4293 = vmul.f32 %v2127, %v3901
      %v4294 = vmul.f32 %v2132, %v3902
      %v4295 = vmul.f32 %v2137, %v3903
      %v4296 = vmul.f32 %v2142, %v3904
      %v4297 = vmul.f32 %v2147, %v3905
      %v4298 = vmul.f32 %v2152, %v3906
      %v4299 = vmul.f32 %v2157, %v3907
      %v4300 = vmul.f32 %v2162, %v3908
      %v4301 = vmul.f32 %v2167, %v3909
      %v4302 = vmul.f32 %v2172, %v3910
      %v4303 = vmul.f32 %v2177, %v3911
      %v4304 = vmul.f32 %v2182, %v3912
      %v4305 = vmul.f32 %v2187, %v3913
      %v4306 = vmul.f32 %v2192, %v3914
      %v4307 = vmul.f32 %v2197, %v3915
      %v4308 = vmul.f32 %v2202, %v3916
      %v4309 = vmul.f32 %v2207, %v3917
      %v4310 = vmul.f32 %v2212, %v3918
      %v4311 = vmul.f32 %v2217, %v3919
      %v4312 = vmul.f32 %v2222, %v3920
      %v4313 = vmul.f32 %v2227, %v3921
      %v4314 = vmul.f32 %v2232, %v3922
      %v4315 = vmul.f32 %v2237, %v3923
      %v4316 = vmul.f32 %v2242, %v3924
      %v4317 = vmul.f32 %v2247, %v3925
      %v4318 = vmul.f32 %v2252, %v3926
      %v4319 = vmul.f32 %v2257, %v3927
      %v4320 = vmul.f32 %v2262, %v3928
      %v4321 = vmul.f32 %v2267, %v3929
      %v4322 = vmul.f32 %v2272, %v3930
      %v4323 = vmul.f32 %v2277, %v3931
      %v4324 = vmul.f32 %v2282, %v3932
      %v4325 = vmul.f32 %v2287, %v3933
      %v4326 = vmul.f32 %v2292, %v3934
      %v4327 = vmul.f32 %v2297, %v3935
      %v4328 = vmul.f32 %v2302, %v3936
      %v4329 = vmul.f32 %v2307, %v3937
      %v4330 = vmul.f32 %v2312, %v3938
      %v4331 = vmul.f32 %v2317, %v3939
      %v4332 = vmul.f32 %v2322, %v3940
      %v4333 = vmul.f32 %v2327, %v3941
      %v4334 = vmul.f32 %v2332, %v3942
      %v4335 = vmul.f32 %v2337, %v3943
      %v4336 = vmul.f32 %v2342, %v3944
      %v4337 = vmul.f32 %v2347, %v3945
      %v4338 = vmul.f32 %v2352, %v3946
      %v4339 = vmul.f32 %v2357, %v3947
      %v4340 = vmul.f32 %v2362, %v3948
      %v4341 = vmul.f32 %v2367, %v3949
      %v4342 = vmul.f32 %v2372, %v3950
      %v4343 = vmul.f32 %v2377, %v3951
      %v4344 = vmul.f32 %v2382, %v3952
      %v4345 = vmul.f32 %v2387, %v3953
      %v4346 = vmul.f32 %v2392, %v3954
      %v4347 = vmul.f32 %v2397, %v3955
      %v4348 = vmul.f32 %v2402, %v3956
      %v4349 = vmul.f32 %v2407, %v3957
      %v4350 = vmul.f32 %v2412, %v3958
      %v4351 = vmul.f32 %v2417, %v3959
      %v4352 = vmul.f32 %v2422, %v3960
      %v4353 = vmul.f32 %v2427, %v3961
      %v4354 = vmul.f32 %v2432, %v3962
      %v4355 = vmul.f32 %v2437, %v3963
      %v4356 = vmul.f32 %v2442, %v3964
      %v4357 = vmul.f32 %v2447, %v3965
      %v4358 = vmul.f32 %v2452, %v3966
      %v4359 = vmul.f32 %v2457, %v3967
      %v4360 = vmul.f32 %v2462, %v3968
      %v4361 = vmul.f32 %v2467, %v3969
      %v4362 = vmul.f32 %v2472, %v3970
      %v4363 = vmul.f32 %v2477, %v3971
      %v4364 = vmul.f32 %v2482, %v3972
      %v4365 = vmul.f32 %v2487, %v3973
      %v4366 = vmul.f32 %v2492, %v3974
      %v4367 = vmul.f32 %v2497, %v3975
      %v4368 = vmul.f32 %v2502, %v3976
      %v4369 = vmul.f32 %v2507, %v3977
      %v4370 = vmul.f32 %v2512, %v3978
      %v4371 = vmul.f32 %v2517, %v3979
      %v4372 = vmul.f32 %v2522, %v3980
      %v4373 = vmul.f32 %v2527, %v3981
      %v4374 = vmul.f32 %v2532, %v3982
      %v4375 = vmul.f32 %v2537, %v3983
      %v4376 = vmul.f32 %v2542, %v3984
      %v4377 = vmul.f32 %v2547, %v3985
      %v4378 = vmul.f32 %v2552, %v3986
      %v4379 = vmul.f32 %v2557, %v3987
      %v4380 = vmul.f32 %v2562, %v3988
      %v4381 = vmul.f32 %v2567, %v3989
      %v4382 = vmul.f32 %v2572, %v3990
      %v4383 = vmul.f32 %v2577, %v3991
      %v4384 = vmul.f32 %v2582, %v3992
      %v4385 = vmul.f32 %v2587, %v3993
      %v4386 = vmul.f32 %v2592, %v3994
      %v4387 = vmul.f32 %v2597, %v3995
      %v4388 = vmul.f32 %v2602, %v3996
      %v4389 = vmul.f32 %v2607, %v3997
      %v4390 = vmul.f32 %v2612, %v3998
      %v4391 = vmul.f32 %v2617, %v3999
      %v4392 = vmul.f32 %v2622, %v4000
      %v4393 = vmul.f32 %v2627, %v4001
      %v4394 = vmul.f32 %v2632, %v4002
      %v4395 = vmul.f32 %v2637, %v4003
      %v4396 = vmul.f32 %v2642, %v4004
      %v4397 = vmul.f32 %v2647, %v4005
      %v4398 = vmul.f32 %v2652, %v4006
      %v4399 = vmul.f32 %v2657, %v4007
      %v4400 = vmul.f32 %v2662, %v4008
      %v4401 = vmul.f32 %v2667, %v4009
      %v4402 = vmul.f32 %v2672, %v4010
      %v4403 = vmul.f32 %v2677, %v4011
      %v4404 = vmul.f32 %v2682, %v4012
      %v4405 = vmul.f32 %v2687, %v4013
      %v4406 = vmul.f32 %v2692, %v4014
      %v4407 = vmul.f32 %v2697, %v4015
      %v4408 = vmul.f32 %v2702, %v4016
      %v4409 = vmul.f32 %v2707, %v4017
      %v4410 = vmul.f32 %v2712, %v4018
      %v4411 = vmul.f32 %v2717, %v4019
      %v4412 = vmul.f32 %v2722, %v4020
      %v4413 = vmul.f32 %v2727, %v4021
      %v4414 = vmul.f32 %v2732, %v4022
      %v4415 = vmul.f32 %v2737, %v4023
      %v4416 = vmul.f32 %v2742, %v4024
      %v4417 = vmul.f32 %v2747, %v4025
      %v4418 = vmul.f32 %v2752, %v4026
      %v4419 = vmul.f32 %v2757, %v4027
      %v4420 = vmul.f32 %v2762, %v4028
      %v4421 = vmul.f32 %v2767, %v4029
      %v4422 = vmul.f32 %v2772, %v4030
      %v4423 = vmul.f32 %v2777, %v4031
      %v4424 = vmul.f32 %v2782, %v4032
      %v4425 = vmul.f32 %v2787, %v4033
      %v4426 = vmul.f32 %v2792, %v4034
      %v4427 = vmul.f32 %v2797, %v4035
      %v4428 = vmul.f32 %v2802, %v4036
      %v4429 = vmul.f32 %v2807, %v4037
      %v4430 = vmul.f32 %v2812, %v4038
      %v4431 = vmul.f32 %v2817, %v4039
      %v4432 = vmul.f32 %v2822, %v4040
      %v4433 = vmul.f32 %v2827, %v4041
      %v4434 = vmul.f32 %v2832, %v4042
      %v4435 = vmul.f32 %v2837, %v4043
      %v4436 = vmul.f32 %v2842, %v4044
      %v4437 = vmul.f32 %v2847, %v4045
      %v4438 = vmul.f32 %v2852, %v4046
      %v4439 = vmul.f32 %v2857, %v4047
      %v4440 = vmul.f32 %v2862, %v4048
      %v4441 = vmul.f32 %v2867, %v4049
      %v4442 = vmul.f32 %v2872, %v4050
      %v4443 = vmul.f32 %v2877, %v4051
      %v4444 = vmul.f32 %v2882, %v4052
      %v4445 = vmul.f32 %v2887, %v4053
      %v4446 = vmul.f32 %v2892, %v4054
      %v4447 = vmul.f32 %v2897, %v4055
      %v4448 = vmul.f32 %v2902, %v4056
      %v4449 = vmul.f32 %v2907, %v4057
      %v4450 = vmul.f32 %v2912, %v4058
      %v4451 = vmul.f32 %v2917, %v4059
      %v4452 = vmul.f32 %v2922, %v4060
      %v4453 = vmul.f32 %v2927, %v4061
      %v4454 = vmul.f32 %v2932, %v4062
      %v4455 = vmul.f32 %v2937, %v4063
      %v4456 = vmul.f32 %v2942, %v4064
      %v4457 = vmul.f32 %v2947, %v4065
      %v4458 = vmul.f32 %v2952, %v4066
      %v4459 = vmul.f32 %v2957, %v4067
      %v4460 = vmul.f32 %v2962, %v4068
      %v4461 = vmul.f32 %v2967, %v4069
      %v4462 = vmul.f32 %v2972, %v4070
      %v4463 = vmul.f32 %v2977, %v4071
      %v4464 = vmul.f32 %v2982, %v4072
      %v4465 = vmul.f32 %v2987, %v4073
      %v4466 = vmul.f32 %v2992, %v4074
      %v4467 = vmul.f32 %v2997, %v4075
      %v4468 = vmul.f32 %v3002, %v4076
      %v4469 = vmul.f32 %v3007, %v4077
      %v4470 = vmul.f32 %v3012, %v4078
      %v4471 = vmul.f32 %v3017, %v4079
      %v4472 = vmul.f32 %v3022, %v4080
      %v4473 = vmul.f32 %v3027, %v4081
      %v4474 = vmul.f32 %v3032, %v4082
      %v4475 = vmul.f32 %v3037, %v4083
      %v4476 = vmul.f32 %v3042, %v4084
      %v4477 = vmul.f32 %v3047, %v4085
      %v4478 = vmul.f32 %v3052, %v4086
      %v4479 = vmul.f32 %v3057, %v4087
      %v4480 = vmul.f32 %v3062, %v4088
      %v4481 = vmul.f32 %v3067, %v4089
      %v4482 = vmul.f32 %v3072, %v4090
      %v4483 = vmul.f32 %v3077, %v4091
      %v4484 = vmul.f32 %v3082, %v4092
      %v4485 = vmul.f32 %v3087, %v4093
      %v4486 = vmul.f32 %v3092, %v4094
      %v4487 = vmul.f32 %v3097, %v4095
      %v4488 = vmul.f32 %v3102, %v4096
      %v4489 = vmul.f32 %v3107, %v4097
      %v4490 = vmul.f32 %v3112, %v4098
      %v4491 = vmul.f32 %v3117, %v4099
      %v4492 = vmul.f32 %v3122, %v4100
      %v4493 = vmul.f32 %v3127, %v4101
      %v4494 = vmul.f32 %v3132, %v4102
      %v4495 = vmul.f32 %v3137, %v4103
      %v4496 = vmul.f32 %v3142, %v4104
      %v4497 = vmul.f32 %v3147, %v4105
      %v4498 = vmul.f32 %v3152, %v4106
      %v4499 = vmul.f32 %v3157, %v4107
      %v4500 = vmul.f32 %v3162, %v4108
      %v4501 = vmul.f32 %v3167, %v4109
      %v4502 = vmul.f32 %v3172, %v4110
      %v4503 = vmul.f32 %v3177, %v4111
      %v4504 = vmul.f32 %v3182, %v4112
      %v4505 = vmul.f32 %v3187, %v4113
      %v4506 = vmul.f32 %v3192, %v4114
      %v4507 = vmul.f32 %v3197, %v4115
      %v4508 = vmul.f32 %v3202, %v4116
      %v4509 = vmul.f32 %v3207, %v4117
      %v4510 = vmul.f32 %v3212, %v4118
      %v4511 = vmul.f32 %v3217, %v4119
      %v4512 = vmul.f32 %v3222, %v4120
      %v4513 = vmul.f32 %v3227, %v4121
      %v4514 = vmul.f32 %v3232, %v4122
      %v4515 = vmul.f32 %v3237, %v4123
      %v4516 = vmul.f32 %v3242, %v4124
      %v4517 = vmul.f32 %v3247, %v4125
      %v4518 = vmul.f32 %v3252, %v4126
      %v4519 = vmul.f32 %v3257, %v4127
      %v4520 = vmul.f32 %v3262, %v4128
      %v4521 = vmul.f32 %v3267, %v4129
      %v4522 = vmul.f32 %v3272, %v4130
      %v4523 = vmul.f32 %v3277, %v4131
      %v4524 = vmul.f32 %v3282, %v4132
      %v4525 = vmul.f32 %v3287, %v4133
      %v4526 = vmul.f32 %v3292, %v4134
      %v4527 = vmul.f32 %v3297, %v4135
      %v4528 = vmul.f32 %v3302, %v4136
      %v4529 = vmul.f32 %v3307, %v4137
      %v4530 = vmul.f32 %v3312, %v4138
      %v4531 = vmul.f32 %v3317, %v4139
      %v4532 = vmul.f32 %v3322, %v4140
      %v4533 = vmul.f32 %v3327, %v4141
      %v4534 = vmul.f32 %v3332, %v4142
      %v4535 = vmul.f32 %v3337, %v4143
      %v4536 = vmul.f32 %v3342, %v4144
      %v4537 = vmul.f32 %v3347, %v4145
      %v4538 = vmul.f32 %v3352, %v4146
      %v4539 = vmul.f32 %v3357, %v4147
      %v4540 = vmul.f32 %v3362, %v4148
      %v4541 = vmul.f32 %v3367, %v4149
      %v4542 = vmul.f32 %v3372, %v4150
      %v4543 = vmul.f32 %v3377, %v4151
      %v4544 = vmul.f32 %v3382, %v4152
      %v4545 = vmul.f32 %v3387, %v4153
      %v4546 = vmul.f32 %v3392, %v4154
      %v4547 = vmul.f32 %v3397, %v4155
      %v4548 = vmul.f32 %v3402, %v4156
      %v4549 = vmul.f32 %v3407, %v4157
      %v4550 = vmul.f32 %v3412, %v4158
      %v4551 = vmul.f32 %v3417, %v4159
      %v4552 = vmul.f32 %v3422, %v4160
      %v4553 = vmul.f32 %v3427, %v4161
      %v4554 = vmul.f32 %v3432, %v4162
      %v4555 = vmul.f32 %v3437, %v4163
      %v4556 = vmul.f32 %v3442, %v4164
      %v4557 = vmul.f32 %v3447, %v4165
      %v4558 = vmul.f32 %v3452, %v4166
      %v4559 = vmul.f32 %v3457, %v4167
      %v4560 = vmul.f32 %v3462, %v4168
      %v4561 = vmul.f32 %v3467, %v4169
      %v4562 = vmul.f32 %v3472, %v4170
      %v4563 = vmul.f32 %v3477, %v4171
      %v4564 = vmul.f32 %v3482, %v4172
      %v4565 = vmul.f32 %v3487, %v4173
      %v4566 = vmul.f32 %v3492, %v4174
      %v4567 = vmul.f32 %v3497, %v4175
      %v4568 = vmul.f32 %v3502, %v4176
      %v4569 = vmul.f32 %v3507, %v4177
      %v4570 = vmul.f32 %v3512, %v4178
      %v4571 = vmul.f32 %v3517, %v4179
      %v4572 = vmul.f32 %v3522, %v4180
      %v4573 = vmul.f32 %v3527, %v4181
      %v4574 = vmul.f32 %v3532, %v4182
      %v4575 = vmul.f32 %v3537, %v4183
      %v4576 = vmul.f32 %v3542, %v4184
      %v4577 = vmul.f32 %v3547, %v4185
      %v4578 = vmul.f32 %v3552, %v4186
      %v4579 = vmul.f32 %v3557, %v4187
      %v4580 = vmul.f32 %v3562, %v4188
      %v4581 = vmul.f32 %v3567, %v4189
      %v4582 = vmul.f32 %v3572, %v4190
      %v4583 = vmul.f32 %v3577, %v4191
      %v4584 = vmul.f32 %v3582, %v4192
      %v4585 = vmul.f32 %v3587, %v4193
      %v4586 = vmul.f32 %v3592, %v4194
      %v4587 = vmul.f32 %v3597, %v4195
      %v4588 = vmul.f32 %v3602, %v4196
      %v4589 = vmul.f32 %v3607, %v4197
      %v4590 = vmul.f32 %v3612, %v4198
      %v4591 = vmul.f32 %v3617, %v4199
      %v4592 = vmul.f32 %v3622, %v4200
      %v4593 = vmul.f32 %v3627, %v4201
      %v4594 = vmul.f32 %v3632, %v4202
      %v4595 = vmul.f32 %v3637, %v4203
      %v4596 = vmul.f32 %v3642, %v4204
      %v4597 = vmul.f32 %v3647, %v4205
      %v4598 = vmul.f32 %v3652, %v4206
      %v4599 = vmul.f32 %v3657, %v4207
      %v4600 = vmul.f32 %v3662, %v4208
      %v4601 = vmul.f32 %v3667, %v4209
      %v4602 = vmul.f32 %v3672, %v4210
      %v4603 = vmul.f32 %v3677, %v4211
      %v4604 = vmul.f32 %v3682, %v4212
      %v4605 = vmul.f32 %v3687, %v4213
      %v4606 = vmul.f32 %v3692, %v4214
      %v4607 = vmul.f32 %v3697, %v4215
      %v4608 = vmul.f32 %v3702, %v4216
      %v4609 = vmul.f32 %v3707, %v4217
      %v4610 = vmul.f32 %v3712, %v4218
      %v4611 = vmul.f32 %v3717, %v4219
      %v4612 = vmul.f32 %v3722, %v4220
      %v4613 = vmul.f32 %v3727, %v4221
      %v4614 = vmul.f32 %v3732, %v4222
      %v4615 = vmul.f32 %v3737, %v4223
      %v4616 = vmul.f32 %v3742, %v4224
      %v4617 = vmul.f32 %v3747, %v4225
      %v4618 = vmul.f32 %v3752, %v4226
      %v4619 = vmul.f32 %v3757, %v4227
      %v4620 = vmul.f32 %v3762, %v4228
      %v4621 = vmul.f32 %v3767, %v4229
      %v4622 = vmul.f32 %v3772, %v4230
      %v4623 = vmul.f32 %v3777, %v4231
      %v4624 = vmul.f32 %v3782, %v4232
      %v4625 = vmul.f32 %v3787, %v4233
      %v4626 = vmul.f32 %v3792, %v4234
      %v4627 = vmul.f32 %v3797, %v4235
      %v4628 = vmul.f32 %v3802, %v4236
      %v4629 = vmul.f32 %v3807, %v4237
      %v4630 = vmul.f32 %v3812, %v4238
      %v4631 = vmul.f32 %v3817, %v4239
      %v4632 = vmul.f32 %v3822, %v4240
      %v4633 = vmul.f32 %v3827, %v4241
      %v4634 = vmul.f32 %v3832, %v4242
      %v4635 = vmul.f32 %v3837, %v4243
      %v4636 = vmul.f32 %v3842, %v4244
      %v4637 = vmul.f32 %v3847, %v4245
      %v4638 = vmul.f32 %v3852, %v4246
      %v4639 = vld [vmem:[%s4] sm:$0x1]
      %v4641 = vlaneseq
      %v4642 = vshrl.u32 %v4641, 7
      %v4643 = vsub.s32 0, %v4642
      %v4644 = vrot.slane %v4639, %v4643
      %v4646 = vadd.f32 %v4644, %v4247
      %v4647 = vadd.f32 %v4644, %v4248
      %v4648 = vadd.f32 %v4644, %v4249
      %v4649 = vadd.f32 %v4644, %v4250
      %v4650 = vadd.f32 %v4644, %v4251
      %v4651 = vadd.f32 %v4644, %v4252
      %v4652 = vadd.f32 %v4644, %v4253
      %v4653 = vadd.f32 %v4644, %v4254
      %v4654 = vadd.f32 %v4646, %v4255
      %v4655 = vadd.f32 %v4647, %v4256
      %v4656 = vadd.f32 %v4648, %v4257
      %v4657 = vadd.f32 %v4649, %v4258
      %v4658 = vadd.f32 %v4650, %v4259
      %v4659 = vadd.f32 %v4651, %v4260
      %v4660 = vadd.f32 %v4652, %v4261
      %v4661 = vadd.f32 %v4653, %v4262
      %v4662 = vadd.f32 %v4654, %v4263
      %v4663 = vadd.f32 %v4655, %v4264
      %v4664 = vadd.f32 %v4656, %v4265
      %v4665 = vadd.f32 %v4657, %v4266
      %v4666 = vadd.f32 %v4658, %v4267
      %v4667 = vadd.f32 %v4659, %v4268
      %v4668 = vadd.f32 %v4660, %v4269
      %v4669 = vadd.f32 %v4661, %v4270
      %v4670 = vadd.f32 %v4662, %v4271
      %v4671 = vadd.f32 %v4663, %v4272
      %v4672 = vadd.f32 %v4664, %v4273
      %v4673 = vadd.f32 %v4665, %v4274
      %v4674 = vadd.f32 %v4666, %v4275
      %v4675 = vadd.f32 %v4667, %v4276
      %v4676 = vadd.f32 %v4668, %v4277
      %v4677 = vadd.f32 %v4669, %v4278
      %v4678 = vadd.f32 %v4670, %v4279
      %v4679 = vadd.f32 %v4671, %v4280
      %v4680 = vadd.f32 %v4672, %v4281
      %v4681 = vadd.f32 %v4673, %v4282
      %v4682 = vadd.f32 %v4674, %v4283
      %v4683 = vadd.f32 %v4675, %v4284
      %v4684 = vadd.f32 %v4676, %v4285
      %v4685 = vadd.f32 %v4677, %v4286
      %v4686 = vadd.f32 %v4678, %v4287
      %v4687 = vadd.f32 %v4679, %v4288
      %v4688 = vadd.f32 %v4680, %v4289
      %v4689 = vadd.f32 %v4681, %v4290
      %v4690 = vadd.f32 %v4682, %v4291
      %v4691 = vadd.f32 %v4683, %v4292
      %v4692 = vadd.f32 %v4684, %v4293
      %v4693 = vadd.f32 %v4685, %v4294
      %v4694 = vadd.f32 %v4686, %v4295
      %v4695 = vadd.f32 %v4687, %v4296
      %v4696 = vadd.f32 %v4688, %v4297
      %v4697 = vadd.f32 %v4689, %v4298
      %v4698 = vadd.f32 %v4690, %v4299
      %v4699 = vadd.f32 %v4691, %v4300
      %v4700 = vadd.f32 %v4692, %v4301
      %v4701 = vadd.f32 %v4693, %v4302
      %v4702 = vadd.f32 %v4694, %v4303
      %v4703 = vadd.f32 %v4695, %v4304
      %v4704 = vadd.f32 %v4696, %v4305
      %v4705 = vadd.f32 %v4697, %v4306
      %v4706 = vadd.f32 %v4698, %v4307
      %v4707 = vadd.f32 %v4699, %v4308
      %v4708 = vadd.f32 %v4700, %v4309
      %v4709 = vadd.f32 %v4701, %v4310
      %v4710 = vadd.f32 %v4702, %v4311
      %v4711 = vadd.f32 %v4703, %v4312
      %v4712 = vadd.f32 %v4704, %v4313
      %v4713 = vadd.f32 %v4705, %v4314
      %v4714 = vadd.f32 %v4706, %v4315
      %v4715 = vadd.f32 %v4707, %v4316
      %v4716 = vadd.f32 %v4708, %v4317
      %v4717 = vadd.f32 %v4709, %v4318
      %v4718 = vadd.f32 %v4710, %v4319
      %v4719 = vadd.f32 %v4711, %v4320
      %v4720 = vadd.f32 %v4712, %v4321
      %v4721 = vadd.f32 %v4713, %v4322
      %v4722 = vadd.f32 %v4714, %v4323
      %v4723 = vadd.f32 %v4715, %v4324
      %v4724 = vadd.f32 %v4716, %v4325
      %v4725 = vadd.f32 %v4717, %v4326
      %v4726 = vadd.f32 %v4718, %v4327
      %v4727 = vadd.f32 %v4719, %v4328
      %v4728 = vadd.f32 %v4720, %v4329
      %v4729 = vadd.f32 %v4721, %v4330
      %v4730 = vadd.f32 %v4722, %v4331
      %v4731 = vadd.f32 %v4723, %v4332
      %v4732 = vadd.f32 %v4724, %v4333
      %v4733 = vadd.f32 %v4725, %v4334
      %v4734 = vadd.f32 %v4726, %v4335
      %v4735 = vadd.f32 %v4727, %v4336
      %v4736 = vadd.f32 %v4728, %v4337
      %v4737 = vadd.f32 %v4729, %v4338
      %v4738 = vadd.f32 %v4730, %v4339
      %v4739 = vadd.f32 %v4731, %v4340
      %v4740 = vadd.f32 %v4732, %v4341
      %v4741 = vadd.f32 %v4733, %v4342
      %v4742 = vadd.f32 %v4734, %v4343
      %v4743 = vadd.f32 %v4735, %v4344
      %v4744 = vadd.f32 %v4736, %v4345
      %v4745 = vadd.f32 %v4737, %v4346
      %v4746 = vadd.f32 %v4738, %v4347
      %v4747 = vadd.f32 %v4739, %v4348
      %v4748 = vadd.f32 %v4740, %v4349
      %v4749 = vadd.f32 %v4741, %v4350
      %v4750 = vadd.f32 %v4742, %v4351
      %v4751 = vadd.f32 %v4743, %v4352
      %v4752 = vadd.f32 %v4744, %v4353
      %v4753 = vadd.f32 %v4745, %v4354
      %v4754 = vadd.f32 %v4746, %v4355
      %v4755 = vadd.f32 %v4747, %v4356
      %v4756 = vadd.f32 %v4748, %v4357
      %v4757 = vadd.f32 %v4749, %v4358
      %v4758 = vadd.f32 %v4750, %v4359
      %v4759 = vadd.f32 %v4751, %v4360
      %v4760 = vadd.f32 %v4752, %v4361
      %v4761 = vadd.f32 %v4753, %v4362
      %v4762 = vadd.f32 %v4754, %v4363
      %v4763 = vadd.f32 %v4755, %v4364
      %v4764 = vadd.f32 %v4756, %v4365
      %v4765 = vadd.f32 %v4757, %v4366
      %v4766 = vadd.f32 %v4758, %v4367
      %v4767 = vadd.f32 %v4759, %v4368
      %v4768 = vadd.f32 %v4760, %v4369
      %v4769 = vadd.f32 %v4761, %v4370
      %v4770 = vadd.f32 %v4762, %v4371
      %v4771 = vadd.f32 %v4763, %v4372
      %v4772 = vadd.f32 %v4764, %v4373
      %v4773 = vadd.f32 %v4765, %v4374
      %v4774 = vadd.f32 %v4766, %v4375
      %v4775 = vadd.f32 %v4767, %v4376
      %v4776 = vadd.f32 %v4768, %v4377
      %v4777 = vadd.f32 %v4769, %v4378
      %v4778 = vadd.f32 %v4770, %v4379
      %v4779 = vadd.f32 %v4771, %v4380
      %v4780 = vadd.f32 %v4772, %v4381
      %v4781 = vadd.f32 %v4773, %v4382
      %v4782 = vadd.f32 %v4774, %v4383
      %v4783 = vadd.f32 %v4775, %v4384
      %v4784 = vadd.f32 %v4776, %v4385
      %v4785 = vadd.f32 %v4777, %v4386
      %v4786 = vadd.f32 %v4778, %v4387
      %v4787 = vadd.f32 %v4779, %v4388
      %v4788 = vadd.f32 %v4780, %v4389
      %v4789 = vadd.f32 %v4781, %v4390
      %v4790 = vadd.f32 %v4782, %v4391
      %v4791 = vadd.f32 %v4783, %v4392
      %v4792 = vadd.f32 %v4784, %v4393
      %v4793 = vadd.f32 %v4785, %v4394
      %v4794 = vadd.f32 %v4786, %v4395
      %v4795 = vadd.f32 %v4787, %v4396
      %v4796 = vadd.f32 %v4788, %v4397
      %v4797 = vadd.f32 %v4789, %v4398
      %v4798 = vadd.f32 %v4790, %v4399
      %v4799 = vadd.f32 %v4791, %v4400
      %v4800 = vadd.f32 %v4792, %v4401
      %v4801 = vadd.f32 %v4793, %v4402
      %v4802 = vadd.f32 %v4794, %v4403
      %v4803 = vadd.f32 %v4795, %v4404
      %v4804 = vadd.f32 %v4796, %v4405
      %v4805 = vadd.f32 %v4797, %v4406
      %v4806 = vadd.f32 %v4798, %v4407
      %v4807 = vadd.f32 %v4799, %v4408
      %v4808 = vadd.f32 %v4800, %v4409
      %v4809 = vadd.f32 %v4801, %v4410
      %v4810 = vadd.f32 %v4802, %v4411
      %v4811 = vadd.f32 %v4803, %v4412
      %v4812 = vadd.f32 %v4804, %v4413
      %v4813 = vadd.f32 %v4805, %v4414
      %v4814 = vadd.f32 %v4806, %v4415
      %v4815 = vadd.f32 %v4807, %v4416
      %v4816 = vadd.f32 %v4808, %v4417
      %v4817 = vadd.f32 %v4809, %v4418
      %v4818 = vadd.f32 %v4810, %v4419
      %v4819 = vadd.f32 %v4811, %v4420
      %v4820 = vadd.f32 %v4812, %v4421
      %v4821 = vadd.f32 %v4813, %v4422
      %v4822 = vadd.f32 %v4814, %v4423
      %v4823 = vadd.f32 %v4815, %v4424
      %v4824 = vadd.f32 %v4816, %v4425
      %v4825 = vadd.f32 %v4817, %v4426
      %v4826 = vadd.f32 %v4818, %v4427
      %v4827 = vadd.f32 %v4819, %v4428
      %v4828 = vadd.f32 %v4820, %v4429
      %v4829 = vadd.f32 %v4821, %v4430
      %v4830 = vadd.f32 %v4822, %v4431
      %v4831 = vadd.f32 %v4823, %v4432
      %v4832 = vadd.f32 %v4824, %v4433
      %v4833 = vadd.f32 %v4825, %v4434
      %v4834 = vadd.f32 %v4826, %v4435
      %v4835 = vadd.f32 %v4827, %v4436
      %v4836 = vadd.f32 %v4828, %v4437
      %v4837 = vadd.f32 %v4829, %v4438
      %v4838 = vadd.f32 %v4830, %v4439
      %v4839 = vadd.f32 %v4831, %v4440
      %v4840 = vadd.f32 %v4832, %v4441
      %v4841 = vadd.f32 %v4833, %v4442
      %v4842 = vadd.f32 %v4834, %v4443
      %v4843 = vadd.f32 %v4835, %v4444
      %v4844 = vadd.f32 %v4836, %v4445
      %v4845 = vadd.f32 %v4837, %v4446
      %v4846 = vadd.f32 %v4838, %v4447
      %v4847 = vadd.f32 %v4839, %v4448
      %v4848 = vadd.f32 %v4840, %v4449
      %v4849 = vadd.f32 %v4841, %v4450
      %v4850 = vadd.f32 %v4842, %v4451
      %v4851 = vadd.f32 %v4843, %v4452
      %v4852 = vadd.f32 %v4844, %v4453
      %v4853 = vadd.f32 %v4845, %v4454
      %v4854 = vadd.f32 %v4846, %v4455
      %v4855 = vadd.f32 %v4847, %v4456
      %v4856 = vadd.f32 %v4848, %v4457
      %v4857 = vadd.f32 %v4849, %v4458
      %v4858 = vadd.f32 %v4850, %v4459
      %v4859 = vadd.f32 %v4851, %v4460
      %v4860 = vadd.f32 %v4852, %v4461
      %v4861 = vadd.f32 %v4853, %v4462
      %v4862 = vadd.f32 %v4854, %v4463
      %v4863 = vadd.f32 %v4855, %v4464
      %v4864 = vadd.f32 %v4856, %v4465
      %v4865 = vadd.f32 %v4857, %v4466
      %v4866 = vadd.f32 %v4858, %v4467
      %v4867 = vadd.f32 %v4859, %v4468
      %v4868 = vadd.f32 %v4860, %v4469
      %v4869 = vadd.f32 %v4861, %v4470
      %v4870 = vadd.f32 %v4862, %v4471
      %v4871 = vadd.f32 %v4863, %v4472
      %v4872 = vadd.f32 %v4864, %v4473
      %v4873 = vadd.f32 %v4865, %v4474
      %v4874 = vadd.f32 %v4866, %v4475
      %v4875 = vadd.f32 %v4867, %v4476
      %v4876 = vadd.f32 %v4868, %v4477
      %v4877 = vadd.f32 %v4869, %v4478
      %v4878 = vadd.f32 %v4870, %v4479
      %v4879 = vadd.f32 %v4871, %v4480
      %v4880 = vadd.f32 %v4872, %v4481
      %v4881 = vadd.f32 %v4873, %v4482
      %v4882 = vadd.f32 %v4874, %v4483
      %v4883 = vadd.f32 %v4875, %v4484
      %v4884 = vadd.f32 %v4876, %v4485
      %v4885 = vadd.f32 %v4877, %v4486
      %v4886 = vadd.f32 %v4878, %v4487
      %v4887 = vadd.f32 %v4879, %v4488
      %v4888 = vadd.f32 %v4880, %v4489
      %v4889 = vadd.f32 %v4881, %v4490
      %v4890 = vadd.f32 %v4882, %v4491
      %v4891 = vadd.f32 %v4883, %v4492
      %v4892 = vadd.f32 %v4884, %v4493
      %v4893 = vadd.f32 %v4885, %v4494
      %v4894 = vadd.f32 %v4886, %v4495
      %v4895 = vadd.f32 %v4887, %v4496
      %v4896 = vadd.f32 %v4888, %v4497
      %v4897 = vadd.f32 %v4889, %v4498
      %v4898 = vadd.f32 %v4890, %v4499
      %v4899 = vadd.f32 %v4891, %v4500
      %v4900 = vadd.f32 %v4892, %v4501
      %v4901 = vadd.f32 %v4893, %v4502
      %v4902 = vadd.f32 %v4894, %v4503
      %v4903 = vadd.f32 %v4895, %v4504
      %v4904 = vadd.f32 %v4896, %v4505
      %v4905 = vadd.f32 %v4897, %v4506
      %v4906 = vadd.f32 %v4898, %v4507
      %v4907 = vadd.f32 %v4899, %v4508
      %v4908 = vadd.f32 %v4900, %v4509
      %v4909 = vadd.f32 %v4901, %v4510
      %v4910 = vadd.f32 %v4902, %v4511
      %v4911 = vadd.f32 %v4903, %v4512
      %v4912 = vadd.f32 %v4904, %v4513
      %v4913 = vadd.f32 %v4905, %v4514
      %v4914 = vadd.f32 %v4906, %v4515
      %v4915 = vadd.f32 %v4907, %v4516
      %v4916 = vadd.f32 %v4908, %v4517
      %v4917 = vadd.f32 %v4909, %v4518
      %v4918 = vadd.f32 %v4910, %v4519
      %v4919 = vadd.f32 %v4911, %v4520
      %v4920 = vadd.f32 %v4912, %v4521
      %v4921 = vadd.f32 %v4913, %v4522
      %v4922 = vadd.f32 %v4914, %v4523
      %v4923 = vadd.f32 %v4915, %v4524
      %v4924 = vadd.f32 %v4916, %v4525
      %v4925 = vadd.f32 %v4917, %v4526
      %v4926 = vadd.f32 %v4918, %v4527
      %v4927 = vadd.f32 %v4919, %v4528
      %v4928 = vadd.f32 %v4920, %v4529
      %v4929 = vadd.f32 %v4921, %v4530
      %v4930 = vadd.f32 %v4922, %v4531
      %v4931 = vadd.f32 %v4923, %v4532
      %v4932 = vadd.f32 %v4924, %v4533
      %v4933 = vadd.f32 %v4925, %v4534
      %v4934 = vadd.f32 %v4926, %v4535
      %v4935 = vadd.f32 %v4927, %v4536
      %v4936 = vadd.f32 %v4928, %v4537
      %v4937 = vadd.f32 %v4929, %v4538
      %v4938 = vadd.f32 %v4930, %v4539
      %v4939 = vadd.f32 %v4931, %v4540
      %v4940 = vadd.f32 %v4932, %v4541
      %v4941 = vadd.f32 %v4933, %v4542
      %v4942 = vadd.f32 %v4934, %v4543
      %v4943 = vadd.f32 %v4935, %v4544
      %v4944 = vadd.f32 %v4936, %v4545
      %v4945 = vadd.f32 %v4937, %v4546
      %v4946 = vadd.f32 %v4938, %v4547
      %v4947 = vadd.f32 %v4939, %v4548
      %v4948 = vadd.f32 %v4940, %v4549
      %v4949 = vadd.f32 %v4941, %v4550
      %v4950 = vadd.f32 %v4942, %v4551
      %v4951 = vadd.f32 %v4943, %v4552
      %v4952 = vadd.f32 %v4944, %v4553
      %v4953 = vadd.f32 %v4945, %v4554
      %v4954 = vadd.f32 %v4946, %v4555
      %v4955 = vadd.f32 %v4947, %v4556
      %v4956 = vadd.f32 %v4948, %v4557
      %v4957 = vadd.f32 %v4949, %v4558
      %v4958 = vadd.f32 %v4950, %v4559
      %v4959 = vadd.f32 %v4951, %v4560
      %v4960 = vadd.f32 %v4952, %v4561
      %v4961 = vadd.f32 %v4953, %v4562
      %v4962 = vadd.f32 %v4954, %v4563
      %v4963 = vadd.f32 %v4955, %v4564
      %v4964 = vadd.f32 %v4956, %v4565
      %v4965 = vadd.f32 %v4957, %v4566
      %v4966 = vadd.f32 %v4958, %v4567
      %v4967 = vadd.f32 %v4959, %v4568
      %v4968 = vadd.f32 %v4960, %v4569
      %v4969 = vadd.f32 %v4961, %v4570
      %v4970 = vadd.f32 %v4962, %v4571
      %v4971 = vadd.f32 %v4963, %v4572
      %v4972 = vadd.f32 %v4964, %v4573
      %v4973 = vadd.f32 %v4965, %v4574
      %v4974 = vadd.f32 %v4966, %v4575
      %v4975 = vadd.f32 %v4967, %v4576
      %v4976 = vadd.f32 %v4968, %v4577
      %v4977 = vadd.f32 %v4969, %v4578
      %v4978 = vadd.f32 %v4970, %v4579
      %v4979 = vadd.f32 %v4971, %v4580
      %v4980 = vadd.f32 %v4972, %v4581
      %v4981 = vadd.f32 %v4973, %v4582
      %v4982 = vadd.f32 %v4974, %v4583
      %v4983 = vadd.f32 %v4975, %v4584
      %v4984 = vadd.f32 %v4976, %v4585
      %v4985 = vadd.f32 %v4977, %v4586
      %v4986 = vadd.f32 %v4978, %v4587
      %v4987 = vadd.f32 %v4979, %v4588
      %v4988 = vadd.f32 %v4980, %v4589
      %v4989 = vadd.f32 %v4981, %v4590
      %v4990 = vadd.f32 %v4982, %v4591
      %v4991 = vadd.f32 %v4983, %v4592
      %v4992 = vadd.f32 %v4984, %v4593
      %v4993 = vadd.f32 %v4985, %v4594
      %v4994 = vadd.f32 %v4986, %v4595
      %v4995 = vadd.f32 %v4987, %v4596
      %v4996 = vadd.f32 %v4988, %v4597
      %v4997 = vadd.f32 %v4989, %v4598
      %v4998 = vadd.f32 %v4990, %v4599
      %v4999 = vadd.f32 %v4991, %v4600
      %v5000 = vadd.f32 %v4992, %v4601
      %v5001 = vadd.f32 %v4993, %v4602
      %v5002 = vadd.f32 %v4994, %v4603
      %v5003 = vadd.f32 %v4995, %v4604
      %v5004 = vadd.f32 %v4996, %v4605
      %v5005 = vadd.f32 %v4997, %v4606
      %v5006 = vadd.f32 %v4998, %v4607
      %v5007 = vadd.f32 %v4999, %v4608
      %v5008 = vadd.f32 %v5000, %v4609
      %v5009 = vadd.f32 %v5001, %v4610
      %v5010 = vadd.f32 %v5002, %v4611
      %v5011 = vadd.f32 %v5003, %v4612
      %v5012 = vadd.f32 %v5004, %v4613
      %v5013 = vadd.f32 %v5005, %v4614
      %v5014 = vadd.f32 %v5006, %v4615
      %v5015 = vadd.f32 %v5007, %v4616
      %v5016 = vadd.f32 %v5008, %v4617
      %v5017 = vadd.f32 %v5009, %v4618
      %v5018 = vadd.f32 %v5010, %v4619
      %v5019 = vadd.f32 %v5011, %v4620
      %v5020 = vadd.f32 %v5012, %v4621
      %v5021 = vadd.f32 %v5013, %v4622
      %v5022 = vadd.f32 %v5014, %v4623
      %v5023 = vadd.f32 %v5015, %v4624
      %v5024 = vadd.f32 %v5016, %v4625
      %v5025 = vadd.f32 %v5017, %v4626
      %v5026 = vadd.f32 %v5018, %v4627
      %v5027 = vadd.f32 %v5019, %v4628
      %v5028 = vadd.f32 %v5020, %v4629
      %v5029 = vadd.f32 %v5021, %v4630
      %v5030 = vadd.f32 %v5022, %v4631
      %v5031 = vadd.f32 %v5023, %v4632
      %v5032 = vadd.f32 %v5024, %v4633
      %v5033 = vadd.f32 %v5025, %v4634
      %v5034 = vadd.f32 %v5026, %v4635
      %v5035 = vadd.f32 %v5027, %v4636
      %v5036 = vadd.f32 %v5028, %v4637
      %v5037 = vadd.f32 %v5029, %v4638
      %v5038 = vmul.f32 %v245, %v5030
      %v5039 = vmul.f32 %v246, %v5031
      %v5040 = vmul.f32 %v247, %v5032
      %v5041 = vmul.f32 %v248, %v5033
      %v5042 = vmul.f32 %v249, %v5034
      %v5043 = vmul.f32 %v250, %v5035
      %v5044 = vmul.f32 %v251, %v5036
      %v5045 = vmul.f32 %v252, %v5037
      %vm5046 = vcmask 261120
      %5047 = vst.msk [vmem:[%s244] sm:$0xff] %vm5046, %v5038
      %5048 = vst.msk [vmem:[%s244 + $0x8] sm:$0xff] %vm5046, %v5039
      %5049 = vst.msk [vmem:[%s244 + $0x10] sm:$0xff] %vm5046, %v5040
      %5050 = vst.msk [vmem:[%s244 + $0x18] sm:$0xff] %vm5046, %v5041
      %5051 = vst.msk [vmem:[%s244 + $0x20] sm:$0xff] %vm5046, %v5042
      %5052 = vst.msk [vmem:[%s244 + $0x28] sm:$0xff] %vm5046, %v5043
      %5053 = vst.msk [vmem:[%s244 + $0x30] sm:$0xff] %vm5046, %v5044
      %5054 = vst.msk [vmem:[%s244 + $0x38] sm:$0xff] %vm5046, %v5045
      %p5055 = scmp.lt.s32.totalorder %s16, 1
      %s5056 = scalar_select %p5055, %s16, 1
      %s5057 = smul.addr %s5056, 8
      %s5058 = smul.addr %s5057, 8
      %s5059 = scalar_lea.vmem %s5, %s5058
      // Predicated region
      $region41: #{tpu_custom_call.1} parent=39 // pred_check
        %p5060 = pneg %p149
      $region42: #{tpu_custom_call.1} parent=39 // pred_check_branch
        %5062 = sbr.rel (%p5060) target = $region44
      $region43: #{tpu_custom_call.1} parent=39 // pred_region
        _
      $region44: #{tpu_custom_call.1} parent=39 // pred_fallthru
        _
    $region40: #{tpu_custom_call.1} parent=5 // pred_fallthru
      _
    %p5063 = scmp.le.s32.totalorder 2, %s11
    // Predicated region
    $region45: #{tpu_custom_call.1} parent=5 // pred_check
      %p5064 = pneg %p5063
    $region46: #{tpu_custom_call.1} parent=5 // pred_check_branch
      %5066 = sbr.rel (%p5064) target = $region48
    $region47: #{tpu_custom_call.1} parent=5 // pred_region
      %s5067 = ssub.s32 %s11, 2
      // Predicated region
      $region49: #{tpu_custom_call.1} parent=47 // pred_check
        %p5068 = pneg %p155
      $region50: #{tpu_custom_call.1} parent=47 // pred_check_branch
        %5070 = sbr.rel (%p5068) target = $region52
      $region51: #{tpu_custom_call.1} parent=47 // pred_region
        %p5071 = scmp.lt.s32.totalorder %s17, 1
        %s5072 = scalar_select %p5071, %s17, 1
        %s5073 = smul.addr %s5072, 8
        %s5074 = smul.addr %s5073, 8
        %s5075 = scalar_lea.vmem %s5, %s5074
      $region52: #{tpu_custom_call.1} parent=47 // pred_fallthru
        _
    $region48: #{tpu_custom_call.1} parent=5 // pred_fallthru
      _
  $region6: #{tpu_custom_call.1} parent=0 // loop_footer
    %s15 = sadd.s32 1, %s11
  $region7: #{tpu_custom_call.1} parent=0 // loop_footer_branch
    %10 = sbr.rel target = $region3
  $region8: #{tpu_custom_call.1} parent=0 // loop_exit
    _

</llo_original>
